<compile_context>
chip_gen: v7x
topology: tpu7x:2x2x1
jax: 0.10.0
libtpu: 0.0.40
codegen_flags: <defaults>
</compile_context>

<pallas_src>
import math
import functools

import jax
import jax.numpy as jnp
from jax.experimental import pallas as pl
from jax.experimental.pallas import tpu as pltpu


# Row tile: sized so double-buffered (TM, K)+(TM, N) bf16 tiles stay far below
# v7x's 64 MiB VMEM (the smallest generation); v5e/v6e have more headroom.
_TM_MAX = 512
_VMEM_LIMIT = 32 * 1024 * 1024  # safe on v5e/v6e/v7x


def _row_tile(m):
    return m if m <= _TM_MAX else _TM_MAX


def _cparams():
    return pltpu.CompilerParams(dimension_semantics=("parallel",),
                                vmem_limit_bytes=_VMEM_LIMIT)


# ----------------------------- Pallas kernels -----------------------------

def _linear_kernel(x_ref, w_ref, b_ref, o_ref, *, act):
    # bf16 operands on the MXU, f32 accumulation.
    y = jnp.dot(x_ref[...], w_ref[...], preferred_element_type=jnp.float32)
    y = y + b_ref[...]
    if act == "relu":
        y = jnp.maximum(y, 0.0)
    o_ref[...] = y.astype(o_ref.dtype)


def linear_pallas(x2d, w, b, act="none", out_dtype=jnp.bfloat16):
    """y = x2d @ w + b (optional ReLU), tiled over rows, weights resident."""
    M, K = x2d.shape
    N = w.shape[1]
    tm = _row_tile(M)
    return pl.pallas_call(
        functools.partial(_linear_kernel, act=act),
        out_shape=jax.ShapeDtypeStruct((M, N), out_dtype),
        grid=(pl.cdiv(M, tm),),
        in_specs=[
            pl.BlockSpec((tm, K), lambda i: (i, 0)),
            pl.BlockSpec((K, N), lambda i: (0, 0)),   # resident weight
            pl.BlockSpec((1, N), lambda i: (0, 0)),   # resident bias
        ],
        out_specs=pl.BlockSpec((tm, N), lambda i: (i, 0)),
        compiler_params=_cparams(),
    )(x2d.astype(jnp.bfloat16), w.astype(jnp.bfloat16),
      b.reshape(1, N).astype(jnp.float32))


def _ffn_ln_kernel(x_ref, w1_ref, b1_ref, w2_ref, b2_ref, g_ref, be_ref, o_ref):
    x = x_ref[...]                                                # (tm, E) bf16
    h = jnp.dot(x, w1_ref[...], preferred_element_type=jnp.float32) + b1_ref[...]
    h = jnp.maximum(h, 0.0)
    y = jnp.dot(h.astype(w2_ref.dtype), w2_ref[...],
                preferred_element_type=jnp.float32) + b2_ref[...]
    y = y + x.astype(jnp.float32)                                 # fused residual
    mean = jnp.mean(y, axis=-1, keepdims=True)
    var = jnp.mean((y - mean) * (y - mean), axis=-1, keepdims=True)
    inv = jax.lax.rsqrt(var + 1e-5)                               # PyTorch LN eps
    o_ref[...] = ((y - mean) * inv * g_ref[...] + be_ref[...]).astype(o_ref.dtype)


def ffn_block_pallas(x2d, w1, b1, w2, b2, g, beta):
    """LayerNorm(x + Linear2(ReLU(Linear1(x)))), tiled over rows."""
    M, E = x2d.shape
    H = w1.shape[1]
    tm = _row_tile(M)
    return pl.pallas_call(
        _ffn_ln_kernel,
        out_shape=jax.ShapeDtypeStruct((M, E), jnp.bfloat16),
        grid=(pl.cdiv(M, tm),),
        in_specs=[
            pl.BlockSpec((tm, E), lambda i: (i, 0)),
            pl.BlockSpec((E, H), lambda i: (0, 0)),
            pl.BlockSpec((1, H), lambda i: (0, 0)),
            pl.BlockSpec((H, E), lambda i: (0, 0)),
            pl.BlockSpec((1, E), lambda i: (0, 0)),
            pl.BlockSpec((1, E), lambda i: (0, 0)),
            pl.BlockSpec((1, E), lambda i: (0, 0)),
        ],
        out_specs=pl.BlockSpec((tm, E), lambda i: (i, 0)),
        compiler_params=_cparams(),
    )(x2d.astype(jnp.bfloat16), w1.astype(jnp.bfloat16),
      b1.reshape(1, H).astype(jnp.float32), w2.astype(jnp.bfloat16),
      b2.reshape(1, E).astype(jnp.float32),
      g.reshape(1, E).astype(jnp.float32), beta.reshape(1, E).astype(jnp.float32))


def _attn_ln_kernel(q_ref, k_ref, v_ref, xr_ref, wo_ref, bo_ref, g_ref, be_ref,
                    o_ref, *, scale, causal, nhead):
    Lq = q_ref.shape[1]
    Lk = k_ref.shape[1]
    if causal:
        row = jax.lax.broadcasted_iota(jnp.int32, (Lq, Lk), 0)
        col = jax.lax.broadcasted_iota(jnp.int32, (Lq, Lk), 1)
        keep = col <= row

    # residual + out-projection bias; heads accumulate into y below.
    y = xr_ref[0].astype(jnp.float32) + bo_ref[...]               # (Lq, E)

    for h in range(nhead):                                        # static unroll
        qh = q_ref[h]                                             # (Lq, dh) bf16
        kh = k_ref[h]                                             # (Lk, dh)
        vh = v_ref[h]                                             # (Lk, dh)
        s = jax.lax.dot_general(qh, kh, (((1,), (1,)), ((), ())),
                                preferred_element_type=jnp.float32) * scale
        if causal:
            s = jnp.where(keep, s, -jnp.inf)
        s = s - jnp.max(s, axis=-1, keepdims=True)
        p = jnp.exp(s)
        p = p * pl.reciprocal(jnp.sum(p, axis=-1, keepdims=True), approx=True)
        oh = jnp.dot(p.astype(vh.dtype), vh,
                     preferred_element_type=jnp.float32)          # (Lq, dh)
        # per-head slice of the output projection (wo_ref is (nhead, dh, E))
        y = y + jnp.dot(oh.astype(wo_ref.dtype), wo_ref[h],
                        preferred_element_type=jnp.float32)

    mean = jnp.mean(y, axis=-1, keepdims=True)
    var = jnp.mean((y - mean) * (y - mean), axis=-1, keepdims=True)
    inv = jax.lax.rsqrt(var + 1e-5)
    o_ref[0] = ((y - mean) * inv * g_ref[...] + be_ref[...]).astype(o_ref.dtype)


def attn_block_pallas(q, k, v, xres, w_o, b_o, g, beta, *, causal, nhead):
    """LayerNorm(x + OutProj(MHA(q, k, v))). q/k/v: (Nb*nhead, L, dh),
    xres: (Nb, Lq, E). Grid iterates (parallel) over the batch axis; all heads
    of one batch element are processed per grid step."""
    NbH, Lq, dh = q.shape
    Nb = NbH // nhead
    Lk = k.shape[1]
    E = nhead * dh
    scale = 1.0 / math.sqrt(dh)
    wo3 = w_o.reshape(nhead, dh, E)
    kernel = functools.partial(_attn_ln_kernel, scale=scale, causal=causal,
                               nhead=nhead)
    return pl.pallas_call(
        kernel,
        out_shape=jax.ShapeDtypeStruct((Nb, Lq, E), jnp.bfloat16),
        grid=(Nb,),
        in_specs=[
            pl.BlockSpec((nhead, Lq, dh), lambda b: (b, 0, 0)),
            pl.BlockSpec((nhead, Lk, dh), lambda b: (b, 0, 0)),
            pl.BlockSpec((nhead, Lk, dh), lambda b: (b, 0, 0)),
            pl.BlockSpec((1, Lq, E), lambda b: (b, 0, 0)),
            pl.BlockSpec((nhead, dh, E), lambda b: (0, 0, 0)),
            pl.BlockSpec((1, E), lambda b: (0, 0)),
            pl.BlockSpec((1, E), lambda b: (0, 0)),
            pl.BlockSpec((1, E), lambda b: (0, 0)),
        ],
        out_specs=pl.BlockSpec((1, Lq, E), lambda b: (b, 0, 0)),
        compiler_params=_cparams(),
    )(q.astype(jnp.bfloat16), k.astype(jnp.bfloat16), v.astype(jnp.bfloat16),
      xres.astype(jnp.bfloat16), wo3.astype(jnp.bfloat16),
      b_o.reshape(1, E).astype(jnp.float32),
      g.reshape(1, E).astype(jnp.float32),
      beta.reshape(1, E).astype(jnp.float32))


# ----------------------------- model glue -----------------------------

def _split_heads(x2d, Nb, L, nhead, dh):
    # (Nb*L, E) -> (Nb*nhead, L, dh), heads contiguous within a batch element.
    return (x2d.reshape(Nb, L, nhead, dh)
               .transpose(0, 2, 1, 3)
               .reshape(Nb * nhead, L, dh))


def encoder_layer(x, p, nhead):
    # x: (Nb, L, E); post-norm TransformerEncoderLayer, ReLU activation.
    Nb, L, E = x.shape
    dh = E // nhead
    qkv = linear_pallas(x.reshape(Nb * L, E), p["self"]["w_qkv"],
                        p["self"]["b_qkv"])                       # (Nb*L, 3E)
    qkv = qkv.reshape(Nb, L, 3, nhead, dh)
    q = qkv[:, :, 0].transpose(0, 2, 1, 3).reshape(Nb * nhead, L, dh)
    k = qkv[:, :, 1].transpose(0, 2, 1, 3).reshape(Nb * nhead, L, dh)
    v = qkv[:, :, 2].transpose(0, 2, 1, 3).reshape(Nb * nhead, L, dh)
    x = attn_block_pallas(q, k, v, x, p["self"]["w_o"], p["self"]["b_o"],
                          p["norm1"]["g"], p["norm1"]["b"],
                          causal=False, nhead=nhead)
    x = ffn_block_pallas(x.reshape(Nb * L, E), p["lin1_w"], p["lin1_b"],
                         p["lin2_w"], p["lin2_b"],
                         p["norm2"]["g"], p["norm2"]["b"]).reshape(Nb, L, E)
    return x


def decoder_layer(x, memory, p, nhead):
    Nb, L_t, E = x.shape
    L_s = memory.shape[1]
    dh = E // nhead

    # causal self-attention
    qkv = linear_pallas(x.reshape(Nb * L_t, E), p["self"]["w_qkv"],
                        p["self"]["b_qkv"])
    qkv = qkv.reshape(Nb, L_t, 3, nhead, dh)
    q = qkv[:, :, 0].transpose(0, 2, 1, 3).reshape(Nb * nhead, L_t, dh)
    k = qkv[:, :, 1].transpose(0, 2, 1, 3).reshape(Nb * nhead, L_t, dh)
    v = qkv[:, :, 2].transpose(0, 2, 1, 3).reshape(Nb * nhead, L_t, dh)
    x = attn_block_pallas(q, k, v, x, p["self"]["w_o"], p["self"]["b_o"],
                          p["norm1"]["g"], p["norm1"]["b"],
                          causal=True, nhead=nhead)

    # cross-attention (no mask)
    q = linear_pallas(x.reshape(Nb * L_t, E), p["cross"]["w_q"],
                      p["cross"]["b_q"])
    q = _split_heads(q, Nb, L_t, nhead, dh)
    kv = linear_pallas(memory.reshape(Nb * L_s, E), p["cross"]["w_kv"],
                       p["cross"]["b_kv"])
    kv = kv.reshape(Nb, L_s, 2, nhead, dh)
    k = kv[:, :, 0].transpose(0, 2, 1, 3).reshape(Nb * nhead, L_s, dh)
    v = kv[:, :, 1].transpose(0, 2, 1, 3).reshape(Nb * nhead, L_s, dh)
    x = attn_block_pallas(q, k, v, x, p["cross"]["w_o"], p["cross"]["b_o"],
                          p["norm2"]["g"], p["norm2"]["b"],
                          causal=False, nhead=nhead)

    # FFN + residual + LN
    x = ffn_block_pallas(x.reshape(Nb * L_t, E), p["lin1_w"], p["lin1_b"],
                         p["lin2_w"], p["lin2_b"],
                         p["norm3"]["g"], p["norm3"]["b"]).reshape(Nb, L_t, E)
    return x


def positional_encoding(L, d_model, max_len=100):
    position = jnp.arange(max_len, dtype=jnp.float32)[:, None]
    div_term = jnp.exp(jnp.arange(0, d_model, 2, dtype=jnp.float32)
                       * (-math.log(10000.0) / d_model))
    pe = jnp.zeros((max_len, d_model), jnp.float32)
    pe = pe.at[:, 0::2].set(jnp.sin(position * div_term))
    pe = pe.at[:, 1::2].set(jnp.cos(position * div_term))   # d_model is even
    return pe[:L]                                            # (L, d_model)


def gcn_shift_transformer(params, src, tar, *, ks, ninp, nhead):
    T_s, bsz, nodes = src.shape
    T_t = tar.shape[0]
    Nb = bsz * nodes

    # ---- GConv (c_in=1): compose graph_kernel and theta into a single
    # (nodes, nodes*ninp) weight so the whole op is one lane-dense matmul.
    gk3 = params["graph_kernel"].reshape(nodes, ks, nodes)         # (m, k, j)
    A = jnp.einsum("mkj,kc->mjc", gk3, params["theta_w"])          # (m, j, c)
    A2 = A.reshape(nodes, nodes * ninp)
    b_tiled = jnp.tile(params["theta_b"], (nodes,))                # (nodes*ninp,)

    src2d = src.transpose(1, 0, 2).reshape(bsz * T_s, nodes)       # rows (b, t)
    tar2d = tar.transpose(1, 0, 2).reshape(bsz * T_t, nodes)
    g_out = linear_pallas(jnp.concatenate([src2d, tar2d], axis=0), A2, b_tiled)
    src_g = g_out[: bsz * T_s].reshape(bsz, T_s, nodes, ninp)
    tar_g = g_out[bsz * T_s:].reshape(bsz, T_t, nodes, ninp)
    src_seq = src_g.transpose(0, 2, 1, 3).reshape(Nb, T_s, ninp)   # (Nb, L, E)
    tar_seq = tar_g.transpose(0, 2, 1, 3).reshape(Nb, T_t, ninp)

    # positional encoding (dropout is identity in eval mode)
    # TODO(synk): nn.Dropout layers are identity here (eval-mode forward).
    src_seq = (src_seq.astype(jnp.float32)
               + positional_encoding(T_s, ninp)[None]).astype(jnp.bfloat16)
    tar_seq = (tar_seq.astype(jnp.float32)
               + positional_encoding(T_t, ninp)[None]).astype(jnp.bfloat16)

    memory = src_seq
    for p in params["enc"]:
        memory = encoder_layer(memory, p, nhead)

    out = tar_seq
    for p in params["dec"]:
        out = decoder_layer(out, memory, p, nhead)

    # ---- final fc_1 (ninp -> 1): pad output to 128 lanes for a dense store,
    # slice column 0 afterwards.
    PAD = 128
    w_pad = jnp.zeros((ninp, PAD), jnp.float32).at[:, 0].set(params["fc1_w"][:, 0])
    b_pad = jnp.zeros((PAD,), jnp.float32).at[0].set(params["fc1_b"][0])
    y = linear_pallas(out.reshape(Nb * T_t, ninp), w_pad, b_pad,
                      out_dtype=jnp.float32)                       # (Nb*T_t, 128)
    y = y[:, 0].reshape(bsz, nodes, T_t)
    return jnp.transpose(y, (2, 0, 1))                             # (T_t, b, nodes)


# ----------------------------- parameter init -----------------------------

def init_params(key, ks, ninp, nhead, nhid, nlayers, nodes):
    state = {"key": key}

    def nxt():
        state["key"], sub = jax.random.split(state["key"])
        return sub

    def w(shape, scale=0.1):
        return (jax.random.normal(nxt(), shape) * scale).astype(jnp.float32)

    def zeros(shape):
        return jnp.zeros(shape, jnp.float32)

    def self_attn_params():           # packed QKV weight (E, 3E)
        return dict(w_qkv=w((ninp, 3 * ninp)), b_qkv=zeros((3 * ninp,)),
                    w_o=w((ninp, ninp)), b_o=zeros((ninp,)))

    def cross_attn_params():          # Q separate, packed KV weight (E, 2E)
        return dict(w_q=w((ninp, ninp)), b_q=zeros((ninp,)),
                    w_kv=w((ninp, 2 * ninp)), b_kv=zeros((2 * ninp,)),
                    w_o=w((ninp, ninp)), b_o=zeros((ninp,)))

    def ln_params():
        return dict(g=jnp.ones((ninp,), jnp.float32), b=zeros((ninp,)))

    enc_layers = []
    for _ in range(nlayers):
        enc_layers.append(dict(
            self=self_attn_params(),
            lin1_w=w((ninp, nhid)), lin1_b=zeros((nhid,)),
            lin2_w=w((nhid, ninp)), lin2_b=zeros((ninp,)),
            norm1=ln_params(), norm2=ln_params()))

    dec_layers = []
    for _ in range(nlayers):
        dec_layers.append(dict(
            self=self_attn_params(), cross=cross_attn_params(),
            lin1_w=w((ninp, nhid)), lin1_b=zeros((nhid,)),
            lin2_w=w((nhid, ninp)), lin2_b=zeros((ninp,)),
            norm1=ln_params(), norm2=ln_params(), norm3=ln_params()))

    return dict(
        graph_kernel=w((nodes, ks * nodes), scale=0.3),    # GConv graph kernel
        theta_w=w((ks * 1, ninp)), theta_b=zeros((ninp,)), # GConv.theta (c_in=1)
        fc1_w=w((ninp, 1)), fc1_b=zeros((1,)),
        enc=enc_layers, dec=dec_layers)


# ----------------------------- main -----------------------------

if __name__ == "__main__":
    ks, nodes, bsz, T = 3, 4, 2, 8
    ninp, nhead, nhid, nlayers = 32, 4, 64, 2

    key = jax.random.PRNGKey(0)
    k_src, k_tar, k_par = jax.random.split(key, 3)
    src = jax.random.normal(k_src, (T, bsz, nodes), jnp.float32)
    tar = jax.random.normal(k_tar, (T, bsz, nodes), jnp.float32)
    params = init_params(k_par, ks, ninp, nhead, nhid, nlayers, nodes)

    fwd = jax.jit(functools.partial(gcn_shift_transformer,
                                    ks=ks, ninp=ninp, nhead=nhead))
    out = fwd(params, src, tar)
    out = jax.block_until_ready(out)

    assert out.shape == (T, bsz, nodes), out.shape
    assert bool(jnp.all(jnp.isfinite(out)))
    print("KERNEL_OK")
</pallas_src>

<mosaic_0001>
module attributes {stable_mosaic.version = 11 : i64} {
  func.func @_linear_kernel(%arg0: i32, %arg1: memref<32x4xbf16, #tpu.memory_space<vmem>>, %arg2: memref<4x128xbf16, #tpu.memory_space<vmem>>, %arg3: memref<1x128xf32, #tpu.memory_space<vmem>>, %arg4: memref<32x128xbf16, #tpu.memory_space<vmem>>) attributes {dimension_semantics = [#tpu.dimension_semantics<parallel>], iteration_bounds = array<i64: 1>, scalar_prefetch = 0 : i64, scratch_operands = 0 : i64, tpu.core_type = #tpu.core_type<tc>, window_params = [{transform_indices = @transform_0, window_bounds = array<i64: 32, 4>}, {pipeline_mode = #tpu.pipeline_mode<synchronous>, transform_indices = @transform_1, window_bounds = array<i64: 4, 128>}, {pipeline_mode = #tpu.pipeline_mode<synchronous>, transform_indices = @transform_2, window_bounds = array<i64: 1, 128>}, {transform_indices = @transform_3, window_bounds = array<i64: 32, 128>}]} {
    %c0 = arith.constant 0 : index
    %c0_0 = arith.constant 0 : index
    %0 = vector.load %arg1[%c0, %c0_0] : memref<32x4xbf16, #tpu.memory_space<vmem>>, vector<32x4xbf16>
    %c0_1 = arith.constant 0 : index
    %c0_2 = arith.constant 0 : index
    %1 = vector.load %arg2[%c0_1, %c0_2] : memref<4x128xbf16, #tpu.memory_space<vmem>>, vector<4x128xbf16>
    %cst = arith.constant dense<0.000000e+00> : vector<32x128xf32>
    %2 = tpu.matmul %0, %1, %cst {dimension_numbers = #tpu.dot_dimension_numbers<[1], [0], [0], [1], [0, 0, 1, 1], [], []>} : vector<32x4xbf16>, vector<4x128xbf16>, vector<32x128xf32> -> vector<32x128xf32>
    %c0_3 = arith.constant 0 : index
    %c0_4 = arith.constant 0 : index
    %3 = vector.load %arg3[%c0_3, %c0_4] : memref<1x128xf32, #tpu.memory_space<vmem>>, vector<1x128xf32>
    %4 = vector.broadcast %3 : vector<1x128xf32> to vector<32x128xf32>
    %5 = arith.addf %2, %4 : vector<32x128xf32>
    %6 = arith.truncf %5 : vector<32x128xf32> to vector<32x128xbf16>
    %c0_5 = arith.constant 0 : index
    %c0_6 = arith.constant 0 : index
    %7 = vector.load %arg4[%c0_5, %c0_6] : memref<32x128xbf16, #tpu.memory_space<vmem>>, vector<32x128xbf16>
    tpu.vector_store %arg4[%c0_5, %c0_6], %6 {strides = array<i32>} : memref<32x128xbf16, #tpu.memory_space<vmem>>, vector<32x128xbf16>,
    return
  }
  func.func @transform_0(%arg0: i32) -> (i32, i32) {
    %c0_i32 = arith.constant 0 : i32
    %c0_i32_0 = arith.constant 0 : i32
    return %arg0, %c0_i32 : i32, i32
  }
  func.func @transform_1(%arg0: i32) -> (i32, i32) {
    %c0_i32 = arith.constant 0 : i32
    %c0_i32_0 = arith.constant 0 : i32
    %c0_i32_1 = arith.constant 0 : i32
    return %c0_i32, %c0_i32_0 : i32, i32
  }
  func.func @transform_2(%arg0: i32) -> (i32, i32) {
    %c0_i32 = arith.constant 0 : i32
    %c0_i32_0 = arith.constant 0 : i32
    %c0_i32_1 = arith.constant 0 : i32
    return %c0_i32, %c0_i32_0 : i32, i32
  }
  func.func @transform_3(%arg0: i32) -> (i32, i32) {
    %c0_i32 = arith.constant 0 : i32
    %c0_i32_0 = arith.constant 0 : i32
    return %arg0, %c0_i32 : i32, i32
  }
}

module attributes {stable_mosaic.version = 11 : i64} {
  func.func @_linear_kernel(%arg0: i32, %arg1: memref<64x32xbf16, #tpu.memory_space<vmem>>, %arg2: memref<32x96xbf16, #tpu.memory_space<vmem>>, %arg3: memref<1x96xf32, #tpu.memory_space<vmem>>, %arg4: memref<64x96xbf16, #tpu.memory_space<vmem>>) attributes {dimension_semantics = [#tpu.dimension_semantics<parallel>], iteration_bounds = array<i64: 1>, scalar_prefetch = 0 : i64, scratch_operands = 0 : i64, tpu.core_type = #tpu.core_type<tc>, window_params = [{transform_indices = @transform_0, window_bounds = array<i64: 64, 32>}, {pipeline_mode = #tpu.pipeline_mode<synchronous>, transform_indices = @transform_1, window_bounds = array<i64: 32, 96>}, {pipeline_mode = #tpu.pipeline_mode<synchronous>, transform_indices = @transform_2, window_bounds = array<i64: 1, 96>}, {transform_indices = @transform_3, window_bounds = array<i64: 64, 96>}]} {
    %c0 = arith.constant 0 : index
    %c0_0 = arith.constant 0 : index
    %0 = vector.load %arg1[%c0, %c0_0] : memref<64x32xbf16, #tpu.memory_space<vmem>>, vector<64x32xbf16>
    %c0_1 = arith.constant 0 : index
    %c0_2 = arith.constant 0 : index
    %1 = vector.load %arg2[%c0_1, %c0_2] : memref<32x96xbf16, #tpu.memory_space<vmem>>, vector<32x96xbf16>
    %cst = arith.constant dense<0.000000e+00> : vector<64x96xf32>
    %2 = tpu.matmul %0, %1, %cst {dimension_numbers = #tpu.dot_dimension_numbers<[1], [0], [0], [1], [0, 0, 1, 1], [], []>} : vector<64x32xbf16>, vector<32x96xbf16>, vector<64x96xf32> -> vector<64x96xf32>
    %c0_3 = arith.constant 0 : index
    %c0_4 = arith.constant 0 : index
    %3 = vector.load %arg3[%c0_3, %c0_4] : memref<1x96xf32, #tpu.memory_space<vmem>>, vector<1x96xf32>
    %4 = vector.broadcast %3 : vector<1x96xf32> to vector<64x96xf32>
    %5 = arith.addf %2, %4 : vector<64x96xf32>
    %6 = arith.truncf %5 : vector<64x96xf32> to vector<64x96xbf16>
    %c0_5 = arith.constant 0 : index
    %c0_6 = arith.constant 0 : index
    %7 = vector.load %arg4[%c0_5, %c0_6] : memref<64x96xbf16, #tpu.memory_space<vmem>>, vector<64x96xbf16>
    tpu.vector_store %arg4[%c0_5, %c0_6], %6 {strides = array<i32>} : memref<64x96xbf16, #tpu.memory_space<vmem>>, vector<64x96xbf16>,
    return
  }
  func.func @transform_0(%arg0: i32) -> (i32, i32) {
    %c0_i32 = arith.constant 0 : i32
    %c0_i32_0 = arith.constant 0 : i32
    return %arg0, %c0_i32 : i32, i32
  }
  func.func @transform_1(%arg0: i32) -> (i32, i32) {
    %c0_i32 = arith.constant 0 : i32
    %c0_i32_0 = arith.constant 0 : i32
    %c0_i32_1 = arith.constant 0 : i32
    return %c0_i32, %c0_i32_0 : i32, i32
  }
  func.func @transform_2(%arg0: i32) -> (i32, i32) {
    %c0_i32 = arith.constant 0 : i32
    %c0_i32_0 = arith.constant 0 : i32
    %c0_i32_1 = arith.constant 0 : i32
    return %c0_i32, %c0_i32_0 : i32, i32
  }
  func.func @transform_3(%arg0: i32) -> (i32, i32) {
    %c0_i32 = arith.constant 0 : i32
    %c0_i32_0 = arith.constant 0 : i32
    return %arg0, %c0_i32 : i32, i32
  }
}

module attributes {stable_mosaic.version = 11 : i64} {
  func.func @_linear_kernel(%arg0: i32, %arg1: memref<64x32xbf16, #tpu.memory_space<vmem>>, %arg2: memref<32x32xbf16, #tpu.memory_space<vmem>>, %arg3: memref<1x32xf32, #tpu.memory_space<vmem>>, %arg4: memref<64x32xbf16, #tpu.memory_space<vmem>>) attributes {dimension_semantics = [#tpu.dimension_semantics<parallel>], iteration_bounds = array<i64: 1>, scalar_prefetch = 0 : i64, scratch_operands = 0 : i64, tpu.core_type = #tpu.core_type<tc>, window_params = [{transform_indices = @transform_0, window_bounds = array<i64: 64, 32>}, {pipeline_mode = #tpu.pipeline_mode<synchronous>, transform_indices = @transform_1, window_bounds = array<i64: 32, 32>}, {pipeline_mode = #tpu.pipeline_mode<synchronous>, transform_indices = @transform_2, window_bounds = array<i64: 1, 32>}, {transform_indices = @transform_3, window_bounds = array<i64: 64, 32>}]} {
    %c0 = arith.constant 0 : index
    %c0_0 = arith.constant 0 : index
    %0 = vector.load %arg1[%c0, %c0_0] : memref<64x32xbf16, #tpu.memory_space<vmem>>, vector<64x32xbf16>
    %c0_1 = arith.constant 0 : index
    %c0_2 = arith.constant 0 : index
    %1 = vector.load %arg2[%c0_1, %c0_2] : memref<32x32xbf16, #tpu.memory_space<vmem>>, vector<32x32xbf16>
    %cst = arith.constant dense<0.000000e+00> : vector<64x32xf32>
    %2 = tpu.matmul %0, %1, %cst {dimension_numbers = #tpu.dot_dimension_numbers<[1], [0], [0], [1], [0, 0, 1, 1], [], []>} : vector<64x32xbf16>, vector<32x32xbf16>, vector<64x32xf32> -> vector<64x32xf32>
    %c0_3 = arith.constant 0 : index
    %c0_4 = arith.constant 0 : index
    %3 = vector.load %arg3[%c0_3, %c0_4] : memref<1x32xf32, #tpu.memory_space<vmem>>, vector<1x32xf32>
    %4 = vector.broadcast %3 : vector<1x32xf32> to vector<64x32xf32>
    %5 = arith.addf %2, %4 : vector<64x32xf32>
    %6 = arith.truncf %5 : vector<64x32xf32> to vector<64x32xbf16>
    %c0_5 = arith.constant 0 : index
    %c0_6 = arith.constant 0 : index
    %7 = vector.load %arg4[%c0_5, %c0_6] : memref<64x32xbf16, #tpu.memory_space<vmem>>, vector<64x32xbf16>
    tpu.vector_store %arg4[%c0_5, %c0_6], %6 {strides = array<i32>} : memref<64x32xbf16, #tpu.memory_space<vmem>>, vector<64x32xbf16>,
    return
  }
  func.func @transform_0(%arg0: i32) -> (i32, i32) {
    %c0_i32 = arith.constant 0 : i32
    %c0_i32_0 = arith.constant 0 : i32
    return %arg0, %c0_i32 : i32, i32
  }
  func.func @transform_1(%arg0: i32) -> (i32, i32) {
    %c0_i32 = arith.constant 0 : i32
    %c0_i32_0 = arith.constant 0 : i32
    %c0_i32_1 = arith.constant 0 : i32
    return %c0_i32, %c0_i32_0 : i32, i32
  }
  func.func @transform_2(%arg0: i32) -> (i32, i32) {
    %c0_i32 = arith.constant 0 : i32
    %c0_i32_0 = arith.constant 0 : i32
    %c0_i32_1 = arith.constant 0 : i32
    return %c0_i32, %c0_i32_0 : i32, i32
  }
  func.func @transform_3(%arg0: i32) -> (i32, i32) {
    %c0_i32 = arith.constant 0 : i32
    %c0_i32_0 = arith.constant 0 : i32
    return %arg0, %c0_i32 : i32, i32
  }
}

module attributes {stable_mosaic.version = 11 : i64} {
  func.func @_attn_ln_kernel(%arg0: i32, %arg1: memref<4x8x8xbf16, #tpu.memory_space<vmem>>, %arg2: memref<4x8x8xbf16, #tpu.memory_space<vmem>>, %arg3: memref<4x8x8xbf16, #tpu.memory_space<vmem>>, %arg4: memref<1x8x32xbf16, #tpu.memory_space<vmem>>, %arg5: memref<4x8x32xbf16, #tpu.memory_space<vmem>>, %arg6: memref<1x32xf32, #tpu.memory_space<vmem>>, %arg7: memref<1x32xf32, #tpu.memory_space<vmem>>, %arg8: memref<1x32xf32, #tpu.memory_space<vmem>>, %arg9: memref<1x8x32xbf16, #tpu.memory_space<vmem>>) attributes {dimension_semantics = [#tpu.dimension_semantics<parallel>], iteration_bounds = array<i64: 8>, scalar_prefetch = 0 : i64, scratch_operands = 0 : i64, tpu.core_type = #tpu.core_type<tc>, window_params = [{transform_indices = @transform_0, window_bounds = array<i64: 4, 8, 8>}, {transform_indices = @transform_1, window_bounds = array<i64: 4, 8, 8>}, {transform_indices = @transform_2, window_bounds = array<i64: 4, 8, 8>}, {transform_indices = @transform_3, window_bounds = array<i64: 1, 8, 32>}, {pipeline_mode = #tpu.pipeline_mode<synchronous>, transform_indices = @transform_4, window_bounds = array<i64: 4, 8, 32>}, {pipeline_mode = #tpu.pipeline_mode<synchronous>, transform_indices = @transform_5, window_bounds = array<i64: 1, 32>}, {pipeline_mode = #tpu.pipeline_mode<synchronous>, transform_indices = @transform_6, window_bounds = array<i64: 1, 32>}, {pipeline_mode = #tpu.pipeline_mode<synchronous>, transform_indices = @transform_7, window_bounds = array<i64: 1, 32>}, {transform_indices = @transform_8, window_bounds = array<i64: 1, 8, 32>}]} {
    %0 = tpu.iota {dimensions = array<i32: 0>} : vector<8x8xi32>
    %1 = tpu.iota {dimensions = array<i32: 1>} : vector<8x8xi32>
    %2 = arith.cmpi sle, %1, %0 : vector<8x8xi32>
    %c0 = arith.constant 0 : index
    %c0_0 = arith.constant 0 : index
    %c0_1 = arith.constant 0 : index
    %3 = vector.load %arg4[%c0, %c0_0, %c0_1] : memref<1x8x32xbf16, #tpu.memory_space<vmem>>, vector<1x8x32xbf16>
    %4 = vector.shape_cast %3 : vector<1x8x32xbf16> to vector<8x32xbf16>
    %5 = arith.extf %4 : vector<8x32xbf16> to vector<8x32xf32>
    %c0_2 = arith.constant 0 : index
    %c0_3 = arith.constant 0 : index
    %6 = vector.load %arg6[%c0_2, %c0_3] : memref<1x32xf32, #tpu.memory_space<vmem>>, vector<1x32xf32>
    %7 = vector.broadcast %6 : vector<1x32xf32> to vector<8x32xf32>
    %8 = arith.addf %5, %7 : vector<8x32xf32>
    %c0_4 = arith.constant 0 : index
    %c0_5 = arith.constant 0 : index
    %c0_6 = arith.constant 0 : index
    %9 = vector.load %arg1[%c0_4, %c0_5, %c0_6] : memref<4x8x8xbf16, #tpu.memory_space<vmem>>, vector<1x8x8xbf16>
    %10 = vector.shape_cast %9 : vector<1x8x8xbf16> to vector<8x8xbf16>
    %c0_7 = arith.constant 0 : index
    %c0_8 = arith.constant 0 : index
    %c0_9 = arith.constant 0 : index
    %11 = vector.load %arg2[%c0_7, %c0_8, %c0_9] : memref<4x8x8xbf16, #tpu.memory_space<vmem>>, vector<1x8x8xbf16>
    %12 = vector.shape_cast %11 : vector<1x8x8xbf16> to vector<8x8xbf16>
    %c0_10 = arith.constant 0 : index
    %c0_11 = arith.constant 0 : index
    %c0_12 = arith.constant 0 : index
    %13 = vector.load %arg3[%c0_10, %c0_11, %c0_12] : memref<4x8x8xbf16, #tpu.memory_space<vmem>>, vector<1x8x8xbf16>
    %14 = vector.shape_cast %13 : vector<1x8x8xbf16> to vector<8x8xbf16>
    %cst = arith.constant dense<0.000000e+00> : vector<8x8xf32>
    %15 = tpu.matmul %10, %12, %cst {dimension_numbers = #tpu.dot_dimension_numbers<[1], [1], [0], [0], [0, 0, 1, 0], [], []>} : vector<8x8xbf16>, vector<8x8xbf16>, vector<8x8xf32> -> vector<8x8xf32>
    %cst_13 = arith.constant 0.353553385 : f32
    %16 = vector.broadcast %cst_13 : f32 to vector<8x8xf32>
    %17 = arith.mulf %15, %16 : vector<8x8xf32>
    %cst_14 = arith.constant 0xFF800000 : f32
    %18 = vector.broadcast %cst_14 : f32 to vector<8x8xf32>
    %19 = arith.select %2, %17, %18 : vector<8x8xi1>, vector<8x8xf32>
    %cst_15 = arith.constant dense<0xFF800000> : vector<8xf32>
    %20 = vector.multi_reduction <maximumf>, %19, %cst_15 [1] : vector<8x8xf32> to vector<8xf32>
    %21 = vector.shape_cast %20 : vector<8xf32> to vector<8x1xf32>
    %22 = vector.broadcast %21 : vector<8x1xf32> to vector<8x8xf32>
    %23 = arith.subf %19, %22 : vector<8x8xf32>
    %24 = math.exp %23 : vector<8x8xf32>
    %cst_16 = arith.constant dense<0.000000e+00> : vector<8xf32>
    %25 = vector.multi_reduction <add>, %24, %cst_16 [1] : vector<8x8xf32> to vector<8xf32>
    %26 = vector.shape_cast %25 : vector<8xf32> to vector<8x1xf32>
    %27 = tpu.reciprocal %26 {approx = true} : vector<8x1xf32> -> vector<8x1xf32>
    %28 = vector.broadcast %27 : vector<8x1xf32> to vector<8x8xf32>
    %29 = arith.mulf %24, %28 : vector<8x8xf32>
    %30 = arith.truncf %29 : vector<8x8xf32> to vector<8x8xbf16>
    %cst_17 = arith.constant dense<0.000000e+00> : vector<8x8xf32>
    %31 = tpu.matmul %30, %14, %cst_17 {dimension_numbers = #tpu.dot_dimension_numbers<[1], [0], [0], [1], [0, 0, 1, 1], [], []>} : vector<8x8xbf16>, vector<8x8xbf16>, vector<8x8xf32> -> vector<8x8xf32>
    %32 = arith.truncf %31 : vector<8x8xf32> to vector<8x8xbf16>
    %c0_18 = arith.constant 0 : index
    %c0_19 = arith.constant 0 : index
    %c0_20 = arith.constant 0 : index
    %33 = vector.load %arg5[%c0_18, %c0_19, %c0_20] : memref<4x8x32xbf16, #tpu.memory_space<vmem>>, vector<1x8x32xbf16>
    %34 = vector.shape_cast %33 : vector<1x8x32xbf16> to vector<8x32xbf16>
    %cst_21 = arith.constant dense<0.000000e+00> : vector<8x32xf32>
    %35 = tpu.matmul %32, %34, %cst_21 {dimension_numbers = #tpu.dot_dimension_numbers<[1], [0], [0], [1], [0, 0, 1, 1], [], []>} : vector<8x8xbf16>, vector<8x32xbf16>, vector<8x32xf32> -> vector<8x32xf32>
    %36 = arith.addf %8, %35 : vector<8x32xf32>
    %c1 = arith.constant 1 : index
    %c0_22 = arith.constant 0 : index
    %c0_23 = arith.constant 0 : index
    %37 = vector.load %arg1[%c1, %c0_22, %c0_23] : memref<4x8x8xbf16, #tpu.memory_space<vmem>>, vector<1x8x8xbf16>
    %38 = vector.shape_cast %37 : vector<1x8x8xbf16> to vector<8x8xbf16>
    %c1_24 = arith.constant 1 : index
    %c0_25 = arith.constant 0 : index
    %c0_26 = arith.constant 0 : index
    %39 = vector.load %arg2[%c1_24, %c0_25, %c0_26] : memref<4x8x8xbf16, #tpu.memory_space<vmem>>, vector<1x8x8xbf16>
    %40 = vector.shape_cast %39 : vector<1x8x8xbf16> to vector<8x8xbf16>
    %c1_27 = arith.constant 1 : index
    %c0_28 = arith.constant 0 : index
    %c0_29 = arith.constant 0 : index
    %41 = vector.load %arg3[%c1_27, %c0_28, %c0_29] : memref<4x8x8xbf16, #tpu.memory_space<vmem>>, vector<1x8x8xbf16>
    %42 = vector.shape_cast %41 : vector<1x8x8xbf16> to vector<8x8xbf16>
    %cst_30 = arith.constant dense<0.000000e+00> : vector<8x8xf32>
    %43 = tpu.matmul %38, %40, %cst_30 {dimension_numbers = #tpu.dot_dimension_numbers<[1], [1], [0], [0], [0, 0, 1, 0], [], []>} : vector<8x8xbf16>, vector<8x8xbf16>, vector<8x8xf32> -> vector<8x8xf32>
    %cst_31 = arith.constant 0.353553385 : f32
    %44 = vector.broadcast %cst_31 : f32 to vector<8x8xf32>
    %45 = arith.mulf %43, %44 : vector<8x8xf32>
    %cst_32 = arith.constant 0xFF800000 : f32
    %46 = vector.broadcast %cst_32 : f32 to vector<8x8xf32>
    %47 = arith.select %2, %45, %46 : vector<8x8xi1>, vector<8x8xf32>
    %cst_33 = arith.constant dense<0xFF800000> : vector<8xf32>
    %48 = vector.multi_reduction <maximumf>, %47, %cst_33 [1] : vector<8x8xf32> to vector<8xf32>
    %49 = vector.shape_cast %48 : vector<8xf32> to vector<8x1xf32>
    %50 = vector.broadcast %49 : vector<8x1xf32> to vector<8x8xf32>
    %51 = arith.subf %47, %50 : vector<8x8xf32>
    %52 = math.exp %51 : vector<8x8xf32>
    %cst_34 = arith.constant dense<0.000000e+00> : vector<8xf32>
    %53 = vector.multi_reduction <add>, %52, %cst_34 [1] : vector<8x8xf32> to vector<8xf32>
    %54 = vector.shape_cast %53 : vector<8xf32> to vector<8x1xf32>
    %55 = tpu.reciprocal %54 {approx = true} : vector<8x1xf32> -> vector<8x1xf32>
    %56 = vector.broadcast %55 : vector<8x1xf32> to vector<8x8xf32>
    %57 = arith.mulf %52, %56 : vector<8x8xf32>
    %58 = arith.truncf %57 : vector<8x8xf32> to vector<8x8xbf16>
    %cst_35 = arith.constant dense<0.000000e+00> : vector<8x8xf32>
    %59 = tpu.matmul %58, %42, %cst_35 {dimension_numbers = #tpu.dot_dimension_numbers<[1], [0], [0], [1], [0, 0, 1, 1], [], []>} : vector<8x8xbf16>, vector<8x8xbf16>, vector<8x8xf32> -> vector<8x8xf32>
    %60 = arith.truncf %59 : vector<8x8xf32> to vector<8x8xbf16>
    %c1_36 = arith.constant 1 : index
    %c0_37 = arith.constant 0 : index
    %c0_38 = arith.constant 0 : index
    %61 = vector.load %arg5[%c1_36, %c0_37, %c0_38] : memref<4x8x32xbf16, #tpu.memory_space<vmem>>, vector<1x8x32xbf16>
    %62 = vector.shape_cast %61 : vector<1x8x32xbf16> to vector<8x32xbf16>
    %cst_39 = arith.constant dense<0.000000e+00> : vector<8x32xf32>
    %63 = tpu.matmul %60, %62, %cst_39 {dimension_numbers = #tpu.dot_dimension_numbers<[1], [0], [0], [1], [0, 0, 1, 1], [], []>} : vector<8x8xbf16>, vector<8x32xbf16>, vector<8x32xf32> -> vector<8x32xf32>
    %64 = arith.addf %36, %63 : vector<8x32xf32>
    %c2 = arith.constant 2 : index
    %c0_40 = arith.constant 0 : index
    %c0_41 = arith.constant 0 : index
    %65 = vector.load %arg1[%c2, %c0_40, %c0_41] : memref<4x8x8xbf16, #tpu.memory_space<vmem>>, vector<1x8x8xbf16>
    %66 = vector.shape_cast %65 : vector<1x8x8xbf16> to vector<8x8xbf16>
    %c2_42 = arith.constant 2 : index
    %c0_43 = arith.constant 0 : index
    %c0_44 = arith.constant 0 : index
    %67 = vector.load %arg2[%c2_42, %c0_43, %c0_44] : memref<4x8x8xbf16, #tpu.memory_space<vmem>>, vector<1x8x8xbf16>
    %68 = vector.shape_cast %67 : vector<1x8x8xbf16> to vector<8x8xbf16>
    %c2_45 = arith.constant 2 : index
    %c0_46 = arith.constant 0 : index
    %c0_47 = arith.constant 0 : index
    %69 = vector.load %arg3[%c2_45, %c0_46, %c0_47] : memref<4x8x8xbf16, #tpu.memory_space<vmem>>, vector<1x8x8xbf16>
    %70 = vector.shape_cast %69 : vector<1x8x8xbf16> to vector<8x8xbf16>
    %cst_48 = arith.constant dense<0.000000e+00> : vector<8x8xf32>
    %71 = tpu.matmul %66, %68, %cst_48 {dimension_numbers = #tpu.dot_dimension_numbers<[1], [1], [0], [0], [0, 0, 1, 0], [], []>} : vector<8x8xbf16>, vector<8x8xbf16>, vector<8x8xf32> -> vector<8x8xf32>
    %cst_49 = arith.constant 0.353553385 : f32
    %72 = vector.broadcast %cst_49 : f32 to vector<8x8xf32>
    %73 = arith.mulf %71, %72 : vector<8x8xf32>
    %cst_50 = arith.constant 0xFF800000 : f32
    %74 = vector.broadcast %cst_50 : f32 to vector<8x8xf32>
    %75 = arith.select %2, %73, %74 : vector<8x8xi1>, vector<8x8xf32>
    %cst_51 = arith.constant dense<0xFF800000> : vector<8xf32>
    %76 = vector.multi_reduction <maximumf>, %75, %cst_51 [1] : vector<8x8xf32> to vector<8xf32>
    %77 = vector.shape_cast %76 : vector<8xf32> to vector<8x1xf32>
    %78 = vector.broadcast %77 : vector<8x1xf32> to vector<8x8xf32>
    %79 = arith.subf %75, %78 : vector<8x8xf32>
    %80 = math.exp %79 : vector<8x8xf32>
    %cst_52 = arith.constant dense<0.000000e+00> : vector<8xf32>
    %81 = vector.multi_reduction <add>, %80, %cst_52 [1] : vector<8x8xf32> to vector<8xf32>
    %82 = vector.shape_cast %81 : vector<8xf32> to vector<8x1xf32>
    %83 = tpu.reciprocal %82 {approx = true} : vector<8x1xf32> -> vector<8x1xf32>
    %84 = vector.broadcast %83 : vector<8x1xf32> to vector<8x8xf32>
    %85 = arith.mulf %80, %84 : vector<8x8xf32>
    %86 = arith.truncf %85 : vector<8x8xf32> to vector<8x8xbf16>
    %cst_53 = arith.constant dense<0.000000e+00> : vector<8x8xf32>
    %87 = tpu.matmul %86, %70, %cst_53 {dimension_numbers = #tpu.dot_dimension_numbers<[1], [0], [0], [1], [0, 0, 1, 1], [], []>} : vector<8x8xbf16>, vector<8x8xbf16>, vector<8x8xf32> -> vector<8x8xf32>
    %88 = arith.truncf %87 : vector<8x8xf32> to vector<8x8xbf16>
    %c2_54 = arith.constant 2 : index
    %c0_55 = arith.constant 0 : index
    %c0_56 = arith.constant 0 : index
    %89 = vector.load %arg5[%c2_54, %c0_55, %c0_56] : memref<4x8x32xbf16, #tpu.memory_space<vmem>>, vector<1x8x32xbf16>
    %90 = vector.shape_cast %89 : vector<1x8x32xbf16> to vector<8x32xbf16>
    %cst_57 = arith.constant dense<0.000000e+00> : vector<8x32xf32>
    %91 = tpu.matmul %88, %90, %cst_57 {dimension_numbers = #tpu.dot_dimension_numbers<[1], [0], [0], [1], [0, 0, 1, 1], [], []>} : vector<8x8xbf16>, vector<8x32xbf16>, vector<8x32xf32> -> vector<8x32xf32>
    %92 = arith.addf %64, %91 : vector<8x32xf32>
    %c3 = arith.constant 3 : index
    %c0_58 = arith.constant 0 : index
    %c0_59 = arith.constant 0 : index
    %93 = vector.load %arg1[%c3, %c0_58, %c0_59] : memref<4x8x8xbf16, #tpu.memory_space<vmem>>, vector<1x8x8xbf16>
    %94 = vector.shape_cast %93 : vector<1x8x8xbf16> to vector<8x8xbf16>
    %c3_60 = arith.constant 3 : index
    %c0_61 = arith.constant 0 : index
    %c0_62 = arith.constant 0 : index
    %95 = vector.load %arg2[%c3_60, %c0_61, %c0_62] : memref<4x8x8xbf16, #tpu.memory_space<vmem>>, vector<1x8x8xbf16>
    %96 = vector.shape_cast %95 : vector<1x8x8xbf16> to vector<8x8xbf16>
    %c3_63 = arith.constant 3 : index
    %c0_64 = arith.constant 0 : index
    %c0_65 = arith.constant 0 : index
    %97 = vector.load %arg3[%c3_63, %c0_64, %c0_65] : memref<4x8x8xbf16, #tpu.memory_space<vmem>>, vector<1x8x8xbf16>
    %98 = vector.shape_cast %97 : vector<1x8x8xbf16> to vector<8x8xbf16>
    %cst_66 = arith.constant dense<0.000000e+00> : vector<8x8xf32>
    %99 = tpu.matmul %94, %96, %cst_66 {dimension_numbers = #tpu.dot_dimension_numbers<[1], [1], [0], [0], [0, 0, 1, 0], [], []>} : vector<8x8xbf16>, vector<8x8xbf16>, vector<8x8xf32> -> vector<8x8xf32>
    %cst_67 = arith.constant 0.353553385 : f32
    %100 = vector.broadcast %cst_67 : f32 to vector<8x8xf32>
    %101 = arith.mulf %99, %100 : vector<8x8xf32>
    %cst_68 = arith.constant 0xFF800000 : f32
    %102 = vector.broadcast %cst_68 : f32 to vector<8x8xf32>
    %103 = arith.select %2, %101, %102 : vector<8x8xi1>, vector<8x8xf32>
    %cst_69 = arith.constant dense<0xFF800000> : vector<8xf32>
    %104 = vector.multi_reduction <maximumf>, %103, %cst_69 [1] : vector<8x8xf32> to vector<8xf32>
    %105 = vector.shape_cast %104 : vector<8xf32> to vector<8x1xf32>
    %106 = vector.broadcast %105 : vector<8x1xf32> to vector<8x8xf32>
    %107 = arith.subf %103, %106 : vector<8x8xf32>
    %108 = math.exp %107 : vector<8x8xf32>
    %cst_70 = arith.constant dense<0.000000e+00> : vector<8xf32>
    %109 = vector.multi_reduction <add>, %108, %cst_70 [1] : vector<8x8xf32> to vector<8xf32>
    %110 = vector.shape_cast %109 : vector<8xf32> to vector<8x1xf32>
    %111 = tpu.reciprocal %110 {approx = true} : vector<8x1xf32> -> vector<8x1xf32>
    %112 = vector.broadcast %111 : vector<8x1xf32> to vector<8x8xf32>
    %113 = arith.mulf %108, %112 : vector<8x8xf32>
    %114 = arith.truncf %113 : vector<8x8xf32> to vector<8x8xbf16>
    %cst_71 = arith.constant dense<0.000000e+00> : vector<8x8xf32>
    %115 = tpu.matmul %114, %98, %cst_71 {dimension_numbers = #tpu.dot_dimension_numbers<[1], [0], [0], [1], [0, 0, 1, 1], [], []>} : vector<8x8xbf16>, vector<8x8xbf16>, vector<8x8xf32> -> vector<8x8xf32>
    %116 = arith.truncf %115 : vector<8x8xf32> to vector<8x8xbf16>
    %c3_72 = arith.constant 3 : index
    %c0_73 = arith.constant 0 : index
    %c0_74 = arith.constant 0 : index
    %117 = vector.load %arg5[%c3_72, %c0_73, %c0_74] : memref<4x8x32xbf16, #tpu.memory_space<vmem>>, vector<1x8x32xbf16>
    %118 = vector.shape_cast %117 : vector<1x8x32xbf16> to vector<8x32xbf16>
    %cst_75 = arith.constant dense<0.000000e+00> : vector<8x32xf32>
    %119 = tpu.matmul %116, %118, %cst_75 {dimension_numbers = #tpu.dot_dimension_numbers<[1], [0], [0], [1], [0, 0, 1, 1], [], []>} : vector<8x8xbf16>, vector<8x32xbf16>, vector<8x32xf32> -> vector<8x32xf32>
    %120 = arith.addf %92, %119 : vector<8x32xf32>
    %cst_76 = arith.constant dense<0.000000e+00> : vector<8xf32>
    %121 = vector.multi_reduction <add>, %120, %cst_76 [1] : vector<8x32xf32> to vector<8xf32>
    %122 = vector.shape_cast %121 : vector<8xf32> to vector<8x1xf32>
    %cst_77 = arith.constant 3.200000e+01 : f32
    %123 = vector.broadcast %cst_77 : f32 to vector<8x1xf32>
    %124 = arith.divf %122, %123 : vector<8x1xf32>
    %125 = vector.broadcast %124 : vector<8x1xf32> to vector<8x32xf32>
    %126 = arith.subf %120, %125 : vector<8x32xf32>
    %127 = vector.broadcast %124 : vector<8x1xf32> to vector<8x32xf32>
    %128 = arith.subf %120, %127 : vector<8x32xf32>
    %129 = arith.mulf %126, %128 : vector<8x32xf32>
    %cst_78 = arith.constant dense<0.000000e+00> : vector<8xf32>
    %130 = vector.multi_reduction <add>, %129, %cst_78 [1] : vector<8x32xf32> to vector<8xf32>
    %131 = vector.shape_cast %130 : vector<8xf32> to vector<8x1xf32>
    %cst_79 = arith.constant 3.200000e+01 : f32
    %132 = vector.broadcast %cst_79 : f32 to vector<8x1xf32>
    %133 = arith.divf %131, %132 : vector<8x1xf32>
    %cst_80 = arith.constant 9.99999974E-6 : f32
    %134 = vector.broadcast %cst_80 : f32 to vector<8x1xf32>
    %135 = arith.addf %133, %134 : vector<8x1xf32>
    %136 = math.rsqrt %135 : vector<8x1xf32>
    %137 = vector.broadcast %124 : vector<8x1xf32> to vector<8x32xf32>
    %138 = arith.subf %120, %137 : vector<8x32xf32>
    %139 = vector.broadcast %136 : vector<8x1xf32> to vector<8x32xf32>
    %140 = arith.mulf %138, %139 : vector<8x32xf32>
    %c0_81 = arith.constant 0 : index
    %c0_82 = arith.constant 0 : index
    %141 = vector.load %arg7[%c0_81, %c0_82] : memref<1x32xf32, #tpu.memory_space<vmem>>, vector<1x32xf32>
    %142 = vector.broadcast %141 : vector<1x32xf32> to vector<8x32xf32>
    %143 = arith.mulf %140, %142 : vector<8x32xf32>
    %c0_83 = arith.constant 0 : index
    %c0_84 = arith.constant 0 : index
    %144 = vector.load %arg8[%c0_83, %c0_84] : memref<1x32xf32, #tpu.memory_space<vmem>>, vector<1x32xf32>
    %145 = vector.broadcast %144 : vector<1x32xf32> to vector<8x32xf32>
    %146 = arith.addf %143, %145 : vector<8x32xf32>
    %147 = arith.truncf %146 : vector<8x32xf32> to vector<8x32xbf16>
    %c0_85 = arith.constant 0 : index
    %c0_86 = arith.constant 0 : index
    %c0_87 = arith.constant 0 : index
    %148 = vector.load %arg9[%c0_85, %c0_86, %c0_87] : memref<1x8x32xbf16, #tpu.memory_space<vmem>>, vector<1x8x32xbf16>
    %149 = vector.shape_cast %148 : vector<1x8x32xbf16> to vector<8x32xbf16>
    %150 = vector.shape_cast %147 : vector<8x32xbf16> to vector<1x8x32xbf16>
    tpu.vector_store %arg9[%c0_85, %c0_86, %c0_87], %150 {strides = array<i32>} : memref<1x8x32xbf16, #tpu.memory_space<vmem>>, vector<1x8x32xbf16>,
    return
  }
  func.func @transform_0(%arg0: i32) -> (i32, i32, i32) {
    %c0_i32 = arith.constant 0 : i32
    %c0_i32_0 = arith.constant 0 : i32
    %c0_i32_1 = arith.constant 0 : i32
    return %arg0, %c0_i32, %c0_i32_0 : i32, i32, i32
  }
  func.func @transform_1(%arg0: i32) -> (i32, i32, i32) {
    %c0_i32 = arith.constant 0 : i32
    %c0_i32_0 = arith.constant 0 : i32
    %c0_i32_1 = arith.constant 0 : i32
    return %arg0, %c0_i32, %c0_i32_0 : i32, i32, i32
  }
  func.func @transform_2(%arg0: i32) -> (i32, i32, i32) {
    %c0_i32 = arith.constant 0 : i32
    %c0_i32_0 = arith.constant 0 : i32
    %c0_i32_1 = arith.constant 0 : i32
    return %arg0, %c0_i32, %c0_i32_0 : i32, i32, i32
  }
  func.func @transform_3(%arg0: i32) -> (i32, i32, i32) {
    %c0_i32 = arith.constant 0 : i32
    %c0_i32_0 = arith.constant 0 : i32
    %c0_i32_1 = arith.constant 0 : i32
    return %arg0, %c0_i32, %c0_i32_0 : i32, i32, i32
  }
  func.func @transform_4(%arg0: i32) -> (i32, i32, i32) {
    %c0_i32 = arith.constant 0 : i32
    %c0_i32_0 = arith.constant 0 : i32
    %c0_i32_1 = arith.constant 0 : i32
    %c0_i32_2 = arith.constant 0 : i32
    return %c0_i32, %c0_i32_0, %c0_i32_1 : i32, i32, i32
  }
  func.func @transform_5(%arg0: i32) -> (i32, i32) {
    %c0_i32 = arith.constant 0 : i32
    %c0_i32_0 = arith.constant 0 : i32
    %c0_i32_1 = arith.constant 0 : i32
    return %c0_i32, %c0_i32_0 : i32, i32
  }
  func.func @transform_6(%arg0: i32) -> (i32, i32) {
    %c0_i32 = arith.constant 0 : i32
    %c0_i32_0 = arith.constant 0 : i32
    %c0_i32_1 = arith.constant 0 : i32
    return %c0_i32, %c0_i32_0 : i32, i32
  }
  func.func @transform_7(%arg0: i32) -> (i32, i32) {
    %c0_i32 = arith.constant 0 : i32
    %c0_i32_0 = arith.constant 0 : i32
    %c0_i32_1 = arith.constant 0 : i32
    return %c0_i32, %c0_i32_0 : i32, i32
  }
  func.func @transform_8(%arg0: i32) -> (i32, i32, i32) {
    %c0_i32 = arith.constant 0 : i32
    %c0_i32_0 = arith.constant 0 : i32
    %c0_i32_1 = arith.constant 0 : i32
    return %arg0, %c0_i32, %c0_i32_0 : i32, i32, i32
  }
}

module attributes {stable_mosaic.version = 11 : i64} {
  func.func @_attn_ln_kernel(%arg0: i32, %arg1: memref<4x8x8xbf16, #tpu.memory_space<vmem>>, %arg2: memref<4x8x8xbf16, #tpu.memory_space<vmem>>, %arg3: memref<4x8x8xbf16, #tpu.memory_space<vmem>>, %arg4: memref<1x8x32xbf16, #tpu.memory_space<vmem>>, %arg5: memref<4x8x32xbf16, #tpu.memory_space<vmem>>, %arg6: memref<1x32xf32, #tpu.memory_space<vmem>>, %arg7: memref<1x32xf32, #tpu.memory_space<vmem>>, %arg8: memref<1x32xf32, #tpu.memory_space<vmem>>, %arg9: memref<1x8x32xbf16, #tpu.memory_space<vmem>>) attributes {dimension_semantics = [#tpu.dimension_semantics<parallel>], iteration_bounds = array<i64: 8>, scalar_prefetch = 0 : i64, scratch_operands = 0 : i64, tpu.core_type = #tpu.core_type<tc>, window_params = [{transform_indices = @transform_0, window_bounds = array<i64: 4, 8, 8>}, {transform_indices = @transform_1, window_bounds = array<i64: 4, 8, 8>}, {transform_indices = @transform_2, window_bounds = array<i64: 4, 8, 8>}, {transform_indices = @transform_3, window_bounds = array<i64: 1, 8, 32>}, {pipeline_mode = #tpu.pipeline_mode<synchronous>, transform_indices = @transform_4, window_bounds = array<i64: 4, 8, 32>}, {pipeline_mode = #tpu.pipeline_mode<synchronous>, transform_indices = @transform_5, window_bounds = array<i64: 1, 32>}, {pipeline_mode = #tpu.pipeline_mode<synchronous>, transform_indices = @transform_6, window_bounds = array<i64: 1, 32>}, {pipeline_mode = #tpu.pipeline_mode<synchronous>, transform_indices = @transform_7, window_bounds = array<i64: 1, 32>}, {transform_indices = @transform_8, window_bounds = array<i64: 1, 8, 32>}]} {
    %c0 = arith.constant 0 : index
    %c0_0 = arith.constant 0 : index
    %c0_1 = arith.constant 0 : index
    %0 = vector.load %arg4[%c0, %c0_0, %c0_1] : memref<1x8x32xbf16, #tpu.memory_space<vmem>>, vector<1x8x32xbf16>
    %1 = vector.shape_cast %0 : vector<1x8x32xbf16> to vector<8x32xbf16>
    %2 = arith.extf %1 : vector<8x32xbf16> to vector<8x32xf32>
    %c0_2 = arith.constant 0 : index
    %c0_3 = arith.constant 0 : index
    %3 = vector.load %arg6[%c0_2, %c0_3] : memref<1x32xf32, #tpu.memory_space<vmem>>, vector<1x32xf32>
    %4 = vector.broadcast %3 : vector<1x32xf32> to vector<8x32xf32>
    %5 = arith.addf %2, %4 : vector<8x32xf32>
    %c0_4 = arith.constant 0 : index
    %c0_5 = arith.constant 0 : index
    %c0_6 = arith.constant 0 : index
    %6 = vector.load %arg1[%c0_4, %c0_5, %c0_6] : memref<4x8x8xbf16, #tpu.memory_space<vmem>>, vector<1x8x8xbf16>
    %7 = vector.shape_cast %6 : vector<1x8x8xbf16> to vector<8x8xbf16>
    %c0_7 = arith.constant 0 : index
    %c0_8 = arith.constant 0 : index
    %c0_9 = arith.constant 0 : index
    %8 = vector.load %arg2[%c0_7, %c0_8, %c0_9] : memref<4x8x8xbf16, #tpu.memory_space<vmem>>, vector<1x8x8xbf16>
    %9 = vector.shape_cast %8 : vector<1x8x8xbf16> to vector<8x8xbf16>
    %c0_10 = arith.constant 0 : index
    %c0_11 = arith.constant 0 : index
    %c0_12 = arith.constant 0 : index
    %10 = vector.load %arg3[%c0_10, %c0_11, %c0_12] : memref<4x8x8xbf16, #tpu.memory_space<vmem>>, vector<1x8x8xbf16>
    %11 = vector.shape_cast %10 : vector<1x8x8xbf16> to vector<8x8xbf16>
    %cst = arith.constant dense<0.000000e+00> : vector<8x8xf32>
    %12 = tpu.matmul %7, %9, %cst {dimension_numbers = #tpu.dot_dimension_numbers<[1], [1], [0], [0], [0, 0, 1, 0], [], []>} : vector<8x8xbf16>, vector<8x8xbf16>, vector<8x8xf32> -> vector<8x8xf32>
    %cst_13 = arith.constant 0.353553385 : f32
    %13 = vector.broadcast %cst_13 : f32 to vector<8x8xf32>
    %14 = arith.mulf %12, %13 : vector<8x8xf32>
    %cst_14 = arith.constant dense<0xFF800000> : vector<8xf32>
    %15 = vector.multi_reduction <maximumf>, %14, %cst_14 [1] : vector<8x8xf32> to vector<8xf32>
    %16 = vector.shape_cast %15 : vector<8xf32> to vector<8x1xf32>
    %17 = vector.broadcast %16 : vector<8x1xf32> to vector<8x8xf32>
    %18 = arith.subf %14, %17 : vector<8x8xf32>
    %19 = math.exp %18 : vector<8x8xf32>
    %cst_15 = arith.constant dense<0.000000e+00> : vector<8xf32>
    %20 = vector.multi_reduction <add>, %19, %cst_15 [1] : vector<8x8xf32> to vector<8xf32>
    %21 = vector.shape_cast %20 : vector<8xf32> to vector<8x1xf32>
    %22 = tpu.reciprocal %21 {approx = true} : vector<8x1xf32> -> vector<8x1xf32>
    %23 = vector.broadcast %22 : vector<8x1xf32> to vector<8x8xf32>
    %24 = arith.mulf %19, %23 : vector<8x8xf32>
    %25 = arith.truncf %24 : vector<8x8xf32> to vector<8x8xbf16>
    %cst_16 = arith.constant dense<0.000000e+00> : vector<8x8xf32>
    %26 = tpu.matmul %25, %11, %cst_16 {dimension_numbers = #tpu.dot_dimension_numbers<[1], [0], [0], [1], [0, 0, 1, 1], [], []>} : vector<8x8xbf16>, vector<8x8xbf16>, vector<8x8xf32> -> vector<8x8xf32>
    %27 = arith.truncf %26 : vector<8x8xf32> to vector<8x8xbf16>
    %c0_17 = arith.constant 0 : index
    %c0_18 = arith.constant 0 : index
    %c0_19 = arith.constant 0 : index
    %28 = vector.load %arg5[%c0_17, %c0_18, %c0_19] : memref<4x8x32xbf16, #tpu.memory_space<vmem>>, vector<1x8x32xbf16>
    %29 = vector.shape_cast %28 : vector<1x8x32xbf16> to vector<8x32xbf16>
    %cst_20 = arith.constant dense<0.000000e+00> : vector<8x32xf32>
    %30 = tpu.matmul %27, %29, %cst_20 {dimension_numbers = #tpu.dot_dimension_numbers<[1], [0], [0], [1], [0, 0, 1, 1], [], []>} : vector<8x8xbf16>, vector<8x32xbf16>, vector<8x32xf32> -> vector<8x32xf32>
    %31 = arith.addf %5, %30 : vector<8x32xf32>
    %c1 = arith.constant 1 : index
    %c0_21 = arith.constant 0 : index
    %c0_22 = arith.constant 0 : index
    %32 = vector.load %arg1[%c1, %c0_21, %c0_22] : memref<4x8x8xbf16, #tpu.memory_space<vmem>>, vector<1x8x8xbf16>
    %33 = vector.shape_cast %32 : vector<1x8x8xbf16> to vector<8x8xbf16>
    %c1_23 = arith.constant 1 : index
    %c0_24 = arith.constant 0 : index
    %c0_25 = arith.constant 0 : index
    %34 = vector.load %arg2[%c1_23, %c0_24, %c0_25] : memref<4x8x8xbf16, #tpu.memory_space<vmem>>, vector<1x8x8xbf16>
    %35 = vector.shape_cast %34 : vector<1x8x8xbf16> to vector<8x8xbf16>
    %c1_26 = arith.constant 1 : index
    %c0_27 = arith.constant 0 : index
    %c0_28 = arith.constant 0 : index
    %36 = vector.load %arg3[%c1_26, %c0_27, %c0_28] : memref<4x8x8xbf16, #tpu.memory_space<vmem>>, vector<1x8x8xbf16>
    %37 = vector.shape_cast %36 : vector<1x8x8xbf16> to vector<8x8xbf16>
    %cst_29 = arith.constant dense<0.000000e+00> : vector<8x8xf32>
    %38 = tpu.matmul %33, %35, %cst_29 {dimension_numbers = #tpu.dot_dimension_numbers<[1], [1], [0], [0], [0, 0, 1, 0], [], []>} : vector<8x8xbf16>, vector<8x8xbf16>, vector<8x8xf32> -> vector<8x8xf32>
    %cst_30 = arith.constant 0.353553385 : f32
    %39 = vector.broadcast %cst_30 : f32 to vector<8x8xf32>
    %40 = arith.mulf %38, %39 : vector<8x8xf32>
    %cst_31 = arith.constant dense<0xFF800000> : vector<8xf32>
    %41 = vector.multi_reduction <maximumf>, %40, %cst_31 [1] : vector<8x8xf32> to vector<8xf32>
    %42 = vector.shape_cast %41 : vector<8xf32> to vector<8x1xf32>
    %43 = vector.broadcast %42 : vector<8x1xf32> to vector<8x8xf32>
    %44 = arith.subf %40, %43 : vector<8x8xf32>
    %45 = math.exp %44 : vector<8x8xf32>
    %cst_32 = arith.constant dense<0.000000e+00> : vector<8xf32>
    %46 = vector.multi_reduction <add>, %45, %cst_32 [1] : vector<8x8xf32> to vector<8xf32>
    %47 = vector.shape_cast %46 : vector<8xf32> to vector<8x1xf32>
    %48 = tpu.reciprocal %47 {approx = true} : vector<8x1xf32> -> vector<8x1xf32>
    %49 = vector.broadcast %48 : vector<8x1xf32> to vector<8x8xf32>
    %50 = arith.mulf %45, %49 : vector<8x8xf32>
    %51 = arith.truncf %50 : vector<8x8xf32> to vector<8x8xbf16>
    %cst_33 = arith.constant dense<0.000000e+00> : vector<8x8xf32>
    %52 = tpu.matmul %51, %37, %cst_33 {dimension_numbers = #tpu.dot_dimension_numbers<[1], [0], [0], [1], [0, 0, 1, 1], [], []>} : vector<8x8xbf16>, vector<8x8xbf16>, vector<8x8xf32> -> vector<8x8xf32>
    %53 = arith.truncf %52 : vector<8x8xf32> to vector<8x8xbf16>
    %c1_34 = arith.constant 1 : index
    %c0_35 = arith.constant 0 : index
    %c0_36 = arith.constant 0 : index
    %54 = vector.load %arg5[%c1_34, %c0_35, %c0_36] : memref<4x8x32xbf16, #tpu.memory_space<vmem>>, vector<1x8x32xbf16>
    %55 = vector.shape_cast %54 : vector<1x8x32xbf16> to vector<8x32xbf16>
    %cst_37 = arith.constant dense<0.000000e+00> : vector<8x32xf32>
    %56 = tpu.matmul %53, %55, %cst_37 {dimension_numbers = #tpu.dot_dimension_numbers<[1], [0], [0], [1], [0, 0, 1, 1], [], []>} : vector<8x8xbf16>, vector<8x32xbf16>, vector<8x32xf32> -> vector<8x32xf32>
    %57 = arith.addf %31, %56 : vector<8x32xf32>
    %c2 = arith.constant 2 : index
    %c0_38 = arith.constant 0 : index
    %c0_39 = arith.constant 0 : index
    %58 = vector.load %arg1[%c2, %c0_38, %c0_39] : memref<4x8x8xbf16, #tpu.memory_space<vmem>>, vector<1x8x8xbf16>
    %59 = vector.shape_cast %58 : vector<1x8x8xbf16> to vector<8x8xbf16>
    %c2_40 = arith.constant 2 : index
    %c0_41 = arith.constant 0 : index
    %c0_42 = arith.constant 0 : index
    %60 = vector.load %arg2[%c2_40, %c0_41, %c0_42] : memref<4x8x8xbf16, #tpu.memory_space<vmem>>, vector<1x8x8xbf16>
    %61 = vector.shape_cast %60 : vector<1x8x8xbf16> to vector<8x8xbf16>
    %c2_43 = arith.constant 2 : index
    %c0_44 = arith.constant 0 : index
    %c0_45 = arith.constant 0 : index
    %62 = vector.load %arg3[%c2_43, %c0_44, %c0_45] : memref<4x8x8xbf16, #tpu.memory_space<vmem>>, vector<1x8x8xbf16>
    %63 = vector.shape_cast %62 : vector<1x8x8xbf16> to vector<8x8xbf16>
    %cst_46 = arith.constant dense<0.000000e+00> : vector<8x8xf32>
    %64 = tpu.matmul %59, %61, %cst_46 {dimension_numbers = #tpu.dot_dimension_numbers<[1], [1], [0], [0], [0, 0, 1, 0], [], []>} : vector<8x8xbf16>, vector<8x8xbf16>, vector<8x8xf32> -> vector<8x8xf32>
    %cst_47 = arith.constant 0.353553385 : f32
    %65 = vector.broadcast %cst_47 : f32 to vector<8x8xf32>
    %66 = arith.mulf %64, %65 : vector<8x8xf32>
    %cst_48 = arith.constant dense<0xFF800000> : vector<8xf32>
    %67 = vector.multi_reduction <maximumf>, %66, %cst_48 [1] : vector<8x8xf32> to vector<8xf32>
    %68 = vector.shape_cast %67 : vector<8xf32> to vector<8x1xf32>
    %69 = vector.broadcast %68 : vector<8x1xf32> to vector<8x8xf32>
    %70 = arith.subf %66, %69 : vector<8x8xf32>
    %71 = math.exp %70 : vector<8x8xf32>
    %cst_49 = arith.constant dense<0.000000e+00> : vector<8xf32>
    %72 = vector.multi_reduction <add>, %71, %cst_49 [1] : vector<8x8xf32> to vector<8xf32>
    %73 = vector.shape_cast %72 : vector<8xf32> to vector<8x1xf32>
    %74 = tpu.reciprocal %73 {approx = true} : vector<8x1xf32> -> vector<8x1xf32>
    %75 = vector.broadcast %74 : vector<8x1xf32> to vector<8x8xf32>
    %76 = arith.mulf %71, %75 : vector<8x8xf32>
    %77 = arith.truncf %76 : vector<8x8xf32> to vector<8x8xbf16>
    %cst_50 = arith.constant dense<0.000000e+00> : vector<8x8xf32>
    %78 = tpu.matmul %77, %63, %cst_50 {dimension_numbers = #tpu.dot_dimension_numbers<[1], [0], [0], [1], [0, 0, 1, 1], [], []>} : vector<8x8xbf16>, vector<8x8xbf16>, vector<8x8xf32> -> vector<8x8xf32>
    %79 = arith.truncf %78 : vector<8x8xf32> to vector<8x8xbf16>
    %c2_51 = arith.constant 2 : index
    %c0_52 = arith.constant 0 : index
    %c0_53 = arith.constant 0 : index
    %80 = vector.load %arg5[%c2_51, %c0_52, %c0_53] : memref<4x8x32xbf16, #tpu.memory_space<vmem>>, vector<1x8x32xbf16>
    %81 = vector.shape_cast %80 : vector<1x8x32xbf16> to vector<8x32xbf16>
    %cst_54 = arith.constant dense<0.000000e+00> : vector<8x32xf32>
    %82 = tpu.matmul %79, %81, %cst_54 {dimension_numbers = #tpu.dot_dimension_numbers<[1], [0], [0], [1], [0, 0, 1, 1], [], []>} : vector<8x8xbf16>, vector<8x32xbf16>, vector<8x32xf32> -> vector<8x32xf32>
    %83 = arith.addf %57, %82 : vector<8x32xf32>
    %c3 = arith.constant 3 : index
    %c0_55 = arith.constant 0 : index
    %c0_56 = arith.constant 0 : index
    %84 = vector.load %arg1[%c3, %c0_55, %c0_56] : memref<4x8x8xbf16, #tpu.memory_space<vmem>>, vector<1x8x8xbf16>
    %85 = vector.shape_cast %84 : vector<1x8x8xbf16> to vector<8x8xbf16>
    %c3_57 = arith.constant 3 : index
    %c0_58 = arith.constant 0 : index
    %c0_59 = arith.constant 0 : index
    %86 = vector.load %arg2[%c3_57, %c0_58, %c0_59] : memref<4x8x8xbf16, #tpu.memory_space<vmem>>, vector<1x8x8xbf16>
    %87 = vector.shape_cast %86 : vector<1x8x8xbf16> to vector<8x8xbf16>
    %c3_60 = arith.constant 3 : index
    %c0_61 = arith.constant 0 : index
    %c0_62 = arith.constant 0 : index
    %88 = vector.load %arg3[%c3_60, %c0_61, %c0_62] : memref<4x8x8xbf16, #tpu.memory_space<vmem>>, vector<1x8x8xbf16>
    %89 = vector.shape_cast %88 : vector<1x8x8xbf16> to vector<8x8xbf16>
    %cst_63 = arith.constant dense<0.000000e+00> : vector<8x8xf32>
    %90 = tpu.matmul %85, %87, %cst_63 {dimension_numbers = #tpu.dot_dimension_numbers<[1], [1], [0], [0], [0, 0, 1, 0], [], []>} : vector<8x8xbf16>, vector<8x8xbf16>, vector<8x8xf32> -> vector<8x8xf32>
    %cst_64 = arith.constant 0.353553385 : f32
    %91 = vector.broadcast %cst_64 : f32 to vector<8x8xf32>
    %92 = arith.mulf %90, %91 : vector<8x8xf32>
    %cst_65 = arith.constant dense<0xFF800000> : vector<8xf32>
    %93 = vector.multi_reduction <maximumf>, %92, %cst_65 [1] : vector<8x8xf32> to vector<8xf32>
    %94 = vector.shape_cast %93 : vector<8xf32> to vector<8x1xf32>
    %95 = vector.broadcast %94 : vector<8x1xf32> to vector<8x8xf32>
    %96 = arith.subf %92, %95 : vector<8x8xf32>
    %97 = math.exp %96 : vector<8x8xf32>
    %cst_66 = arith.constant dense<0.000000e+00> : vector<8xf32>
    %98 = vector.multi_reduction <add>, %97, %cst_66 [1] : vector<8x8xf32> to vector<8xf32>
    %99 = vector.shape_cast %98 : vector<8xf32> to vector<8x1xf32>
    %100 = tpu.reciprocal %99 {approx = true} : vector<8x1xf32> -> vector<8x1xf32>
    %101 = vector.broadcast %100 : vector<8x1xf32> to vector<8x8xf32>
    %102 = arith.mulf %97, %101 : vector<8x8xf32>
    %103 = arith.truncf %102 : vector<8x8xf32> to vector<8x8xbf16>
    %cst_67 = arith.constant dense<0.000000e+00> : vector<8x8xf32>
    %104 = tpu.matmul %103, %89, %cst_67 {dimension_numbers = #tpu.dot_dimension_numbers<[1], [0], [0], [1], [0, 0, 1, 1], [], []>} : vector<8x8xbf16>, vector<8x8xbf16>, vector<8x8xf32> -> vector<8x8xf32>
    %105 = arith.truncf %104 : vector<8x8xf32> to vector<8x8xbf16>
    %c3_68 = arith.constant 3 : index
    %c0_69 = arith.constant 0 : index
    %c0_70 = arith.constant 0 : index
    %106 = vector.load %arg5[%c3_68, %c0_69, %c0_70] : memref<4x8x32xbf16, #tpu.memory_space<vmem>>, vector<1x8x32xbf16>
    %107 = vector.shape_cast %106 : vector<1x8x32xbf16> to vector<8x32xbf16>
    %cst_71 = arith.constant dense<0.000000e+00> : vector<8x32xf32>
    %108 = tpu.matmul %105, %107, %cst_71 {dimension_numbers = #tpu.dot_dimension_numbers<[1], [0], [0], [1], [0, 0, 1, 1], [], []>} : vector<8x8xbf16>, vector<8x32xbf16>, vector<8x32xf32> -> vector<8x32xf32>
    %109 = arith.addf %83, %108 : vector<8x32xf32>
    %cst_72 = arith.constant dense<0.000000e+00> : vector<8xf32>
    %110 = vector.multi_reduction <add>, %109, %cst_72 [1] : vector<8x32xf32> to vector<8xf32>
    %111 = vector.shape_cast %110 : vector<8xf32> to vector<8x1xf32>
    %cst_73 = arith.constant 3.200000e+01 : f32
    %112 = vector.broadcast %cst_73 : f32 to vector<8x1xf32>
    %113 = arith.divf %111, %112 : vector<8x1xf32>
    %114 = vector.broadcast %113 : vector<8x1xf32> to vector<8x32xf32>
    %115 = arith.subf %109, %114 : vector<8x32xf32>
    %116 = vector.broadcast %113 : vector<8x1xf32> to vector<8x32xf32>
    %117 = arith.subf %109, %116 : vector<8x32xf32>
    %118 = arith.mulf %115, %117 : vector<8x32xf32>
    %cst_74 = arith.constant dense<0.000000e+00> : vector<8xf32>
    %119 = vector.multi_reduction <add>, %118, %cst_74 [1] : vector<8x32xf32> to vector<8xf32>
    %120 = vector.shape_cast %119 : vector<8xf32> to vector<8x1xf32>
    %cst_75 = arith.constant 3.200000e+01 : f32
    %121 = vector.broadcast %cst_75 : f32 to vector<8x1xf32>
    %122 = arith.divf %120, %121 : vector<8x1xf32>
    %cst_76 = arith.constant 9.99999974E-6 : f32
    %123 = vector.broadcast %cst_76 : f32 to vector<8x1xf32>
    %124 = arith.addf %122, %123 : vector<8x1xf32>
    %125 = math.rsqrt %124 : vector<8x1xf32>
    %126 = vector.broadcast %113 : vector<8x1xf32> to vector<8x32xf32>
    %127 = arith.subf %109, %126 : vector<8x32xf32>
    %128 = vector.broadcast %125 : vector<8x1xf32> to vector<8x32xf32>
    %129 = arith.mulf %127, %128 : vector<8x32xf32>
    %c0_77 = arith.constant 0 : index
    %c0_78 = arith.constant 0 : index
    %130 = vector.load %arg7[%c0_77, %c0_78] : memref<1x32xf32, #tpu.memory_space<vmem>>, vector<1x32xf32>
    %131 = vector.broadcast %130 : vector<1x32xf32> to vector<8x32xf32>
    %132 = arith.mulf %129, %131 : vector<8x32xf32>
    %c0_79 = arith.constant 0 : index
    %c0_80 = arith.constant 0 : index
    %133 = vector.load %arg8[%c0_79, %c0_80] : memref<1x32xf32, #tpu.memory_space<vmem>>, vector<1x32xf32>
    %134 = vector.broadcast %133 : vector<1x32xf32> to vector<8x32xf32>
    %135 = arith.addf %132, %134 : vector<8x32xf32>
    %136 = arith.truncf %135 : vector<8x32xf32> to vector<8x32xbf16>
    %c0_81 = arith.constant 0 : index
    %c0_82 = arith.constant 0 : index
    %c0_83 = arith.constant 0 : index
    %137 = vector.load %arg9[%c0_81, %c0_82, %c0_83] : memref<1x8x32xbf16, #tpu.memory_space<vmem>>, vector<1x8x32xbf16>
    %138 = vector.shape_cast %137 : vector<1x8x32xbf16> to vector<8x32xbf16>
    %139 = vector.shape_cast %136 : vector<8x32xbf16> to vector<1x8x32xbf16>
    tpu.vector_store %arg9[%c0_81, %c0_82, %c0_83], %139 {strides = array<i32>} : memref<1x8x32xbf16, #tpu.memory_space<vmem>>, vector<1x8x32xbf16>,
    return
  }
  func.func @transform_0(%arg0: i32) -> (i32, i32, i32) {
    %c0_i32 = arith.constant 0 : i32
    %c0_i32_0 = arith.constant 0 : i32
    %c0_i32_1 = arith.constant 0 : i32
    return %arg0, %c0_i32, %c0_i32_0 : i32, i32, i32
  }
  func.func @transform_1(%arg0: i32) -> (i32, i32, i32) {
    %c0_i32 = arith.constant 0 : i32
    %c0_i32_0 = arith.constant 0 : i32
    %c0_i32_1 = arith.constant 0 : i32
    return %arg0, %c0_i32, %c0_i32_0 : i32, i32, i32
  }
  func.func @transform_2(%arg0: i32) -> (i32, i32, i32) {
    %c0_i32 = arith.constant 0 : i32
    %c0_i32_0 = arith.constant 0 : i32
    %c0_i32_1 = arith.constant 0 : i32
    return %arg0, %c0_i32, %c0_i32_0 : i32, i32, i32
  }
  func.func @transform_3(%arg0: i32) -> (i32, i32, i32) {
    %c0_i32 = arith.constant 0 : i32
    %c0_i32_0 = arith.constant 0 : i32
    %c0_i32_1 = arith.constant 0 : i32
    return %arg0, %c0_i32, %c0_i32_0 : i32, i32, i32
  }
  func.func @transform_4(%arg0: i32) -> (i32, i32, i32) {
    %c0_i32 = arith.constant 0 : i32
    %c0_i32_0 = arith.constant 0 : i32
    %c0_i32_1 = arith.constant 0 : i32
    %c0_i32_2 = arith.constant 0 : i32
    return %c0_i32, %c0_i32_0, %c0_i32_1 : i32, i32, i32
  }
  func.func @transform_5(%arg0: i32) -> (i32, i32) {
    %c0_i32 = arith.constant 0 : i32
    %c0_i32_0 = arith.constant 0 : i32
    %c0_i32_1 = arith.constant 0 : i32
    return %c0_i32, %c0_i32_0 : i32, i32
  }
  func.func @transform_6(%arg0: i32) -> (i32, i32) {
    %c0_i32 = arith.constant 0 : i32
    %c0_i32_0 = arith.constant 0 : i32
    %c0_i32_1 = arith.constant 0 : i32
    return %c0_i32, %c0_i32_0 : i32, i32
  }
  func.func @transform_7(%arg0: i32) -> (i32, i32) {
    %c0_i32 = arith.constant 0 : i32
    %c0_i32_0 = arith.constant 0 : i32
    %c0_i32_1 = arith.constant 0 : i32
    return %c0_i32, %c0_i32_0 : i32, i32
  }
  func.func @transform_8(%arg0: i32) -> (i32, i32, i32) {
    %c0_i32 = arith.constant 0 : i32
    %c0_i32_0 = arith.constant 0 : i32
    %c0_i32_1 = arith.constant 0 : i32
    return %arg0, %c0_i32, %c0_i32_0 : i32, i32, i32
  }
}

module attributes {stable_mosaic.version = 11 : i64} {
  func.func @_linear_kernel(%arg0: i32, %arg1: memref<64x32xbf16, #tpu.memory_space<vmem>>, %arg2: memref<32x64xbf16, #tpu.memory_space<vmem>>, %arg3: memref<1x64xf32, #tpu.memory_space<vmem>>, %arg4: memref<64x64xbf16, #tpu.memory_space<vmem>>) attributes {dimension_semantics = [#tpu.dimension_semantics<parallel>], iteration_bounds = array<i64: 1>, scalar_prefetch = 0 : i64, scratch_operands = 0 : i64, tpu.core_type = #tpu.core_type<tc>, window_params = [{transform_indices = @transform_0, window_bounds = array<i64: 64, 32>}, {pipeline_mode = #tpu.pipeline_mode<synchronous>, transform_indices = @transform_1, window_bounds = array<i64: 32, 64>}, {pipeline_mode = #tpu.pipeline_mode<synchronous>, transform_indices = @transform_2, window_bounds = array<i64: 1, 64>}, {transform_indices = @transform_3, window_bounds = array<i64: 64, 64>}]} {
    %c0 = arith.constant 0 : index
    %c0_0 = arith.constant 0 : index
    %0 = vector.load %arg1[%c0, %c0_0] : memref<64x32xbf16, #tpu.memory_space<vmem>>, vector<64x32xbf16>
    %c0_1 = arith.constant 0 : index
    %c0_2 = arith.constant 0 : index
    %1 = vector.load %arg2[%c0_1, %c0_2] : memref<32x64xbf16, #tpu.memory_space<vmem>>, vector<32x64xbf16>
    %cst = arith.constant dense<0.000000e+00> : vector<64x64xf32>
    %2 = tpu.matmul %0, %1, %cst {dimension_numbers = #tpu.dot_dimension_numbers<[1], [0], [0], [1], [0, 0, 1, 1], [], []>} : vector<64x32xbf16>, vector<32x64xbf16>, vector<64x64xf32> -> vector<64x64xf32>
    %c0_3 = arith.constant 0 : index
    %c0_4 = arith.constant 0 : index
    %3 = vector.load %arg3[%c0_3, %c0_4] : memref<1x64xf32, #tpu.memory_space<vmem>>, vector<1x64xf32>
    %4 = vector.broadcast %3 : vector<1x64xf32> to vector<64x64xf32>
    %5 = arith.addf %2, %4 : vector<64x64xf32>
    %6 = arith.truncf %5 : vector<64x64xf32> to vector<64x64xbf16>
    %c0_5 = arith.constant 0 : index
    %c0_6 = arith.constant 0 : index
    %7 = vector.load %arg4[%c0_5, %c0_6] : memref<64x64xbf16, #tpu.memory_space<vmem>>, vector<64x64xbf16>
    tpu.vector_store %arg4[%c0_5, %c0_6], %6 {strides = array<i32>} : memref<64x64xbf16, #tpu.memory_space<vmem>>, vector<64x64xbf16>,
    return
  }
  func.func @transform_0(%arg0: i32) -> (i32, i32) {
    %c0_i32 = arith.constant 0 : i32
    %c0_i32_0 = arith.constant 0 : i32
    return %arg0, %c0_i32 : i32, i32
  }
  func.func @transform_1(%arg0: i32) -> (i32, i32) {
    %c0_i32 = arith.constant 0 : i32
    %c0_i32_0 = arith.constant 0 : i32
    %c0_i32_1 = arith.constant 0 : i32
    return %c0_i32, %c0_i32_0 : i32, i32
  }
  func.func @transform_2(%arg0: i32) -> (i32, i32) {
    %c0_i32 = arith.constant 0 : i32
    %c0_i32_0 = arith.constant 0 : i32
    %c0_i32_1 = arith.constant 0 : i32
    return %c0_i32, %c0_i32_0 : i32, i32
  }
  func.func @transform_3(%arg0: i32) -> (i32, i32) {
    %c0_i32 = arith.constant 0 : i32
    %c0_i32_0 = arith.constant 0 : i32
    return %arg0, %c0_i32 : i32, i32
  }
}

module attributes {stable_mosaic.version = 11 : i64} {
  func.func @_ffn_ln_kernel(%arg0: i32, %arg1: memref<64x32xbf16, #tpu.memory_space<vmem>>, %arg2: memref<32x64xbf16, #tpu.memory_space<vmem>>, %arg3: memref<1x64xf32, #tpu.memory_space<vmem>>, %arg4: memref<64x32xbf16, #tpu.memory_space<vmem>>, %arg5: memref<1x32xf32, #tpu.memory_space<vmem>>, %arg6: memref<1x32xf32, #tpu.memory_space<vmem>>, %arg7: memref<1x32xf32, #tpu.memory_space<vmem>>, %arg8: memref<64x32xbf16, #tpu.memory_space<vmem>>) attributes {dimension_semantics = [#tpu.dimension_semantics<parallel>], iteration_bounds = array<i64: 1>, scalar_prefetch = 0 : i64, scratch_operands = 0 : i64, tpu.core_type = #tpu.core_type<tc>, window_params = [{transform_indices = @transform_0, window_bounds = array<i64: 64, 32>}, {pipeline_mode = #tpu.pipeline_mode<synchronous>, transform_indices = @transform_1, window_bounds = array<i64: 32, 64>}, {pipeline_mode = #tpu.pipeline_mode<synchronous>, transform_indices = @transform_2, window_bounds = array<i64: 1, 64>}, {pipeline_mode = #tpu.pipeline_mode<synchronous>, transform_indices = @transform_3, window_bounds = array<i64: 64, 32>}, {pipeline_mode = #tpu.pipeline_mode<synchronous>, transform_indices = @transform_4, window_bounds = array<i64: 1, 32>}, {pipeline_mode = #tpu.pipeline_mode<synchronous>, transform_indices = @transform_5, window_bounds = array<i64: 1, 32>}, {pipeline_mode = #tpu.pipeline_mode<synchronous>, transform_indices = @transform_6, window_bounds = array<i64: 1, 32>}, {transform_indices = @transform_7, window_bounds = array<i64: 64, 32>}]} {
    %c0 = arith.constant 0 : index
    %c0_0 = arith.constant 0 : index
    %0 = vector.load %arg1[%c0, %c0_0] : memref<64x32xbf16, #tpu.memory_space<vmem>>, vector<64x32xbf16>
    %c0_1 = arith.constant 0 : index
    %c0_2 = arith.constant 0 : index
    %1 = vector.load %arg2[%c0_1, %c0_2] : memref<32x64xbf16, #tpu.memory_space<vmem>>, vector<32x64xbf16>
    %cst = arith.constant dense<0.000000e+00> : vector<64x64xf32>
    %2 = tpu.matmul %0, %1, %cst {dimension_numbers = #tpu.dot_dimension_numbers<[1], [0], [0], [1], [0, 0, 1, 1], [], []>} : vector<64x32xbf16>, vector<32x64xbf16>, vector<64x64xf32> -> vector<64x64xf32>
    %c0_3 = arith.constant 0 : index
    %c0_4 = arith.constant 0 : index
    %3 = vector.load %arg3[%c0_3, %c0_4] : memref<1x64xf32, #tpu.memory_space<vmem>>, vector<1x64xf32>
    %4 = vector.broadcast %3 : vector<1x64xf32> to vector<64x64xf32>
    %5 = arith.addf %2, %4 : vector<64x64xf32>
    %cst_5 = arith.constant 0.000000e+00 : f32
    %6 = vector.broadcast %cst_5 : f32 to vector<64x64xf32>
    %7 = arith.maximumf %5, %6 : vector<64x64xf32>
    %8 = arith.truncf %7 : vector<64x64xf32> to vector<64x64xbf16>
    %c0_6 = arith.constant 0 : index
    %c0_7 = arith.constant 0 : index
    %9 = vector.load %arg4[%c0_6, %c0_7] : memref<64x32xbf16, #tpu.memory_space<vmem>>, vector<64x32xbf16>
    %cst_8 = arith.constant dense<0.000000e+00> : vector<64x32xf32>
    %10 = tpu.matmul %8, %9, %cst_8 {dimension_numbers = #tpu.dot_dimension_numbers<[1], [0], [0], [1], [0, 0, 1, 1], [], []>} : vector<64x64xbf16>, vector<64x32xbf16>, vector<64x32xf32> -> vector<64x32xf32>
    %c0_9 = arith.constant 0 : index
    %c0_10 = arith.constant 0 : index
    %11 = vector.load %arg5[%c0_9, %c0_10] : memref<1x32xf32, #tpu.memory_space<vmem>>, vector<1x32xf32>
    %12 = vector.broadcast %11 : vector<1x32xf32> to vector<64x32xf32>
    %13 = arith.addf %10, %12 : vector<64x32xf32>
    %14 = arith.extf %0 : vector<64x32xbf16> to vector<64x32xf32>
    %15 = arith.addf %13, %14 : vector<64x32xf32>
    %cst_11 = arith.constant dense<0.000000e+00> : vector<64xf32>
    %16 = vector.multi_reduction <add>, %15, %cst_11 [1] : vector<64x32xf32> to vector<64xf32>
    %17 = vector.shape_cast %16 : vector<64xf32> to vector<64x1xf32>
    %cst_12 = arith.constant 3.200000e+01 : f32
    %18 = vector.broadcast %cst_12 : f32 to vector<64x1xf32>
    %19 = arith.divf %17, %18 : vector<64x1xf32>
    %20 = vector.broadcast %19 : vector<64x1xf32> to vector<64x32xf32>
    %21 = arith.subf %15, %20 : vector<64x32xf32>
    %22 = vector.broadcast %19 : vector<64x1xf32> to vector<64x32xf32>
    %23 = arith.subf %15, %22 : vector<64x32xf32>
    %24 = arith.mulf %21, %23 : vector<64x32xf32>
    %cst_13 = arith.constant dense<0.000000e+00> : vector<64xf32>
    %25 = vector.multi_reduction <add>, %24, %cst_13 [1] : vector<64x32xf32> to vector<64xf32>
    %26 = vector.shape_cast %25 : vector<64xf32> to vector<64x1xf32>
    %cst_14 = arith.constant 3.200000e+01 : f32
    %27 = vector.broadcast %cst_14 : f32 to vector<64x1xf32>
    %28 = arith.divf %26, %27 : vector<64x1xf32>
    %cst_15 = arith.constant 9.99999974E-6 : f32
    %29 = vector.broadcast %cst_15 : f32 to vector<64x1xf32>
    %30 = arith.addf %28, %29 : vector<64x1xf32>
    %31 = math.rsqrt %30 : vector<64x1xf32>
    %32 = vector.broadcast %19 : vector<64x1xf32> to vector<64x32xf32>
    %33 = arith.subf %15, %32 : vector<64x32xf32>
    %34 = vector.broadcast %31 : vector<64x1xf32> to vector<64x32xf32>
    %35 = arith.mulf %33, %34 : vector<64x32xf32>
    %c0_16 = arith.constant 0 : index
    %c0_17 = arith.constant 0 : index
    %36 = vector.load %arg6[%c0_16, %c0_17] : memref<1x32xf32, #tpu.memory_space<vmem>>, vector<1x32xf32>
    %37 = vector.broadcast %36 : vector<1x32xf32> to vector<64x32xf32>
    %38 = arith.mulf %35, %37 : vector<64x32xf32>
    %c0_18 = arith.constant 0 : index
    %c0_19 = arith.constant 0 : index
    %39 = vector.load %arg7[%c0_18, %c0_19] : memref<1x32xf32, #tpu.memory_space<vmem>>, vector<1x32xf32>
    %40 = vector.broadcast %39 : vector<1x32xf32> to vector<64x32xf32>
    %41 = arith.addf %38, %40 : vector<64x32xf32>
    %42 = arith.truncf %41 : vector<64x32xf32> to vector<64x32xbf16>
    %c0_20 = arith.constant 0 : index
    %c0_21 = arith.constant 0 : index
    %43 = vector.load %arg8[%c0_20, %c0_21] : memref<64x32xbf16, #tpu.memory_space<vmem>>, vector<64x32xbf16>
    tpu.vector_store %arg8[%c0_20, %c0_21], %42 {strides = array<i32>} : memref<64x32xbf16, #tpu.memory_space<vmem>>, vector<64x32xbf16>,
    return
  }
  func.func @transform_0(%arg0: i32) -> (i32, i32) {
    %c0_i32 = arith.constant 0 : i32
    %c0_i32_0 = arith.constant 0 : i32
    return %arg0, %c0_i32 : i32, i32
  }
  func.func @transform_1(%arg0: i32) -> (i32, i32) {
    %c0_i32 = arith.constant 0 : i32
    %c0_i32_0 = arith.constant 0 : i32
    %c0_i32_1 = arith.constant 0 : i32
    return %c0_i32, %c0_i32_0 : i32, i32
  }
  func.func @transform_2(%arg0: i32) -> (i32, i32) {
    %c0_i32 = arith.constant 0 : i32
    %c0_i32_0 = arith.constant 0 : i32
    %c0_i32_1 = arith.constant 0 : i32
    return %c0_i32, %c0_i32_0 : i32, i32
  }
  func.func @transform_3(%arg0: i32) -> (i32, i32) {
    %c0_i32 = arith.constant 0 : i32
    %c0_i32_0 = arith.constant 0 : i32
    %c0_i32_1 = arith.constant 0 : i32
    return %c0_i32, %c0_i32_0 : i32, i32
  }
  func.func @transform_4(%arg0: i32) -> (i32, i32) {
    %c0_i32 = arith.constant 0 : i32
    %c0_i32_0 = arith.constant 0 : i32
    %c0_i32_1 = arith.constant 0 : i32
    return %c0_i32, %c0_i32_0 : i32, i32
  }
  func.func @transform_5(%arg0: i32) -> (i32, i32) {
    %c0_i32 = arith.constant 0 : i32
    %c0_i32_0 = arith.constant 0 : i32
    %c0_i32_1 = arith.constant 0 : i32
    return %c0_i32, %c0_i32_0 : i32, i32
  }
  func.func @transform_6(%arg0: i32) -> (i32, i32) {
    %c0_i32 = arith.constant 0 : i32
    %c0_i32_0 = arith.constant 0 : i32
    %c0_i32_1 = arith.constant 0 : i32
    return %c0_i32, %c0_i32_0 : i32, i32
  }
  func.func @transform_7(%arg0: i32) -> (i32, i32) {
    %c0_i32 = arith.constant 0 : i32
    %c0_i32_0 = arith.constant 0 : i32
    return %arg0, %c0_i32 : i32, i32
  }
}

module attributes {stable_mosaic.version = 11 : i64} {
  func.func @_linear_kernel(%arg0: i32, %arg1: memref<64x32xbf16, #tpu.memory_space<vmem>>, %arg2: memref<32x128xbf16, #tpu.memory_space<vmem>>, %arg3: memref<1x128xf32, #tpu.memory_space<vmem>>, %arg4: memref<64x128xf32, #tpu.memory_space<vmem>>) attributes {dimension_semantics = [#tpu.dimension_semantics<parallel>], iteration_bounds = array<i64: 1>, scalar_prefetch = 0 : i64, scratch_operands = 0 : i64, tpu.core_type = #tpu.core_type<tc>, window_params = [{transform_indices = @transform_0, window_bounds = array<i64: 64, 32>}, {pipeline_mode = #tpu.pipeline_mode<synchronous>, transform_indices = @transform_1, window_bounds = array<i64: 32, 128>}, {pipeline_mode = #tpu.pipeline_mode<synchronous>, transform_indices = @transform_2, window_bounds = array<i64: 1, 128>}, {transform_indices = @transform_3, window_bounds = array<i64: 64, 128>}]} {
    %c0 = arith.constant 0 : index
    %c0_0 = arith.constant 0 : index
    %0 = vector.load %arg1[%c0, %c0_0] : memref<64x32xbf16, #tpu.memory_space<vmem>>, vector<64x32xbf16>
    %c0_1 = arith.constant 0 : index
    %c0_2 = arith.constant 0 : index
    %1 = vector.load %arg2[%c0_1, %c0_2] : memref<32x128xbf16, #tpu.memory_space<vmem>>, vector<32x128xbf16>
    %cst = arith.constant dense<0.000000e+00> : vector<64x128xf32>
    %2 = tpu.matmul %0, %1, %cst {dimension_numbers = #tpu.dot_dimension_numbers<[1], [0], [0], [1], [0, 0, 1, 1], [], []>} : vector<64x32xbf16>, vector<32x128xbf16>, vector<64x128xf32> -> vector<64x128xf32>
    %c0_3 = arith.constant 0 : index
    %c0_4 = arith.constant 0 : index
    %3 = vector.load %arg3[%c0_3, %c0_4] : memref<1x128xf32, #tpu.memory_space<vmem>>, vector<1x128xf32>
    %4 = vector.broadcast %3 : vector<1x128xf32> to vector<64x128xf32>
    %5 = arith.addf %2, %4 : vector<64x128xf32>
    %c0_5 = arith.constant 0 : index
    %c0_6 = arith.constant 0 : index
    %6 = vector.load %arg4[%c0_5, %c0_6] : memref<64x128xf32, #tpu.memory_space<vmem>>, vector<64x128xf32>
    tpu.vector_store %arg4[%c0_5, %c0_6], %5 {strides = array<i32>} : memref<64x128xf32, #tpu.memory_space<vmem>>, vector<64x128xf32>,
    return
  }
  func.func @transform_0(%arg0: i32) -> (i32, i32) {
    %c0_i32 = arith.constant 0 : i32
    %c0_i32_0 = arith.constant 0 : i32
    return %arg0, %c0_i32 : i32, i32
  }
  func.func @transform_1(%arg0: i32) -> (i32, i32) {
    %c0_i32 = arith.constant 0 : i32
    %c0_i32_0 = arith.constant 0 : i32
    %c0_i32_1 = arith.constant 0 : i32
    return %c0_i32, %c0_i32_0 : i32, i32
  }
  func.func @transform_2(%arg0: i32) -> (i32, i32) {
    %c0_i32 = arith.constant 0 : i32
    %c0_i32_0 = arith.constant 0 : i32
    %c0_i32_1 = arith.constant 0 : i32
    return %c0_i32, %c0_i32_0 : i32, i32
  }
  func.func @transform_3(%arg0: i32) -> (i32, i32) {
    %c0_i32 = arith.constant 0 : i32
    %c0_i32_0 = arith.constant 0 : i32
    return %arg0, %c0_i32 : i32, i32
  }
}

</mosaic_0001>

<llo_original>
// kernel: tile.8
$region0: #{tile.8}
  #allocation0 [shape = 's32[1]{0}', space=sflag, size = 0x4, scoped, tag = 'scoped memory for tile.8']
  %s0 = inlined_call_operand.vmem [shape: f32[32], index: 0, kind: input, shape index: {}]
  %s1 = inlined_call_operand.vmem [shape: f32[4,32], index: 1, kind: output, shape index: {}]
  // Predicated region
  $region2: #{tile.8} parent=0 // pred_check
    _
  $region3: #{tile.8} parent=0 // pred_check_branch
    %3 = sbr.rel (0) target = $region5
  $region4: #{tile.8} parent=0 // pred_region
    _
  $region5: #{tile.8} parent=0 // pred_fallthru
    _
  %v4 = vld [vmem:[%s0] ss:$0 sm:$0xff]
  %5 = vst [vmem:[%s1] sm:$0xf] %v4

// kernel: tile.9
$region0: #{tile.9}
  %s0 = inlined_call_operand.vmem [shape: f32[4,32], index: 0, kind: input, shape index: {}]
  %s1 = inlined_call_operand.vmem [shape: f32[1,128], index: 1, kind: output, shape index: {}]
  $region1: #{tile.9} parent=0
    #allocation0 [shape = 'u8[4096]{0}', space=vmem, size = 0x1000, scoped, tag = 'scoped mem for output reshape']
    #allocation1 [shape = 'u8[4096]{0}', space=vmem, size = 0x1000, scoped, tag = 'scoped mem for input reshape']
    %s3 = sshllo.u32 0, 4
    %v4 = vld [vmem:[%s0] sm:%s3]
    %5 = vst [vmem:[#allocation1] sm:%s3] %v4
    %v6 = vld [vmem:[#allocation1] sm:$0x1]
    %vm7 = vcmask 261120
    %8 = vst.msk [vmem:[#allocation0] sm:$0x1] %vm7, %v6
    %s9 = scalar_lea.vmem [#allocation1], 3
    %v10 = vld [vmem:[%s9] sm:$0x1]
    %11 = vrot.lane.b32.xlu0 %v10, 96
    %v12 = vpop.permute.xlu0 %11
    %vm13 = vcmask 1048320
    %14 = vst.msk [vmem:[#allocation0] sm:$0x1] %vm13, %v12
    %s15 = scalar_lea.vmem [#allocation1], 2
    %v16 = vld [vmem:[%s15] sm:$0x1]
    %17 = vrot.lane.b32.xlu0 %v16, 64
    %v18 = vpop.permute.xlu0 %17
    %vm19 = vcmask 785920
    %20 = vst.msk [vmem:[#allocation0] sm:$0x1] %vm19, %v18
    %s21 = scalar_lea.vmem [#allocation1], 1
    %v22 = vld [vmem:[%s21] sm:$0x1]
    %23 = vrot.lane.b32.xlu0 %v22, 32
    %v24 = vpop.permute.xlu0 %23
    %vm25 = vcmask 523520
    %26 = vst.msk [vmem:[#allocation0] sm:$0x1] %vm25, %v24
    %s28 = sshllo.u32 0, 1
    %v30 = vld [vmem:[#allocation0] sm:%s28]
    %s31 = sshllo.u32 0, 1
    %32 = vst [vmem:[%s1] sm:%s31] %v30

// kernel: gcn_shift_transformer.20
$region0: #{gcn_shift_transformer.20}
  #allocation0 [shape = 'u32[]', space=smem, size = 0x4, offset = 0x4, fixed_abs, tag = 'smem constant byte address 0x4 - core index']
  #allocation1 [shape = 'u32[144,128]{1,0:T(1,128)}', space=vmem, size = 0x12000, scoped, tag = 'internal scratch']
  %s0 = inlined_call_operand.vmem [shape: bf16[32,4], index: 0, kind: input, shape index: {}]
  %s1 = inlined_call_operand.vmem [shape: bf16[4,128], index: 1, kind: input, shape index: {}]
  %s2 = inlined_call_operand.vmem [shape: f32[1,128], index: 2, kind: input, shape index: {}]
  %s3 = inlined_call_operand.vmem [shape: bf16[32,128], index: 3, kind: output, shape index: {}]
  %s4 = sld [smem:[#allocation0]]
  $region22: #{gcn_shift_transformer.20} parent=0
    _
  %s6 = ssub.s32 1, %s4
  %s7 = scalar_select 0, %s6, %s4
  // Predicated region
  $region2: #{gcn_shift_transformer.20} parent=0 // pred_check
    _
  $region3: #{gcn_shift_transformer.20} parent=0 // pred_check_branch
    %9 = sbr.rel (0) target = $region5
  $region4: #{gcn_shift_transformer.20} parent=0 // pred_region
    _
  $region5: #{gcn_shift_transformer.20} parent=0 // pred_fallthru
    _
  // Predicated region
  $region6: #{gcn_shift_transformer.20} parent=0 // pred_check
    _
  $region7: #{gcn_shift_transformer.20} parent=0 // pred_check_branch
    %11 = sbr.rel (0) target = $region9
  $region8: #{gcn_shift_transformer.20} parent=0 // pred_region
    _
  $region9: #{gcn_shift_transformer.20} parent=0 // pred_fallthru
    _
  // Predicated region
  $region10: #{gcn_shift_transformer.20} parent=0 // pred_check
    _
  $region11: #{gcn_shift_transformer.20} parent=0 // pred_check_branch
    %13 = sbr.rel (0) target = $region13
  $region12: #{gcn_shift_transformer.20} parent=0 // pred_region
    _
  $region13: #{gcn_shift_transformer.20} parent=0 // pred_fallthru
    _
  %v15 = vld [vmem:[%s0] sm:$0xf]
  %v16 = vld [vmem:[%s0 + $0x4] sm:$0xf]
  %v17 = vld [vmem:[%s0 + $0x8] sm:$0xf]
  %v18 = vld [vmem:[%s0 + $0xc] sm:$0xf]
  %v19 = vld [vmem:[%s1] sm:$0x3]
  %v20 = vld [vmem:[%s2] sm:$0x1]
  %v22 = vlaneseq
  %v23 = vshrl.u32 %v22, 7
  %v24 = vsub.s32 0, %v23
  %v25 = vrot.slane %v20, %v24
  %v31 = vunpack.c.l.b16 %v15
  %v32 = vunpack.c.l.b16 %v16
  %v33 = vunpack.c.l.b16 %v17
  %v34 = vunpack.c.l.b16 %v18
  %v35 = vpack.c.b16 %v32, %v31
  %v36 = vpack.c.b16 %v34, %v33
  %vm37 = vcmask 31744
  %v39 = vsel %vm37, %v35, 0
  %v42 = vsel %vm37, %v36, 0
  %vm44 = vcmask 1041408
  %v46 = vsel %vm44, %v19, 0
  %48 = vmatprep.subr.bf16.mxu0 0
  %49 = vmatpush1.bf16.msra.mxu0 %v46
  %50 = vmatprep.subr.bf16.mxu0 0
  %51 = vmatpush1.bf16.msra.mxu0 0
  %52 = vmatprep.subr.bf16.mxu0 0
  %53 = vmatpush1.bf16.msra.mxu0 0
  %54 = vmatprep.subr.bf16.mxu0 0
  %55 = vmatpush1.bf16.msra.mxu0 0
  %56 = vmatprep.subr.bf16.mxu0 0
  %57 = vmatpush1.bf16.msra.mxu0 0
  %58 = vmatprep.subr.bf16.mxu0 0
  %59 = vmatpush1.bf16.msra.mxu0 0
  %60 = vmatprep.subr.bf16.mxu0 0
  %61 = vmatpush1.bf16.msra.mxu0 0
  %62 = vmatprep.subr.bf16.mxu0 0
  %63 = vmatpush1.bf16.msra.mxu0 0
  %64 = vmatprep.subr.bf16.mxu0 0
  %65 = vmatpush1.bf16.msra.mxu0 0
  %66 = vmatprep.subr.bf16.mxu0 0
  %67 = vmatpush1.bf16.msra.mxu0 0
  %68 = vmatprep.subr.bf16.mxu0 0
  %69 = vmatpush1.bf16.msra.mxu0 0
  %70 = vmatprep.subr.bf16.mxu0 0
  %71 = vmatpush1.bf16.msra.mxu0 0
  %72 = vmatprep.subr.bf16.mxu0 0
  %73 = vmatpush1.bf16.msra.mxu0 0
  %74 = vmatprep.subr.bf16.mxu0 0
  %75 = vmatpush1.bf16.msra.mxu0 0
  %76 = vmatprep.subr.bf16.mxu0 0
  %77 = vmatpush1.bf16.msra.mxu0 0
  %78 = vmatprep.subr.bf16.mxu0 0
  %79 = vmatpush1.bf16.msra.mxu0 0
  %80 = vmatprep.mubr.bf16.mxu0 0
  %81 = vmatmul.mubr.bf16.gmra.mrb[0].mxu0 %v39
  %v82 = vpop.f32.mrb[0].mxu0
  %v83 = vadd.f32 %v25, %v82
  %v84 = vpop.f32.mrb[0].mxu0
  %v85 = vpop.f32.mrb[0].mxu0
  %v86 = vadd.f32 %v25, %v85
  %v87 = vpop.f32.mrb[0].mxu0
  %88 = vmatprep.mubr.bf16.mxu0 0
  %89 = vmatmul.mubr.bf16.gmra.mrb[0].mxu0 %v42
  %v90 = vpop.f32.mrb[0].mxu0
  %v91 = vadd.f32 %v25, %v90
  %v92 = vpop.f32.mrb[0].mxu0
  %v93 = vpop.f32.mrb[0].mxu0
  %v94 = vadd.f32 %v25, %v93
  %v95 = vpop.f32.mrb[0].mxu0
  %96 = vdwg.mxu0
  %v97 = vpack.c.bf16 %v86, %v83
  %v98 = vpack.c.bf16 %v94, %v91
  %v101 = vunpack.c.l.b16 %v97
  %v102 = vunpack.c.h.b16 %v97
  %v103 = vunpack.c.l.b16 %v98
  %v104 = vunpack.c.h.b16 %v98
  %v105 = vpack.c.b16 %v101, %v101
  %v106 = vpack.c.b16 %v102, %v102
  %v107 = vpack.c.b16 %v103, %v103
  %v108 = vpack.c.b16 %v104, %v104
  %113 = vst [vmem:[%s3] sm:$0xf] %v105
  %114 = vst [vmem:[%s3 + $0x4] sm:$0xf] %v106
  %115 = vst [vmem:[%s3 + $0x8] sm:$0xf] %v107
  %116 = vst [vmem:[%s3 + $0xc] sm:$0xf] %v108
  // Predicated region
  $region14: #{gcn_shift_transformer.20} parent=0 // pred_check
    _
  $region15: #{gcn_shift_transformer.20} parent=0 // pred_check_branch
    %118 = sbr.rel (0) target = $region17
  $region16: #{gcn_shift_transformer.20} parent=0 // pred_region
    _
  $region17: #{gcn_shift_transformer.20} parent=0 // pred_fallthru
    _
  // Predicated region
  $region18: #{gcn_shift_transformer.20} parent=0 // pred_check
    _
  $region19: #{gcn_shift_transformer.20} parent=0 // pred_check_branch
    %120 = sbr.rel (0) target = $region21
  $region20: #{gcn_shift_transformer.20} parent=0 // pred_region
    _
  $region21: #{gcn_shift_transformer.20} parent=0 // pred_fallthru
    _

// kernel: gcn_shift_transformer.27
$region0: #{gcn_shift_transformer.27}
  #allocation0 [shape = 'u32[]', space=smem, size = 0x4, offset = 0x4, fixed_abs, tag = 'smem constant byte address 0x4 - core index']
  #allocation1 [shape = 'u32[144,128]{1,0:T(1,128)}', space=vmem, size = 0x12000, scoped, tag = 'internal scratch']
  %s0 = inlined_call_operand.vmem [shape: bf16[64,32], index: 0, kind: input, shape index: {}]
  %s1 = inlined_call_operand.vmem [shape: bf16[32,96], index: 1, kind: input, shape index: {}]
  %s2 = inlined_call_operand.vmem [shape: f32[1,96], index: 2, kind: input, shape index: {}]
  %s3 = inlined_call_operand.vmem [shape: bf16[64,96], index: 3, kind: output, shape index: {}]
  %s4 = sld [smem:[#allocation0]]
  $region22: #{gcn_shift_transformer.27} parent=0
    _
  %s6 = ssub.s32 1, %s4
  %s7 = scalar_select 0, %s6, %s4
  // Predicated region
  $region2: #{gcn_shift_transformer.27} parent=0 // pred_check
    _
  $region3: #{gcn_shift_transformer.27} parent=0 // pred_check_branch
    %9 = sbr.rel (0) target = $region5
  $region4: #{gcn_shift_transformer.27} parent=0 // pred_region
    _
  $region5: #{gcn_shift_transformer.27} parent=0 // pred_fallthru
    _
  // Predicated region
  $region6: #{gcn_shift_transformer.27} parent=0 // pred_check
    _
  $region7: #{gcn_shift_transformer.27} parent=0 // pred_check_branch
    %11 = sbr.rel (0) target = $region9
  $region8: #{gcn_shift_transformer.27} parent=0 // pred_region
    _
  $region9: #{gcn_shift_transformer.27} parent=0 // pred_fallthru
    _
  // Predicated region
  $region10: #{gcn_shift_transformer.27} parent=0 // pred_check
    _
  $region11: #{gcn_shift_transformer.27} parent=0 // pred_check_branch
    %13 = sbr.rel (0) target = $region13
  $region12: #{gcn_shift_transformer.27} parent=0 // pred_region
    _
  $region13: #{gcn_shift_transformer.27} parent=0 // pred_fallthru
    _
  %v15 = vld [vmem:[%s0] sm:$0xf]
  %v16 = vld [vmem:[%s0 + $0x4] sm:$0xf]
  %v17 = vld [vmem:[%s0 + $0x8] sm:$0xf]
  %v18 = vld [vmem:[%s0 + $0xc] sm:$0xf]
  %v19 = vld [vmem:[%s0 + $0x10] sm:$0xf]
  %v20 = vld [vmem:[%s0 + $0x14] sm:$0xf]
  %v21 = vld [vmem:[%s0 + $0x18] sm:$0xf]
  %v22 = vld [vmem:[%s0 + $0x1c] sm:$0xf]
  %v23 = vld [vmem:[%s1] sm:$0xf]
  %v24 = vld [vmem:[%s1 + $0x4] sm:$0xf]
  %v25 = vld [vmem:[%s1 + $0x8] sm:$0xf]
  %v26 = vld [vmem:[%s1 + $0xc] sm:$0xf]
  %v27 = vld [vmem:[%s2] sm:$0x1]
  %v29 = vlaneseq
  %v30 = vshrl.u32 %v29, 7
  %v31 = vsub.s32 0, %v30
  %v32 = vrot.slane %v27, %v31
  %v42 = vunpack.c.l.b16 %v15
  %v43 = vunpack.c.l.b16 %v16
  %v44 = vunpack.c.l.b16 %v17
  %v45 = vunpack.c.l.b16 %v18
  %v46 = vunpack.c.l.b16 %v19
  %v47 = vunpack.c.l.b16 %v20
  %v48 = vunpack.c.l.b16 %v21
  %v49 = vunpack.c.l.b16 %v22
  %v50 = vpack.c.b16 %v43, %v42
  %v51 = vpack.c.b16 %v45, %v44
  %v52 = vpack.c.b16 %v47, %v46
  %v53 = vpack.c.b16 %v49, %v48
  %v58 = vunpack.c.l.b16 %v23
  %v59 = vunpack.c.l.b16 %v24
  %v60 = vunpack.c.l.b16 %v25
  %v61 = vunpack.c.l.b16 %v26
  %v62 = vpack.c.b16 %v59, %v58
  %v63 = vpack.c.b16 %v61, %v60
  %vm66 = vcmask 261120
  %v68 = vsel %vm66, %v50, 0
  %v71 = vsel %vm66, %v51, 0
  %v74 = vsel %vm66, %v52, 0
  %v77 = vsel %vm66, %v53, 0
  %79 = vmatprep.subr.bf16.mxu0 0
  %80 = vmatpush1.bf16.msra.mxu0 %v62
  %81 = vmatprep.subr.bf16.mxu0 0
  %82 = vmatpush1.bf16.msra.mxu0 %v63
  %83 = vmatprep.subr.bf16.mxu0 0
  %84 = vmatpush1.bf16.msra.mxu0 0
  %85 = vmatprep.subr.bf16.mxu0 0
  %86 = vmatpush1.bf16.msra.mxu0 0
  %87 = vmatprep.subr.bf16.mxu0 0
  %88 = vmatpush1.bf16.msra.mxu0 0
  %89 = vmatprep.subr.bf16.mxu0 0
  %90 = vmatpush1.bf16.msra.mxu0 0
  %91 = vmatprep.subr.bf16.mxu0 0
  %92 = vmatpush1.bf16.msra.mxu0 0
  %93 = vmatprep.subr.bf16.mxu0 0
  %94 = vmatpush1.bf16.msra.mxu0 0
  %95 = vmatprep.subr.bf16.mxu0 0
  %96 = vmatpush1.bf16.msra.mxu0 0
  %97 = vmatprep.subr.bf16.mxu0 0
  %98 = vmatpush1.bf16.msra.mxu0 0
  %99 = vmatprep.subr.bf16.mxu0 0
  %100 = vmatpush1.bf16.msra.mxu0 0
  %101 = vmatprep.subr.bf16.mxu0 0
  %102 = vmatpush1.bf16.msra.mxu0 0
  %103 = vmatprep.subr.bf16.mxu0 0
  %104 = vmatpush1.bf16.msra.mxu0 0
  %105 = vmatprep.subr.bf16.mxu0 0
  %106 = vmatpush1.bf16.msra.mxu0 0
  %107 = vmatprep.subr.bf16.mxu0 0
  %108 = vmatpush1.bf16.msra.mxu0 0
  %109 = vmatprep.subr.bf16.mxu0 0
  %110 = vmatpush1.bf16.msra.mxu0 0
  %111 = vmatprep.mubr.bf16.mxu0 0
  %112 = vmatmul.mubr.bf16.gmra.mrb[0].mxu0 %v68
  %v113 = vpop.f32.mrb[0].mxu0
  %v114 = vadd.f32 %v32, %v113
  %v115 = vpop.f32.mrb[0].mxu0
  %v116 = vpop.f32.mrb[0].mxu0
  %v117 = vadd.f32 %v32, %v116
  %v118 = vpop.f32.mrb[0].mxu0
  %119 = vmatprep.mubr.bf16.mxu0 0
  %120 = vmatmul.mubr.bf16.gmra.mrb[0].mxu0 %v71
  %v121 = vpop.f32.mrb[0].mxu0
  %v122 = vadd.f32 %v32, %v121
  %v123 = vpop.f32.mrb[0].mxu0
  %v124 = vpop.f32.mrb[0].mxu0
  %v125 = vadd.f32 %v32, %v124
  %v126 = vpop.f32.mrb[0].mxu0
  %127 = vmatprep.mubr.bf16.mxu0 0
  %128 = vmatmul.mubr.bf16.gmra.mrb[0].mxu0 %v74
  %v129 = vpop.f32.mrb[0].mxu0
  %v130 = vadd.f32 %v32, %v129
  %v131 = vpop.f32.mrb[0].mxu0
  %v132 = vpop.f32.mrb[0].mxu0
  %v133 = vadd.f32 %v32, %v132
  %v134 = vpop.f32.mrb[0].mxu0
  %135 = vmatprep.mubr.bf16.mxu0 0
  %136 = vmatmul.mubr.bf16.gmra.mrb[0].mxu0 %v77
  %v137 = vpop.f32.mrb[0].mxu0
  %v138 = vadd.f32 %v32, %v137
  %v139 = vpop.f32.mrb[0].mxu0
  %v140 = vpop.f32.mrb[0].mxu0
  %v141 = vadd.f32 %v32, %v140
  %v142 = vpop.f32.mrb[0].mxu0
  %143 = vdwg.mxu0
  %v144 = vpack.c.bf16 %v117, %v114
  %v145 = vpack.c.bf16 %v125, %v122
  %v146 = vpack.c.bf16 %v133, %v130
  %v147 = vpack.c.bf16 %v141, %v138
  %v152 = vunpack.c.l.b16 %v144
  %v153 = vunpack.c.h.b16 %v144
  %v154 = vunpack.c.l.b16 %v145
  %v155 = vunpack.c.h.b16 %v145
  %v156 = vunpack.c.l.b16 %v146
  %v157 = vunpack.c.h.b16 %v146
  %v158 = vunpack.c.l.b16 %v147
  %v159 = vunpack.c.h.b16 %v147
  %v160 = vpack.c.b16 %v152, %v152
  %v161 = vpack.c.b16 %v153, %v153
  %v162 = vpack.c.b16 %v154, %v154
  %v163 = vpack.c.b16 %v155, %v155
  %v164 = vpack.c.b16 %v156, %v156
  %v165 = vpack.c.b16 %v157, %v157
  %v166 = vpack.c.b16 %v158, %v158
  %v167 = vpack.c.b16 %v159, %v159
  %vm176 = vcmask 781312
  %177 = vst.msk [vmem:[%s3] sm:$0xf] %vm176, %v160
  %178 = vst.msk [vmem:[%s3 + $0x4] sm:$0xf] %vm176, %v161
  %179 = vst.msk [vmem:[%s3 + $0x8] sm:$0xf] %vm176, %v162
  %180 = vst.msk [vmem:[%s3 + $0xc] sm:$0xf] %vm176, %v163
  %181 = vst.msk [vmem:[%s3 + $0x10] sm:$0xf] %vm176, %v164
  %182 = vst.msk [vmem:[%s3 + $0x14] sm:$0xf] %vm176, %v165
  %183 = vst.msk [vmem:[%s3 + $0x18] sm:$0xf] %vm176, %v166
  %184 = vst.msk [vmem:[%s3 + $0x1c] sm:$0xf] %vm176, %v167
  // Predicated region
  $region14: #{gcn_shift_transformer.27} parent=0 // pred_check
    _
  $region15: #{gcn_shift_transformer.27} parent=0 // pred_check_branch
    %186 = sbr.rel (0) target = $region17
  $region16: #{gcn_shift_transformer.27} parent=0 // pred_region
    _
  $region17: #{gcn_shift_transformer.27} parent=0 // pred_fallthru
    _
  // Predicated region
  $region18: #{gcn_shift_transformer.27} parent=0 // pred_check
    _
  $region19: #{gcn_shift_transformer.27} parent=0 // pred_check_branch
    %188 = sbr.rel (0) target = $region21
  $region20: #{gcn_shift_transformer.27} parent=0 // pred_region
    _
  $region21: #{gcn_shift_transformer.27} parent=0 // pred_fallthru
    _

// kernel: gcn_shift_transformer.29
$region0: #{gcn_shift_transformer.29}
  #allocation0 [shape = 'u32[]', space=smem, size = 0x4, offset = 0x4, fixed_abs, tag = 'smem constant byte address 0x4 - core index']
  #allocation1 [shape = 'u32[144,128]{1,0:T(1,128)}', space=vmem, size = 0x12000, scoped, tag = 'internal scratch']
  %s0 = inlined_call_operand.vmem [shape: bf16[64,32], index: 0, kind: input, shape index: {}]
  %s1 = inlined_call_operand.vmem [shape: bf16[32,32], index: 1, kind: input, shape index: {}]
  %s2 = inlined_call_operand.vmem [shape: f32[1,32], index: 2, kind: input, shape index: {}]
  %s3 = inlined_call_operand.vmem [shape: bf16[64,32], index: 3, kind: output, shape index: {}]
  %s4 = sld [smem:[#allocation0]]
  $region22: #{gcn_shift_transformer.29} parent=0
    _
  %s6 = ssub.s32 1, %s4
  %s7 = scalar_select 0, %s6, %s4
  // Predicated region
  $region2: #{gcn_shift_transformer.29} parent=0 // pred_check
    _
  $region3: #{gcn_shift_transformer.29} parent=0 // pred_check_branch
    %9 = sbr.rel (0) target = $region5
  $region4: #{gcn_shift_transformer.29} parent=0 // pred_region
    _
  $region5: #{gcn_shift_transformer.29} parent=0 // pred_fallthru
    _
  // Predicated region
  $region6: #{gcn_shift_transformer.29} parent=0 // pred_check
    _
  $region7: #{gcn_shift_transformer.29} parent=0 // pred_check_branch
    %11 = sbr.rel (0) target = $region9
  $region8: #{gcn_shift_transformer.29} parent=0 // pred_region
    _
  $region9: #{gcn_shift_transformer.29} parent=0 // pred_fallthru
    _
  // Predicated region
  $region10: #{gcn_shift_transformer.29} parent=0 // pred_check
    _
  $region11: #{gcn_shift_transformer.29} parent=0 // pred_check_branch
    %13 = sbr.rel (0) target = $region13
  $region12: #{gcn_shift_transformer.29} parent=0 // pred_region
    _
  $region13: #{gcn_shift_transformer.29} parent=0 // pred_fallthru
    _
  %v15 = vld [vmem:[%s0] sm:$0xf]
  %v16 = vld [vmem:[%s0 + $0x4] sm:$0xf]
  %v17 = vld [vmem:[%s0 + $0x8] sm:$0xf]
  %v18 = vld [vmem:[%s0 + $0xc] sm:$0xf]
  %v19 = vld [vmem:[%s0 + $0x10] sm:$0xf]
  %v20 = vld [vmem:[%s0 + $0x14] sm:$0xf]
  %v21 = vld [vmem:[%s0 + $0x18] sm:$0xf]
  %v22 = vld [vmem:[%s0 + $0x1c] sm:$0xf]
  %v23 = vld [vmem:[%s1] sm:$0xf]
  %v24 = vld [vmem:[%s1 + $0x4] sm:$0xf]
  %v25 = vld [vmem:[%s1 + $0x8] sm:$0xf]
  %v26 = vld [vmem:[%s1 + $0xc] sm:$0xf]
  %v27 = vld [vmem:[%s2] sm:$0x1]
  %v29 = vlaneseq
  %v30 = vshrl.u32 %v29, 7
  %v31 = vsub.s32 0, %v30
  %v32 = vrot.slane %v27, %v31
  %v42 = vunpack.c.l.b16 %v15
  %v43 = vunpack.c.l.b16 %v16
  %v44 = vunpack.c.l.b16 %v17
  %v45 = vunpack.c.l.b16 %v18
  %v46 = vunpack.c.l.b16 %v19
  %v47 = vunpack.c.l.b16 %v20
  %v48 = vunpack.c.l.b16 %v21
  %v49 = vunpack.c.l.b16 %v22
  %v50 = vpack.c.b16 %v43, %v42
  %v51 = vpack.c.b16 %v45, %v44
  %v52 = vpack.c.b16 %v47, %v46
  %v53 = vpack.c.b16 %v49, %v48
  %v58 = vunpack.c.l.b16 %v23
  %v59 = vunpack.c.l.b16 %v24
  %v60 = vunpack.c.l.b16 %v25
  %v61 = vunpack.c.l.b16 %v26
  %v62 = vpack.c.b16 %v59, %v58
  %v63 = vpack.c.b16 %v61, %v60
  %vm66 = vcmask 261120
  %v68 = vsel %vm66, %v50, 0
  %v71 = vsel %vm66, %v51, 0
  %v74 = vsel %vm66, %v52, 0
  %v77 = vsel %vm66, %v53, 0
  %79 = vmatprep.subr.bf16.mxu0 0
  %80 = vmatpush1.bf16.msra.mxu0 %v62
  %81 = vmatprep.subr.bf16.mxu0 0
  %82 = vmatpush1.bf16.msra.mxu0 %v63
  %83 = vmatprep.subr.bf16.mxu0 0
  %84 = vmatpush1.bf16.msra.mxu0 0
  %85 = vmatprep.subr.bf16.mxu0 0
  %86 = vmatpush1.bf16.msra.mxu0 0
  %87 = vmatprep.subr.bf16.mxu0 0
  %88 = vmatpush1.bf16.msra.mxu0 0
  %89 = vmatprep.subr.bf16.mxu0 0
  %90 = vmatpush1.bf16.msra.mxu0 0
  %91 = vmatprep.subr.bf16.mxu0 0
  %92 = vmatpush1.bf16.msra.mxu0 0
  %93 = vmatprep.subr.bf16.mxu0 0
  %94 = vmatpush1.bf16.msra.mxu0 0
  %95 = vmatprep.subr.bf16.mxu0 0
  %96 = vmatpush1.bf16.msra.mxu0 0
  %97 = vmatprep.subr.bf16.mxu0 0
  %98 = vmatpush1.bf16.msra.mxu0 0
  %99 = vmatprep.subr.bf16.mxu0 0
  %100 = vmatpush1.bf16.msra.mxu0 0
  %101 = vmatprep.subr.bf16.mxu0 0
  %102 = vmatpush1.bf16.msra.mxu0 0
  %103 = vmatprep.subr.bf16.mxu0 0
  %104 = vmatpush1.bf16.msra.mxu0 0
  %105 = vmatprep.subr.bf16.mxu0 0
  %106 = vmatpush1.bf16.msra.mxu0 0
  %107 = vmatprep.subr.bf16.mxu0 0
  %108 = vmatpush1.bf16.msra.mxu0 0
  %109 = vmatprep.subr.bf16.mxu0 0
  %110 = vmatpush1.bf16.msra.mxu0 0
  %111 = vmatprep.mubr.bf16.mxu0 0
  %112 = vmatmul.mubr.bf16.gmra.mrb[0].mxu0 %v68
  %v113 = vpop.f32.mrb[0].mxu0
  %v114 = vadd.f32 %v32, %v113
  %v115 = vpop.f32.mrb[0].mxu0
  %v116 = vpop.f32.mrb[0].mxu0
  %v117 = vadd.f32 %v32, %v116
  %v118 = vpop.f32.mrb[0].mxu0
  %119 = vmatprep.mubr.bf16.mxu0 0
  %120 = vmatmul.mubr.bf16.gmra.mrb[0].mxu0 %v71
  %v121 = vpop.f32.mrb[0].mxu0
  %v122 = vadd.f32 %v32, %v121
  %v123 = vpop.f32.mrb[0].mxu0
  %v124 = vpop.f32.mrb[0].mxu0
  %v125 = vadd.f32 %v32, %v124
  %v126 = vpop.f32.mrb[0].mxu0
  %127 = vmatprep.mubr.bf16.mxu0 0
  %128 = vmatmul.mubr.bf16.gmra.mrb[0].mxu0 %v74
  %v129 = vpop.f32.mrb[0].mxu0
  %v130 = vadd.f32 %v32, %v129
  %v131 = vpop.f32.mrb[0].mxu0
  %v132 = vpop.f32.mrb[0].mxu0
  %v133 = vadd.f32 %v32, %v132
  %v134 = vpop.f32.mrb[0].mxu0
  %135 = vmatprep.mubr.bf16.mxu0 0
  %136 = vmatmul.mubr.bf16.gmra.mrb[0].mxu0 %v77
  %v137 = vpop.f32.mrb[0].mxu0
  %v138 = vadd.f32 %v32, %v137
  %v139 = vpop.f32.mrb[0].mxu0
  %v140 = vpop.f32.mrb[0].mxu0
  %v141 = vadd.f32 %v32, %v140
  %v142 = vpop.f32.mrb[0].mxu0
  %143 = vdwg.mxu0
  %v144 = vpack.c.bf16 %v117, %v114
  %v145 = vpack.c.bf16 %v125, %v122
  %v146 = vpack.c.bf16 %v133, %v130
  %v147 = vpack.c.bf16 %v141, %v138
  %v152 = vunpack.c.l.b16 %v144
  %v153 = vunpack.c.h.b16 %v144
  %v154 = vunpack.c.l.b16 %v145
  %v155 = vunpack.c.h.b16 %v145
  %v156 = vunpack.c.l.b16 %v146
  %v157 = vunpack.c.h.b16 %v146
  %v158 = vunpack.c.l.b16 %v147
  %v159 = vunpack.c.h.b16 %v147
  %v160 = vpack.c.b16 %v152, %v152
  %v161 = vpack.c.b16 %v153, %v153
  %v162 = vpack.c.b16 %v154, %v154
  %v163 = vpack.c.b16 %v155, %v155
  %v164 = vpack.c.b16 %v156, %v156
  %v165 = vpack.c.b16 %v157, %v157
  %v166 = vpack.c.b16 %v158, %v158
  %v167 = vpack.c.b16 %v159, %v159
  %vm176 = vcmask 257024
  %177 = vst.msk [vmem:[%s3] sm:$0xf] %vm176, %v160
  %178 = vst.msk [vmem:[%s3 + $0x4] sm:$0xf] %vm176, %v161
  %179 = vst.msk [vmem:[%s3 + $0x8] sm:$0xf] %vm176, %v162
  %180 = vst.msk [vmem:[%s3 + $0xc] sm:$0xf] %vm176, %v163
  %181 = vst.msk [vmem:[%s3 + $0x10] sm:$0xf] %vm176, %v164
  %182 = vst.msk [vmem:[%s3 + $0x14] sm:$0xf] %vm176, %v165
  %183 = vst.msk [vmem:[%s3 + $0x18] sm:$0xf] %vm176, %v166
  %184 = vst.msk [vmem:[%s3 + $0x1c] sm:$0xf] %vm176, %v167
  // Predicated region
  $region14: #{gcn_shift_transformer.29} parent=0 // pred_check
    _
  $region15: #{gcn_shift_transformer.29} parent=0 // pred_check_branch
    %186 = sbr.rel (0) target = $region17
  $region16: #{gcn_shift_transformer.29} parent=0 // pred_region
    _
  $region17: #{gcn_shift_transformer.29} parent=0 // pred_fallthru
    _
  // Predicated region
  $region18: #{gcn_shift_transformer.29} parent=0 // pred_check
    _
  $region19: #{gcn_shift_transformer.29} parent=0 // pred_check_branch
    %188 = sbr.rel (0) target = $region21
  $region20: #{gcn_shift_transformer.29} parent=0 // pred_region
    _
  $region21: #{gcn_shift_transformer.29} parent=0 // pred_fallthru
    _

// kernel: gcn_shift_transformer.28
$region0: #{gcn_shift_transformer.28}
  #allocation0 [shape = 'u32[]', space=smem, size = 0x4, offset = 0x4, fixed_abs, tag = 'smem constant byte address 0x4 - core index']
  #allocation1 [shape = 'u32[144,128]{1,0:T(1,128)}', space=vmem, size = 0x12000, scoped, tag = 'internal scratch']
  %s0 = inlined_call_operand.vmem [shape: bf16[32,8,8], index: 0, kind: input, shape index: {}]
  %s1 = inlined_call_operand.vmem [shape: bf16[32,8,8], index: 1, kind: input, shape index: {}]
  %s2 = inlined_call_operand.vmem [shape: bf16[32,8,8], index: 2, kind: input, shape index: {}]
  %s3 = inlined_call_operand.vmem [shape: bf16[8,8,32], index: 3, kind: input, shape index: {}]
  %s4 = inlined_call_operand.vmem [shape: bf16[4,8,32], index: 4, kind: input, shape index: {}]
  %s5 = inlined_call_operand.vmem [shape: f32[1,32], index: 5, kind: input, shape index: {}]
  %s6 = inlined_call_operand.vmem [shape: f32[1,32], index: 6, kind: input, shape index: {}]
  %s7 = inlined_call_operand.vmem [shape: f32[1,32], index: 7, kind: input, shape index: {}]
  %s8 = inlined_call_operand.vmem [shape: bf16[8,8,32], index: 8, kind: output, shape index: {}]
  %s9 = sld [smem:[#allocation0]]
  $region65: #{gcn_shift_transformer.28} parent=0
    _
  %s11 = ssub.s32 1, %s9
  %s12 = scalar_select 0, %s11, %s9
  loop: start=0, step=1, limit=10
  $region2: #{gcn_shift_transformer.28} parent=0 // loop_pre_header
    _
  $region3: #{gcn_shift_transformer.28} parent=0 // loop_header
    %s14 = sphi 0, %s18
    %p15 = scmp.ge.s32.totalorder %s14, 10
    %s24 = sphi 0, %s26
    %s27 = sphi 0, %s24
    %s28 = sphi 0, %s27
    %s44 = sphi 0, %s28
    %s50 = sphi 0, %s52
    %s53 = sphi 0, %s50
    %s54 = sphi 0, %s53
    %s70 = sphi 0, %s54
    %s76 = sphi 0, %s78
    %s79 = sphi 0, %s76
    %s80 = sphi 0, %s79
    %s96 = sphi 0, %s80
    %s102 = sphi 0, %s104
    %s105 = sphi 0, %s102
    %s106 = sphi 0, %s105
    %s122 = sphi 0, %s106
    %s126 = sphi 0, %s126
    %s128 = sphi 0, %s126
    %s129 = sphi 0, %s128
    %s143 = sphi 0, %s129
    %s147 = sphi 0, %s147
    %s149 = sphi 0, %s147
    %s150 = sphi 0, %s149
    %s164 = sphi 0, %s150
    %s168 = sphi 0, %s168
    %s170 = sphi 0, %s168
    %s171 = sphi 0, %s170
    %s185 = sphi 0, %s171
    %s189 = sphi 0, %s189
    %s191 = sphi 0, %s189
    %s192 = sphi 0, %s191
    %s206 = sphi 0, %s192
    %s212 = sphi 0, %s214
    %s215 = sphi 0, %s212
    %s216 = sphi 0, %s215
    %s232 = sphi 0, %s216
  $region4: #{gcn_shift_transformer.28} parent=0 // loop_header_branch
    %17 = sbr.rel (%p15) target = $region8
  $region5: #{gcn_shift_transformer.28} parent=0 // loop_body
    %s19 = ssub.s32 %s14, 1
    %s20 = ssub.s32 %s14, 2
    %s21 = sadd.s32 %s14, 1
    %s22 = ssub.s32 %s14, %s21
    %p23 = scmp.eq.s32.totalorder %s22, 0
    %s25 = sadd.s32 %s24, 1
    %s26 = scalar_select %p23, %s24, %s25
    %p29 = pneg %p23
    %p30 = scmp.eq.s32.totalorder %s14, 7
    %p31 = por %p29, %p30
    %p32 = scmp.ne.s32.totalorder %s24, %s27
    %p33 = scmp.eq.s32.totalorder %s14, 0
    %p34 = por %p32, %p33
    %p35 = scmp.ne.s32.totalorder %s24, %s27
    %p36 = scmp.eq.s32.totalorder %s19, 7
    %p37 = por %p35, %p36
    %p38 = scmp.ne.s32.totalorder %s27, %s28
    %p39 = scmp.eq.s32.totalorder %s19, 0
    %p40 = por %p38, %p39
    %p41 = scmp.ne.s32.totalorder %s27, %s28
    %p42 = scmp.eq.s32.totalorder %s20, 7
    %p43 = por %p41, %p42
    %p45 = scmp.ne.s32.totalorder %s28, %s44
    %p46 = scmp.eq.s32.totalorder %s20, 0
    %p47 = por %p45, %p46
    %s48 = ssub.s32 %s14, %s21
    %p49 = scmp.eq.s32.totalorder %s48, 0
    %s51 = sadd.s32 %s50, 1
    %s52 = scalar_select %p49, %s50, %s51
    %p55 = pneg %p49
    %p56 = scmp.eq.s32.totalorder %s14, 7
    %p57 = por %p55, %p56
    %p58 = scmp.ne.s32.totalorder %s50, %s53
    %p59 = scmp.eq.s32.totalorder %s14, 0
    %p60 = por %p58, %p59
    %p61 = scmp.ne.s32.totalorder %s50, %s53
    %p62 = scmp.eq.s32.totalorder %s19, 7
    %p63 = por %p61, %p62
    %p64 = scmp.ne.s32.totalorder %s53, %s54
    %p65 = scmp.eq.s32.totalorder %s19, 0
    %p66 = por %p64, %p65
    %p67 = scmp.ne.s32.totalorder %s53, %s54
    %p68 = scmp.eq.s32.totalorder %s20, 7
    %p69 = por %p67, %p68
    %p71 = scmp.ne.s32.totalorder %s54, %s70
    %p72 = scmp.eq.s32.totalorder %s20, 0
    %p73 = por %p71, %p72
    %s74 = ssub.s32 %s14, %s21
    %p75 = scmp.eq.s32.totalorder %s74, 0
    %s77 = sadd.s32 %s76, 1
    %s78 = scalar_select %p75, %s76, %s77
    %p81 = pneg %p75
    %p82 = scmp.eq.s32.totalorder %s14, 7
    %p83 = por %p81, %p82
    %p84 = scmp.ne.s32.totalorder %s76, %s79
    %p85 = scmp.eq.s32.totalorder %s14, 0
    %p86 = por %p84, %p85
    %p87 = scmp.ne.s32.totalorder %s76, %s79
    %p88 = scmp.eq.s32.totalorder %s19, 7
    %p89 = por %p87, %p88
    %p90 = scmp.ne.s32.totalorder %s79, %s80
    %p91 = scmp.eq.s32.totalorder %s19, 0
    %p92 = por %p90, %p91
    %p93 = scmp.ne.s32.totalorder %s79, %s80
    %p94 = scmp.eq.s32.totalorder %s20, 7
    %p95 = por %p93, %p94
    %p97 = scmp.ne.s32.totalorder %s80, %s96
    %p98 = scmp.eq.s32.totalorder %s20, 0
    %p99 = por %p97, %p98
    %s100 = ssub.s32 %s14, %s21
    %p101 = scmp.eq.s32.totalorder %s100, 0
    %s103 = sadd.s32 %s102, 1
    %s104 = scalar_select %p101, %s102, %s103
    %p107 = pneg %p101
    %p108 = scmp.eq.s32.totalorder %s14, 7
    %p109 = por %p107, %p108
    %p110 = scmp.ne.s32.totalorder %s102, %s105
    %p111 = scmp.eq.s32.totalorder %s14, 0
    %p112 = por %p110, %p111
    %p113 = scmp.ne.s32.totalorder %s102, %s105
    %p114 = scmp.eq.s32.totalorder %s19, 7
    %p115 = por %p113, %p114
    %p116 = scmp.ne.s32.totalorder %s105, %s106
    %p117 = scmp.eq.s32.totalorder %s19, 0
    %p118 = por %p116, %p117
    %p119 = scmp.ne.s32.totalorder %s105, %s106
    %p120 = scmp.eq.s32.totalorder %s20, 7
    %p121 = por %p119, %p120
    %p123 = scmp.ne.s32.totalorder %s106, %s122
    %p124 = scmp.eq.s32.totalorder %s20, 0
    %p125 = por %p123, %p124
    %s127 = sadd.s32 %s126, 1
    %p130 = scmp.eq.s32.totalorder %s14, 7
    %p131 = scmp.ne.s32.totalorder %s126, %s128
    %p132 = scmp.eq.s32.totalorder %s14, 0
    %p133 = por %p131, %p132
    %p134 = scmp.ne.s32.totalorder %s126, %s128
    %p135 = scmp.eq.s32.totalorder %s19, 7
    %p136 = por %p134, %p135
    %p137 = scmp.ne.s32.totalorder %s128, %s129
    %p138 = scmp.eq.s32.totalorder %s19, 0
    %p139 = por %p137, %p138
    %p140 = scmp.ne.s32.totalorder %s128, %s129
    %p141 = scmp.eq.s32.totalorder %s20, 7
    %p142 = por %p140, %p141
    %p144 = scmp.ne.s32.totalorder %s129, %s143
    %p145 = scmp.eq.s32.totalorder %s20, 0
    %p146 = por %p144, %p145
    %s148 = sadd.s32 %s147, 1
    %p151 = scmp.eq.s32.totalorder %s14, 7
    %p152 = scmp.ne.s32.totalorder %s147, %s149
    %p153 = scmp.eq.s32.totalorder %s14, 0
    %p154 = por %p152, %p153
    %p155 = scmp.ne.s32.totalorder %s147, %s149
    %p156 = scmp.eq.s32.totalorder %s19, 7
    %p157 = por %p155, %p156
    %p158 = scmp.ne.s32.totalorder %s149, %s150
    %p159 = scmp.eq.s32.totalorder %s19, 0
    %p160 = por %p158, %p159
    %p161 = scmp.ne.s32.totalorder %s149, %s150
    %p162 = scmp.eq.s32.totalorder %s20, 7
    %p163 = por %p161, %p162
    %p165 = scmp.ne.s32.totalorder %s150, %s164
    %p166 = scmp.eq.s32.totalorder %s20, 0
    %p167 = por %p165, %p166
    %s169 = sadd.s32 %s168, 1
    %p172 = scmp.eq.s32.totalorder %s14, 7
    %p173 = scmp.ne.s32.totalorder %s168, %s170
    %p174 = scmp.eq.s32.totalorder %s14, 0
    %p175 = por %p173, %p174
    %p176 = scmp.ne.s32.totalorder %s168, %s170
    %p177 = scmp.eq.s32.totalorder %s19, 7
    %p178 = por %p176, %p177
    %p179 = scmp.ne.s32.totalorder %s170, %s171
    %p180 = scmp.eq.s32.totalorder %s19, 0
    %p181 = por %p179, %p180
    %p182 = scmp.ne.s32.totalorder %s170, %s171
    %p183 = scmp.eq.s32.totalorder %s20, 7
    %p184 = por %p182, %p183
    %p186 = scmp.ne.s32.totalorder %s171, %s185
    %p187 = scmp.eq.s32.totalorder %s20, 0
    %p188 = por %p186, %p187
    %s190 = sadd.s32 %s189, 1
    %p193 = scmp.eq.s32.totalorder %s14, 7
    %p194 = scmp.ne.s32.totalorder %s189, %s191
    %p195 = scmp.eq.s32.totalorder %s14, 0
    %p196 = por %p194, %p195
    %p197 = scmp.ne.s32.totalorder %s189, %s191
    %p198 = scmp.eq.s32.totalorder %s19, 7
    %p199 = por %p197, %p198
    %p200 = scmp.ne.s32.totalorder %s191, %s192
    %p201 = scmp.eq.s32.totalorder %s19, 0
    %p202 = por %p200, %p201
    %p203 = scmp.ne.s32.totalorder %s191, %s192
    %p204 = scmp.eq.s32.totalorder %s20, 7
    %p205 = por %p203, %p204
    %p207 = scmp.ne.s32.totalorder %s192, %s206
    %p208 = scmp.eq.s32.totalorder %s20, 0
    %p209 = por %p207, %p208
    %s210 = ssub.s32 %s14, %s21
    %p211 = scmp.eq.s32.totalorder %s210, 0
    %s213 = sadd.s32 %s212, 1
    %s214 = scalar_select %p211, %s212, %s213
    %p217 = pneg %p211
    %p218 = scmp.eq.s32.totalorder %s14, 7
    %p219 = por %p217, %p218
    %p220 = scmp.ne.s32.totalorder %s212, %s215
    %p221 = scmp.eq.s32.totalorder %s14, 0
    %p222 = por %p220, %p221
    %p223 = scmp.ne.s32.totalorder %s212, %s215
    %p224 = scmp.eq.s32.totalorder %s19, 7
    %p225 = por %p223, %p224
    %p226 = scmp.ne.s32.totalorder %s215, %s216
    %p227 = scmp.eq.s32.totalorder %s19, 0
    %p228 = por %p226, %p227
    %p229 = scmp.ne.s32.totalorder %s215, %s216
    %p230 = scmp.eq.s32.totalorder %s20, 7
    %p231 = por %p229, %p230
    %p233 = scmp.ne.s32.totalorder %s216, %s232
    %p234 = scmp.eq.s32.totalorder %s20, 0
    %p235 = por %p233, %p234
    %p236 = scmp.le.s32.totalorder 1, %s14
    %p237 = scmp.lt.s32.totalorder %s14, 9
    %p238 = pnand %p236, %p237
    %p239 = pneg %p238
    // Predicated region
    $region9: #{gcn_shift_transformer.28} parent=5 // pred_check
      _
    $region10: #{gcn_shift_transformer.28} parent=5 // pred_check_branch
      %241 = sbr.rel (%p238) target = $region12
    $region11: #{gcn_shift_transformer.28} parent=5 // pred_region
      %s242 = ssub.s32 %s14, 1
      // Predicated region
      $region13: #{gcn_shift_transformer.28} parent=11 // pred_check
        %p243 = pneg %p139
      $region14: #{gcn_shift_transformer.28} parent=11 // pred_check_branch
        %245 = sbr.rel (%p243) target = $region16
      $region15: #{gcn_shift_transformer.28} parent=11 // pred_region
        _
      $region16: #{gcn_shift_transformer.28} parent=11 // pred_fallthru
        _
      // Predicated region
      $region17: #{gcn_shift_transformer.28} parent=11 // pred_check
        %p246 = pneg %p160
      $region18: #{gcn_shift_transformer.28} parent=11 // pred_check_branch
        %248 = sbr.rel (%p246) target = $region20
      $region19: #{gcn_shift_transformer.28} parent=11 // pred_region
        _
      $region20: #{gcn_shift_transformer.28} parent=11 // pred_fallthru
        _
      // Predicated region
      $region21: #{gcn_shift_transformer.28} parent=11 // pred_check
        %p249 = pneg %p181
      $region22: #{gcn_shift_transformer.28} parent=11 // pred_check_branch
        %251 = sbr.rel (%p249) target = $region24
      $region23: #{gcn_shift_transformer.28} parent=11 // pred_region
        _
      $region24: #{gcn_shift_transformer.28} parent=11 // pred_fallthru
        _
      // Predicated region
      $region25: #{gcn_shift_transformer.28} parent=11 // pred_check
        %p252 = pneg %p202
      $region26: #{gcn_shift_transformer.28} parent=11 // pred_check_branch
        %254 = sbr.rel (%p252) target = $region28
      $region27: #{gcn_shift_transformer.28} parent=11 // pred_region
        _
      $region28: #{gcn_shift_transformer.28} parent=11 // pred_fallthru
        _
    $region12: #{gcn_shift_transformer.28} parent=5 // pred_fallthru
      _
    %p255 = scmp.lt.s32.totalorder %s14, 8
    // Predicated region
    $region29: #{gcn_shift_transformer.28} parent=5 // pred_check
      %p256 = pneg %p255
    $region30: #{gcn_shift_transformer.28} parent=5 // pred_check_branch
      %258 = sbr.rel (%p256) target = $region32
    $region31: #{gcn_shift_transformer.28} parent=5 // pred_region
      // Predicated region
      $region33: #{gcn_shift_transformer.28} parent=31 // pred_check
        %p259 = pneg %p34
      $region34: #{gcn_shift_transformer.28} parent=31 // pred_check_branch
        %261 = sbr.rel (%p259) target = $region36
      $region35: #{gcn_shift_transformer.28} parent=31 // pred_region
        %s262 = smul.u32 4, %s14
        %p263 = scmp.lt.s32.totalorder %s262, 31
        %s264 = scalar_select %p263, %s262, 31
        %s265 = smul.addr %s264, 4
        %s266 = scalar_lea.vmem %s0, %s265
        %s267 = smul.u32 4, %s14
      $region36: #{gcn_shift_transformer.28} parent=31 // pred_fallthru
        _
      // Predicated region
      $region37: #{gcn_shift_transformer.28} parent=31 // pred_check
        %p268 = pneg %p60
      $region38: #{gcn_shift_transformer.28} parent=31 // pred_check_branch
        %270 = sbr.rel (%p268) target = $region40
      $region39: #{gcn_shift_transformer.28} parent=31 // pred_region
        %s271 = smul.u32 4, %s14
        %p272 = scmp.lt.s32.totalorder %s271, 31
        %s273 = scalar_select %p272, %s271, 31
        %s274 = smul.addr %s273, 4
        %s275 = scalar_lea.vmem %s1, %s274
        %s276 = smul.u32 4, %s14
      $region40: #{gcn_shift_transformer.28} parent=31 // pred_fallthru
        _
      // Predicated region
      $region41: #{gcn_shift_transformer.28} parent=31 // pred_check
        %p277 = pneg %p86
      $region42: #{gcn_shift_transformer.28} parent=31 // pred_check_branch
        %279 = sbr.rel (%p277) target = $region44
      $region43: #{gcn_shift_transformer.28} parent=31 // pred_region
        %s280 = smul.u32 4, %s14
        %p281 = scmp.lt.s32.totalorder %s280, 31
        %s282 = scalar_select %p281, %s280, 31
        %s283 = smul.addr %s282, 4
        %s284 = scalar_lea.vmem %s2, %s283
        %s285 = smul.u32 4, %s14
      $region44: #{gcn_shift_transformer.28} parent=31 // pred_fallthru
        _
      // Predicated region
      $region45: #{gcn_shift_transformer.28} parent=31 // pred_check
        %p286 = pneg %p112
      $region46: #{gcn_shift_transformer.28} parent=31 // pred_check_branch
        %288 = sbr.rel (%p286) target = $region48
      $region47: #{gcn_shift_transformer.28} parent=31 // pred_region
        %p289 = scmp.lt.s32.totalorder %s14, 7
        %s290 = scalar_select %p289, %s14, 7
        %s291 = smul.addr %s290, 4
        %s292 = scalar_lea.vmem %s3, %s291
      $region48: #{gcn_shift_transformer.28} parent=31 // pred_fallthru
        _
    $region32: #{gcn_shift_transformer.28} parent=5 // pred_fallthru
      _
    %p293 = scmp.le.s32.totalorder 1, %s14
    %p294 = scmp.lt.s32.totalorder %s14, 9
    %p295 = pnand %p293, %p294
    %p296 = pneg %p295
    // Predicated region
    $region49: #{gcn_shift_transformer.28} parent=5 // pred_check
      _
    $region50: #{gcn_shift_transformer.28} parent=5 // pred_check_branch
      %298 = sbr.rel (%p295) target = $region52
    $region51: #{gcn_shift_transformer.28} parent=5 // pred_region
      %s299 = ssub.s32 %s14, 1
      %s300 = smul.u32 4, %s19
      %p301 = scmp.lt.s32.totalorder %s300, 31
      %s302 = scalar_select %p301, %s300, 31
      %s303 = smul.addr %s302, 4
      %s304 = scalar_lea.vmem %s0, %s303
      %p305 = pneg %p40
      %p306 = pneg %p37
      %s307 = smul.u32 4, %s19
      %p308 = scmp.lt.s32.totalorder %s307, 31
      %s309 = scalar_select %p308, %s307, 31
      %s310 = smul.addr %s309, 4
      %s311 = scalar_lea.vmem %s1, %s310
      %p312 = pneg %p66
      %p313 = pneg %p63
      %s314 = smul.u32 4, %s19
      %p315 = scmp.lt.s32.totalorder %s314, 31
      %s316 = scalar_select %p315, %s314, 31
      %s317 = smul.addr %s316, 4
      %s318 = scalar_lea.vmem %s2, %s317
      %p319 = pneg %p92
      %p320 = pneg %p89
      %p321 = scmp.lt.s32.totalorder %s19, 7
      %s322 = scalar_select %p321, %s19, 7
      %s323 = smul.addr %s322, 4
      %s324 = scalar_lea.vmem %s3, %s323
      %p325 = pneg %p118
      %p326 = pneg %p115
      %p327 = pneg %p139
      %p328 = pneg %p136
      %p329 = pneg %p160
      %p330 = pneg %p157
      %p331 = pneg %p181
      %p332 = pneg %p178
      %p333 = pneg %p202
      %p334 = pneg %p199
      %p335 = pneg %p228
      %p336 = pneg %p225
      %p337 = scmp.lt.s32.totalorder %s19, 7
      %s338 = scalar_select %p337, %s19, 7
      %s339 = smul.addr %s338, 4
      %s340 = scalar_lea.vmem %s8, %s339
      %s341 = smul.u32 4, %s19
      %p342 = scmp.lt.s32.totalorder %s341, 31
      %s343 = scalar_select %p342, %s341, 31
      %s344 = smul.addr %s343, 4
      %s345 = scalar_lea.vmem %s0, %s344
      %s346 = smul.u32 4, %s19
      %s347 = smul.u32 4, %s19
      %p348 = scmp.lt.s32.totalorder %s347, 31
      %s349 = scalar_select %p348, %s347, 31
      %s350 = smul.addr %s349, 4
      %s351 = scalar_lea.vmem %s1, %s350
      %s352 = smul.u32 4, %s19
      %s353 = smul.u32 4, %s19
      %p354 = scmp.lt.s32.totalorder %s353, 31
      %s355 = scalar_select %p354, %s353, 31
      %s356 = smul.addr %s355, 4
      %s357 = scalar_lea.vmem %s2, %s356
      %s358 = smul.u32 4, %s19
      %p359 = scmp.lt.s32.totalorder %s19, 7
      %s360 = scalar_select %p359, %s19, 7
      %s361 = smul.addr %s360, 4
      %s362 = scalar_lea.vmem %s3, %s361
      %p363 = scmp.lt.s32.totalorder %s19, 7
      %s364 = scalar_select %p363, %s19, 7
      %s365 = smul.addr %s364, 4
      %s366 = scalar_lea.vmem %s8, %s365
      %v368 = vlaneseq
      %v369 = vshrl.u32 %v368, 7
      %v370 = vlaneseq
      %v371 = vand.u32 %v370, 127
      %vm372 = vcmp.le.s32.totalorder %v371, %v369
      %v373 = vld [vmem:[%s362] sm:$0xf]
      %v374 = vunpack.c.l.bf16 %v373
      %v375 = vld [vmem:[%s5] sm:$0x1]
      %v377 = vlaneseq
      %v378 = vshrl.u32 %v377, 7
      %v379 = vsub.s32 0, %v378
      %v380 = vrot.slane %v375, %v379
      %v382 = vadd.f32 %v374, %v380
      %v383 = vld [vmem:[%s345] sm:$0xf]
      %v384 = vld [vmem:[%s351] sm:$0xf]
      %v385 = vld [vmem:[%s357] sm:$0xf]
      %vm386 = vcmask 64512
      %v388 = vsel %vm386, %v383, 0
      %v391 = vsel %vm386, %v384, 0
      %393 = vmatprep.subr.bf16.mxu0 0
      %394 = vmatpush1.bf16.xpose.msra.mxu0 %v391
      %395 = vmatprep.subr.bf16.mxu0 0
      %396 = vmatpush1.bf16.xpose.msra.mxu0 0
      %397 = vmatprep.subr.bf16.mxu0 0
      %398 = vmatpush1.bf16.xpose.msra.mxu0 0
      %399 = vmatprep.subr.bf16.mxu0 0
      %400 = vmatpush1.bf16.xpose.msra.mxu0 0
      %401 = vmatprep.subr.bf16.mxu0 0
      %402 = vmatpush1.bf16.xpose.msra.mxu0 0
      %403 = vmatprep.subr.bf16.mxu0 0
      %404 = vmatpush1.bf16.xpose.msra.mxu0 0
      %405 = vmatprep.subr.bf16.mxu0 0
      %406 = vmatpush1.bf16.xpose.msra.mxu0 0
      %407 = vmatprep.subr.bf16.mxu0 0
      %408 = vmatpush1.bf16.xpose.msra.mxu0 0
      %409 = vmatprep.subr.bf16.mxu0 0
      %410 = vmatpush1.bf16.xpose.msra.mxu0 0
      %411 = vmatprep.subr.bf16.mxu0 0
      %412 = vmatpush1.bf16.xpose.msra.mxu0 0
      %413 = vmatprep.subr.bf16.mxu0 0
      %414 = vmatpush1.bf16.xpose.msra.mxu0 0
      %415 = vmatprep.subr.bf16.mxu0 0
      %416 = vmatpush1.bf16.xpose.msra.mxu0 0
      %417 = vmatprep.subr.bf16.mxu0 0
      %418 = vmatpush1.bf16.xpose.msra.mxu0 0
      %419 = vmatprep.subr.bf16.mxu0 0
      %420 = vmatpush1.bf16.xpose.msra.mxu0 0
      %421 = vmatprep.subr.bf16.mxu0 0
      %422 = vmatpush1.bf16.xpose.msra.mxu0 0
      %423 = vmatprep.subr.bf16.mxu0 0
      %424 = vmatpush1.bf16.xpose.msra.mxu0 0
      %425 = vmatprep.mubr.bf16.mxu0 0
      %426 = vmatmul.mubr.bf16.gmra.mrb[0].mxu0 %v388
      %v427 = vpop.f32.mrb[0].mxu0
      %v428 = vadd.f32 0.0, %v427
      %v429 = vpop.f32.mrb[0].mxu0
      %v430 = vpop.f32.mrb[0].mxu0
      %v431 = vpop.f32.mrb[0].mxu0
      %432 = vdwg.mxu0
      %v433 = vmul.f32 %v428, 0.35355338
      %v434 = vsel %vm372, %v433, -inf
      %v435 = vsel %vm386, %v434, -inf
      %436 = vmax.xlane.f32.xlu0 %v435
      %v437 = vpop.xlane.xlu0 %436
      %v438 = vsub.f32 %v434, %v437
      %v439 = vmul.f32 %v438, 1.442695
      %v440 = vpow.pop %v439
      %v441 = vsel %vm386, %v440, 0.0
      %442 = vadd.xlane.f32.xlu0 %v441
      %v443 = vpop.xlane.xlu0 %442
      %v444 = vrcp.pop %v443
      %v445 = vmul.f32 %v440, %v444
      %v446 = vpack.c.bf16 %v445, %v445
      %v448 = vsel %vm386, %v446, 0
      %vm450 = vcmask 1043456
      %v452 = vsel %vm450, %v385, 0
      %454 = vmatprep.subr.bf16.mxu0 0
      %455 = vmatpush1.bf16.msra.mxu0 %v452
      %456 = vmatprep.subr.bf16.mxu0 0
      %457 = vmatpush1.bf16.msra.mxu0 0
      %458 = vmatprep.subr.bf16.mxu0 0
      %459 = vmatpush1.bf16.msra.mxu0 0
      %460 = vmatprep.subr.bf16.mxu0 0
      %461 = vmatpush1.bf16.msra.mxu0 0
      %462 = vmatprep.subr.bf16.mxu0 0
      %463 = vmatpush1.bf16.msra.mxu0 0
      %464 = vmatprep.subr.bf16.mxu0 0
      %465 = vmatpush1.bf16.msra.mxu0 0
      %466 = vmatprep.subr.bf16.mxu0 0
      %467 = vmatpush1.bf16.msra.mxu0 0
      %468 = vmatprep.subr.bf16.mxu0 0
      %469 = vmatpush1.bf16.msra.mxu0 0
      %470 = vmatprep.subr.bf16.mxu0 0
      %471 = vmatpush1.bf16.msra.mxu0 0
      %472 = vmatprep.subr.bf16.mxu0 0
      %473 = vmatpush1.bf16.msra.mxu0 0
      %474 = vmatprep.subr.bf16.mxu0 0
      %475 = vmatpush1.bf16.msra.mxu0 0
      %476 = vmatprep.subr.bf16.mxu0 0
      %477 = vmatpush1.bf16.msra.mxu0 0
      %478 = vmatprep.subr.bf16.mxu0 0
      %479 = vmatpush1.bf16.msra.mxu0 0
      %480 = vmatprep.subr.bf16.mxu0 0
      %481 = vmatpush1.bf16.msra.mxu0 0
      %482 = vmatprep.subr.bf16.mxu0 0
      %483 = vmatpush1.bf16.msra.mxu0 0
      %484 = vmatprep.subr.bf16.mxu0 0
      %485 = vmatpush1.bf16.msra.mxu0 0
      %486 = vmatprep.mubr.bf16.mxu0 0
      %487 = vmatmul.mubr.bf16.gmra.mrb[0].mxu0 %v448
      %v488 = vpop.f32.mrb[0].mxu0
      %v489 = vadd.f32 0.0, %v488
      %v490 = vpop.f32.mrb[0].mxu0
      %v491 = vpop.f32.mrb[0].mxu0
      %v492 = vpop.f32.mrb[0].mxu0
      %493 = vdwg.mxu0
      %v494 = vpack.c.bf16 %v489, %v489
      %v495 = vld [vmem:[%s4] sm:$0xf]
      %v497 = vsel %vm386, %v494, 0
      %v500 = vsel %vm450, %v495, 0
      %502 = vmatprep.subr.bf16.mxu0 0
      %503 = vmatpush1.bf16.msra.mxu0 %v500
      %504 = vmatprep.subr.bf16.mxu0 0
      %505 = vmatpush1.bf16.msra.mxu0 0
      %506 = vmatprep.subr.bf16.mxu0 0
      %507 = vmatpush1.bf16.msra.mxu0 0
      %508 = vmatprep.subr.bf16.mxu0 0
      %509 = vmatpush1.bf16.msra.mxu0 0
      %510 = vmatprep.subr.bf16.mxu0 0
      %511 = vmatpush1.bf16.msra.mxu0 0
      %512 = vmatprep.subr.bf16.mxu0 0
      %513 = vmatpush1.bf16.msra.mxu0 0
      %514 = vmatprep.subr.bf16.mxu0 0
      %515 = vmatpush1.bf16.msra.mxu0 0
      %516 = vmatprep.subr.bf16.mxu0 0
      %517 = vmatpush1.bf16.msra.mxu0 0
      %518 = vmatprep.subr.bf16.mxu0 0
      %519 = vmatpush1.bf16.msra.mxu0 0
      %520 = vmatprep.subr.bf16.mxu0 0
      %521 = vmatpush1.bf16.msra.mxu0 0
      %522 = vmatprep.subr.bf16.mxu0 0
      %523 = vmatpush1.bf16.msra.mxu0 0
      %524 = vmatprep.subr.bf16.mxu0 0
      %525 = vmatpush1.bf16.msra.mxu0 0
      %526 = vmatprep.subr.bf16.mxu0 0
      %527 = vmatpush1.bf16.msra.mxu0 0
      %528 = vmatprep.subr.bf16.mxu0 0
      %529 = vmatpush1.bf16.msra.mxu0 0
      %530 = vmatprep.subr.bf16.mxu0 0
      %531 = vmatpush1.bf16.msra.mxu0 0
      %532 = vmatprep.subr.bf16.mxu0 0
      %533 = vmatpush1.bf16.msra.mxu0 0
      %534 = vmatprep.mubr.bf16.mxu0 0
      %535 = vmatmul.mubr.bf16.gmra.mrb[0].mxu0 %v497
      %v536 = vpop.f32.mrb[0].mxu0
      %v537 = vadd.f32 0.0, %v536
      %v538 = vpop.f32.mrb[0].mxu0
      %v539 = vpop.f32.mrb[0].mxu0
      %v540 = vpop.f32.mrb[0].mxu0
      %541 = vdwg.mxu0
      %v542 = vadd.f32 %v382, %v537
      %s543 = scalar_lea.vmem %s345, 4
      %v544 = vld [vmem:[%s543] sm:$0xf]
      %s545 = scalar_lea.vmem %s351, 4
      %v546 = vld [vmem:[%s545] sm:$0xf]
      %s547 = scalar_lea.vmem %s357, 4
      %v548 = vld [vmem:[%s547] sm:$0xf]
      %v550 = vsel %vm386, %v544, 0
      %v553 = vsel %vm386, %v546, 0
      %555 = vmatprep.subr.bf16.mxu0 0
      %556 = vmatpush1.bf16.xpose.msra.mxu0 %v553
      %557 = vmatprep.subr.bf16.mxu0 0
      %558 = vmatpush1.bf16.xpose.msra.mxu0 0
      %559 = vmatprep.subr.bf16.mxu0 0
      %560 = vmatpush1.bf16.xpose.msra.mxu0 0
      %561 = vmatprep.subr.bf16.mxu0 0
      %562 = vmatpush1.bf16.xpose.msra.mxu0 0
      %563 = vmatprep.subr.bf16.mxu0 0
      %564 = vmatpush1.bf16.xpose.msra.mxu0 0
      %565 = vmatprep.subr.bf16.mxu0 0
      %566 = vmatpush1.bf16.xpose.msra.mxu0 0
      %567 = vmatprep.subr.bf16.mxu0 0
      %568 = vmatpush1.bf16.xpose.msra.mxu0 0
      %569 = vmatprep.subr.bf16.mxu0 0
      %570 = vmatpush1.bf16.xpose.msra.mxu0 0
      %571 = vmatprep.subr.bf16.mxu0 0
      %572 = vmatpush1.bf16.xpose.msra.mxu0 0
      %573 = vmatprep.subr.bf16.mxu0 0
      %574 = vmatpush1.bf16.xpose.msra.mxu0 0
      %575 = vmatprep.subr.bf16.mxu0 0
      %576 = vmatpush1.bf16.xpose.msra.mxu0 0
      %577 = vmatprep.subr.bf16.mxu0 0
      %578 = vmatpush1.bf16.xpose.msra.mxu0 0
      %579 = vmatprep.subr.bf16.mxu0 0
      %580 = vmatpush1.bf16.xpose.msra.mxu0 0
      %581 = vmatprep.subr.bf16.mxu0 0
      %582 = vmatpush1.bf16.xpose.msra.mxu0 0
      %583 = vmatprep.subr.bf16.mxu0 0
      %584 = vmatpush1.bf16.xpose.msra.mxu0 0
      %585 = vmatprep.subr.bf16.mxu0 0
      %586 = vmatpush1.bf16.xpose.msra.mxu0 0
      %587 = vmatprep.mubr.bf16.mxu0 0
      %588 = vmatmul.mubr.bf16.gmra.mrb[0].mxu0 %v550
      %v589 = vpop.f32.mrb[0].mxu0
      %v590 = vadd.f32 0.0, %v589
      %v591 = vpop.f32.mrb[0].mxu0
      %v592 = vpop.f32.mrb[0].mxu0
      %v593 = vpop.f32.mrb[0].mxu0
      %594 = vdwg.mxu0
      %v595 = vmul.f32 %v590, 0.35355338
      %v596 = vsel %vm372, %v595, -inf
      %v597 = vsel %vm386, %v596, -inf
      %598 = vmax.xlane.f32.xlu0 %v597
      %v599 = vpop.xlane.xlu0 %598
      %v600 = vsub.f32 %v596, %v599
      %v601 = vmul.f32 %v600, 1.442695
      %v602 = vpow.pop %v601
      %v603 = vsel %vm386, %v602, 0.0
      %604 = vadd.xlane.f32.xlu0 %v603
      %v605 = vpop.xlane.xlu0 %604
      %v606 = vrcp.pop %v605
      %v607 = vmul.f32 %v602, %v606
      %v608 = vpack.c.bf16 %v607, %v607
      %v610 = vsel %vm386, %v608, 0
      %v613 = vsel %vm450, %v548, 0
      %615 = vmatprep.subr.bf16.mxu0 0
      %616 = vmatpush1.bf16.msra.mxu0 %v613
      %617 = vmatprep.subr.bf16.mxu0 0
      %618 = vmatpush1.bf16.msra.mxu0 0
      %619 = vmatprep.subr.bf16.mxu0 0
      %620 = vmatpush1.bf16.msra.mxu0 0
      %621 = vmatprep.subr.bf16.mxu0 0
      %622 = vmatpush1.bf16.msra.mxu0 0
      %623 = vmatprep.subr.bf16.mxu0 0
      %624 = vmatpush1.bf16.msra.mxu0 0
      %625 = vmatprep.subr.bf16.mxu0 0
      %626 = vmatpush1.bf16.msra.mxu0 0
      %627 = vmatprep.subr.bf16.mxu0 0
      %628 = vmatpush1.bf16.msra.mxu0 0
      %629 = vmatprep.subr.bf16.mxu0 0
      %630 = vmatpush1.bf16.msra.mxu0 0
      %631 = vmatprep.subr.bf16.mxu0 0
      %632 = vmatpush1.bf16.msra.mxu0 0
      %633 = vmatprep.subr.bf16.mxu0 0
      %634 = vmatpush1.bf16.msra.mxu0 0
      %635 = vmatprep.subr.bf16.mxu0 0
      %636 = vmatpush1.bf16.msra.mxu0 0
      %637 = vmatprep.subr.bf16.mxu0 0
      %638 = vmatpush1.bf16.msra.mxu0 0
      %639 = vmatprep.subr.bf16.mxu0 0
      %640 = vmatpush1.bf16.msra.mxu0 0
      %641 = vmatprep.subr.bf16.mxu0 0
      %642 = vmatpush1.bf16.msra.mxu0 0
      %643 = vmatprep.subr.bf16.mxu0 0
      %644 = vmatpush1.bf16.msra.mxu0 0
      %645 = vmatprep.subr.bf16.mxu0 0
      %646 = vmatpush1.bf16.msra.mxu0 0
      %647 = vmatprep.mubr.bf16.mxu0 0
      %648 = vmatmul.mubr.bf16.gmra.mrb[0].mxu0 %v610
      %v649 = vpop.f32.mrb[0].mxu0
      %v650 = vadd.f32 0.0, %v649
      %v651 = vpop.f32.mrb[0].mxu0
      %v652 = vpop.f32.mrb[0].mxu0
      %v653 = vpop.f32.mrb[0].mxu0
      %654 = vdwg.mxu0
      %v655 = vpack.c.bf16 %v650, %v650
      %s656 = scalar_lea.vmem %s4, 4
      %v657 = vld [vmem:[%s656] sm:$0xf]
      %v659 = vsel %vm386, %v655, 0
      %v662 = vsel %vm450, %v657, 0
      %664 = vmatprep.subr.bf16.mxu0 0
      %665 = vmatpush1.bf16.msra.mxu0 %v662
      %666 = vmatprep.subr.bf16.mxu0 0
      %667 = vmatpush1.bf16.msra.mxu0 0
      %668 = vmatprep.subr.bf16.mxu0 0
      %669 = vmatpush1.bf16.msra.mxu0 0
      %670 = vmatprep.subr.bf16.mxu0 0
      %671 = vmatpush1.bf16.msra.mxu0 0
      %672 = vmatprep.subr.bf16.mxu0 0
      %673 = vmatpush1.bf16.msra.mxu0 0
      %674 = vmatprep.subr.bf16.mxu0 0
      %675 = vmatpush1.bf16.msra.mxu0 0
      %676 = vmatprep.subr.bf16.mxu0 0
      %677 = vmatpush1.bf16.msra.mxu0 0
      %678 = vmatprep.subr.bf16.mxu0 0
      %679 = vmatpush1.bf16.msra.mxu0 0
      %680 = vmatprep.subr.bf16.mxu0 0
      %681 = vmatpush1.bf16.msra.mxu0 0
      %682 = vmatprep.subr.bf16.mxu0 0
      %683 = vmatpush1.bf16.msra.mxu0 0
      %684 = vmatprep.subr.bf16.mxu0 0
      %685 = vmatpush1.bf16.msra.mxu0 0
      %686 = vmatprep.subr.bf16.mxu0 0
      %687 = vmatpush1.bf16.msra.mxu0 0
      %688 = vmatprep.subr.bf16.mxu0 0
      %689 = vmatpush1.bf16.msra.mxu0 0
      %690 = vmatprep.subr.bf16.mxu0 0
      %691 = vmatpush1.bf16.msra.mxu0 0
      %692 = vmatprep.subr.bf16.mxu0 0
      %693 = vmatpush1.bf16.msra.mxu0 0
      %694 = vmatprep.subr.bf16.mxu0 0
      %695 = vmatpush1.bf16.msra.mxu0 0
      %696 = vmatprep.mubr.bf16.mxu0 0
      %697 = vmatmul.mubr.bf16.gmra.mrb[0].mxu0 %v659
      %v698 = vpop.f32.mrb[0].mxu0
      %v699 = vadd.f32 0.0, %v698
      %v700 = vpop.f32.mrb[0].mxu0
      %v701 = vpop.f32.mrb[0].mxu0
      %v702 = vpop.f32.mrb[0].mxu0
      %703 = vdwg.mxu0
      %v704 = vadd.f32 %v542, %v699
      %s705 = scalar_lea.vmem %s345, 8
      %v706 = vld [vmem:[%s705] sm:$0xf]
      %s707 = scalar_lea.vmem %s351, 8
      %v708 = vld [vmem:[%s707] sm:$0xf]
      %s709 = scalar_lea.vmem %s357, 8
      %v710 = vld [vmem:[%s709] sm:$0xf]
      %v712 = vsel %vm386, %v706, 0
      %v715 = vsel %vm386, %v708, 0
      %717 = vmatprep.subr.bf16.mxu0 0
      %718 = vmatpush1.bf16.xpose.msra.mxu0 %v715
      %719 = vmatprep.subr.bf16.mxu0 0
      %720 = vmatpush1.bf16.xpose.msra.mxu0 0
      %721 = vmatprep.subr.bf16.mxu0 0
      %722 = vmatpush1.bf16.xpose.msra.mxu0 0
      %723 = vmatprep.subr.bf16.mxu0 0
      %724 = vmatpush1.bf16.xpose.msra.mxu0 0
      %725 = vmatprep.subr.bf16.mxu0 0
      %726 = vmatpush1.bf16.xpose.msra.mxu0 0
      %727 = vmatprep.subr.bf16.mxu0 0
      %728 = vmatpush1.bf16.xpose.msra.mxu0 0
      %729 = vmatprep.subr.bf16.mxu0 0
      %730 = vmatpush1.bf16.xpose.msra.mxu0 0
      %731 = vmatprep.subr.bf16.mxu0 0
      %732 = vmatpush1.bf16.xpose.msra.mxu0 0
      %733 = vmatprep.subr.bf16.mxu0 0
      %734 = vmatpush1.bf16.xpose.msra.mxu0 0
      %735 = vmatprep.subr.bf16.mxu0 0
      %736 = vmatpush1.bf16.xpose.msra.mxu0 0
      %737 = vmatprep.subr.bf16.mxu0 0
      %738 = vmatpush1.bf16.xpose.msra.mxu0 0
      %739 = vmatprep.subr.bf16.mxu0 0
      %740 = vmatpush1.bf16.xpose.msra.mxu0 0
      %741 = vmatprep.subr.bf16.mxu0 0
      %742 = vmatpush1.bf16.xpose.msra.mxu0 0
      %743 = vmatprep.subr.bf16.mxu0 0
      %744 = vmatpush1.bf16.xpose.msra.mxu0 0
      %745 = vmatprep.subr.bf16.mxu0 0
      %746 = vmatpush1.bf16.xpose.msra.mxu0 0
      %747 = vmatprep.subr.bf16.mxu0 0
      %748 = vmatpush1.bf16.xpose.msra.mxu0 0
      %749 = vmatprep.mubr.bf16.mxu0 0
      %750 = vmatmul.mubr.bf16.gmra.mrb[0].mxu0 %v712
      %v751 = vpop.f32.mrb[0].mxu0
      %v752 = vadd.f32 0.0, %v751
      %v753 = vpop.f32.mrb[0].mxu0
      %v754 = vpop.f32.mrb[0].mxu0
      %v755 = vpop.f32.mrb[0].mxu0
      %756 = vdwg.mxu0
      %v757 = vmul.f32 %v752, 0.35355338
      %v758 = vsel %vm372, %v757, -inf
      %v759 = vsel %vm386, %v758, -inf
      %760 = vmax.xlane.f32.xlu0 %v759
      %v761 = vpop.xlane.xlu0 %760
      %v762 = vsub.f32 %v758, %v761
      %v763 = vmul.f32 %v762, 1.442695
      %v764 = vpow.pop %v763
      %v765 = vsel %vm386, %v764, 0.0
      %766 = vadd.xlane.f32.xlu0 %v765
      %v767 = vpop.xlane.xlu0 %766
      %v768 = vrcp.pop %v767
      %v769 = vmul.f32 %v764, %v768
      %v770 = vpack.c.bf16 %v769, %v769
      %v772 = vsel %vm386, %v770, 0
      %v775 = vsel %vm450, %v710, 0
      %777 = vmatprep.subr.bf16.mxu0 0
      %778 = vmatpush1.bf16.msra.mxu0 %v775
      %779 = vmatprep.subr.bf16.mxu0 0
      %780 = vmatpush1.bf16.msra.mxu0 0
      %781 = vmatprep.subr.bf16.mxu0 0
      %782 = vmatpush1.bf16.msra.mxu0 0
      %783 = vmatprep.subr.bf16.mxu0 0
      %784 = vmatpush1.bf16.msra.mxu0 0
      %785 = vmatprep.subr.bf16.mxu0 0
      %786 = vmatpush1.bf16.msra.mxu0 0
      %787 = vmatprep.subr.bf16.mxu0 0
      %788 = vmatpush1.bf16.msra.mxu0 0
      %789 = vmatprep.subr.bf16.mxu0 0
      %790 = vmatpush1.bf16.msra.mxu0 0
      %791 = vmatprep.subr.bf16.mxu0 0
      %792 = vmatpush1.bf16.msra.mxu0 0
      %793 = vmatprep.subr.bf16.mxu0 0
      %794 = vmatpush1.bf16.msra.mxu0 0
      %795 = vmatprep.subr.bf16.mxu0 0
      %796 = vmatpush1.bf16.msra.mxu0 0
      %797 = vmatprep.subr.bf16.mxu0 0
      %798 = vmatpush1.bf16.msra.mxu0 0
      %799 = vmatprep.subr.bf16.mxu0 0
      %800 = vmatpush1.bf16.msra.mxu0 0
      %801 = vmatprep.subr.bf16.mxu0 0
      %802 = vmatpush1.bf16.msra.mxu0 0
      %803 = vmatprep.subr.bf16.mxu0 0
      %804 = vmatpush1.bf16.msra.mxu0 0
      %805 = vmatprep.subr.bf16.mxu0 0
      %806 = vmatpush1.bf16.msra.mxu0 0
      %807 = vmatprep.subr.bf16.mxu0 0
      %808 = vmatpush1.bf16.msra.mxu0 0
      %809 = vmatprep.mubr.bf16.mxu0 0
      %810 = vmatmul.mubr.bf16.gmra.mrb[0].mxu0 %v772
      %v811 = vpop.f32.mrb[0].mxu0
      %v812 = vadd.f32 0.0, %v811
      %v813 = vpop.f32.mrb[0].mxu0
      %v814 = vpop.f32.mrb[0].mxu0
      %v815 = vpop.f32.mrb[0].mxu0
      %816 = vdwg.mxu0
      %v817 = vpack.c.bf16 %v812, %v812
      %s818 = scalar_lea.vmem %s4, 8
      %v819 = vld [vmem:[%s818] sm:$0xf]
      %v821 = vsel %vm386, %v817, 0
      %v824 = vsel %vm450, %v819, 0
      %826 = vmatprep.subr.bf16.mxu0 0
      %827 = vmatpush1.bf16.msra.mxu0 %v824
      %828 = vmatprep.subr.bf16.mxu0 0
      %829 = vmatpush1.bf16.msra.mxu0 0
      %830 = vmatprep.subr.bf16.mxu0 0
      %831 = vmatpush1.bf16.msra.mxu0 0
      %832 = vmatprep.subr.bf16.mxu0 0
      %833 = vmatpush1.bf16.msra.mxu0 0
      %834 = vmatprep.subr.bf16.mxu0 0
      %835 = vmatpush1.bf16.msra.mxu0 0
      %836 = vmatprep.subr.bf16.mxu0 0
      %837 = vmatpush1.bf16.msra.mxu0 0
      %838 = vmatprep.subr.bf16.mxu0 0
      %839 = vmatpush1.bf16.msra.mxu0 0
      %840 = vmatprep.subr.bf16.mxu0 0
      %841 = vmatpush1.bf16.msra.mxu0 0
      %842 = vmatprep.subr.bf16.mxu0 0
      %843 = vmatpush1.bf16.msra.mxu0 0
      %844 = vmatprep.subr.bf16.mxu0 0
      %845 = vmatpush1.bf16.msra.mxu0 0
      %846 = vmatprep.subr.bf16.mxu0 0
      %847 = vmatpush1.bf16.msra.mxu0 0
      %848 = vmatprep.subr.bf16.mxu0 0
      %849 = vmatpush1.bf16.msra.mxu0 0
      %850 = vmatprep.subr.bf16.mxu0 0
      %851 = vmatpush1.bf16.msra.mxu0 0
      %852 = vmatprep.subr.bf16.mxu0 0
      %853 = vmatpush1.bf16.msra.mxu0 0
      %854 = vmatprep.subr.bf16.mxu0 0
      %855 = vmatpush1.bf16.msra.mxu0 0
      %856 = vmatprep.subr.bf16.mxu0 0
      %857 = vmatpush1.bf16.msra.mxu0 0
      %858 = vmatprep.mubr.bf16.mxu0 0
      %859 = vmatmul.mubr.bf16.gmra.mrb[0].mxu0 %v821
      %v860 = vpop.f32.mrb[0].mxu0
      %v861 = vadd.f32 0.0, %v860
      %v862 = vpop.f32.mrb[0].mxu0
      %v863 = vpop.f32.mrb[0].mxu0
      %v864 = vpop.f32.mrb[0].mxu0
      %865 = vdwg.mxu0
      %v866 = vadd.f32 %v704, %v861
      %s867 = scalar_lea.vmem %s345, 12
      %v868 = vld [vmem:[%s867] sm:$0xf]
      %s869 = scalar_lea.vmem %s351, 12
      %v870 = vld [vmem:[%s869] sm:$0xf]
      %s871 = scalar_lea.vmem %s357, 12
      %v872 = vld [vmem:[%s871] sm:$0xf]
      %v874 = vsel %vm386, %v868, 0
      %v877 = vsel %vm386, %v870, 0
      %879 = vmatprep.subr.bf16.mxu0 0
      %880 = vmatpush1.bf16.xpose.msra.mxu0 %v877
      %881 = vmatprep.subr.bf16.mxu0 0
      %882 = vmatpush1.bf16.xpose.msra.mxu0 0
      %883 = vmatprep.subr.bf16.mxu0 0
      %884 = vmatpush1.bf16.xpose.msra.mxu0 0
      %885 = vmatprep.subr.bf16.mxu0 0
      %886 = vmatpush1.bf16.xpose.msra.mxu0 0
      %887 = vmatprep.subr.bf16.mxu0 0
      %888 = vmatpush1.bf16.xpose.msra.mxu0 0
      %889 = vmatprep.subr.bf16.mxu0 0
      %890 = vmatpush1.bf16.xpose.msra.mxu0 0
      %891 = vmatprep.subr.bf16.mxu0 0
      %892 = vmatpush1.bf16.xpose.msra.mxu0 0
      %893 = vmatprep.subr.bf16.mxu0 0
      %894 = vmatpush1.bf16.xpose.msra.mxu0 0
      %895 = vmatprep.subr.bf16.mxu0 0
      %896 = vmatpush1.bf16.xpose.msra.mxu0 0
      %897 = vmatprep.subr.bf16.mxu0 0
      %898 = vmatpush1.bf16.xpose.msra.mxu0 0
      %899 = vmatprep.subr.bf16.mxu0 0
      %900 = vmatpush1.bf16.xpose.msra.mxu0 0
      %901 = vmatprep.subr.bf16.mxu0 0
      %902 = vmatpush1.bf16.xpose.msra.mxu0 0
      %903 = vmatprep.subr.bf16.mxu0 0
      %904 = vmatpush1.bf16.xpose.msra.mxu0 0
      %905 = vmatprep.subr.bf16.mxu0 0
      %906 = vmatpush1.bf16.xpose.msra.mxu0 0
      %907 = vmatprep.subr.bf16.mxu0 0
      %908 = vmatpush1.bf16.xpose.msra.mxu0 0
      %909 = vmatprep.subr.bf16.mxu0 0
      %910 = vmatpush1.bf16.xpose.msra.mxu0 0
      %911 = vmatprep.mubr.bf16.mxu0 0
      %912 = vmatmul.mubr.bf16.gmra.mrb[0].mxu0 %v874
      %v913 = vpop.f32.mrb[0].mxu0
      %v914 = vadd.f32 0.0, %v913
      %v915 = vpop.f32.mrb[0].mxu0
      %v916 = vpop.f32.mrb[0].mxu0
      %v917 = vpop.f32.mrb[0].mxu0
      %918 = vdwg.mxu0
      %v919 = vmul.f32 %v914, 0.35355338
      %v920 = vsel %vm372, %v919, -inf
      %v921 = vsel %vm386, %v920, -inf
      %922 = vmax.xlane.f32.xlu0 %v921
      %v923 = vpop.xlane.xlu0 %922
      %v924 = vsub.f32 %v920, %v923
      %v925 = vmul.f32 %v924, 1.442695
      %v926 = vpow.pop %v925
      %v927 = vsel %vm386, %v926, 0.0
      %928 = vadd.xlane.f32.xlu0 %v927
      %v929 = vpop.xlane.xlu0 %928
      %v930 = vrcp.pop %v929
      %v931 = vmul.f32 %v926, %v930
      %v932 = vpack.c.bf16 %v931, %v931
      %v934 = vsel %vm386, %v932, 0
      %v937 = vsel %vm450, %v872, 0
      %939 = vmatprep.subr.bf16.mxu0 0
      %940 = vmatpush1.bf16.msra.mxu0 %v937
      %941 = vmatprep.subr.bf16.mxu0 0
      %942 = vmatpush1.bf16.msra.mxu0 0
      %943 = vmatprep.subr.bf16.mxu0 0
      %944 = vmatpush1.bf16.msra.mxu0 0
      %945 = vmatprep.subr.bf16.mxu0 0
      %946 = vmatpush1.bf16.msra.mxu0 0
      %947 = vmatprep.subr.bf16.mxu0 0
      %948 = vmatpush1.bf16.msra.mxu0 0
      %949 = vmatprep.subr.bf16.mxu0 0
      %950 = vmatpush1.bf16.msra.mxu0 0
      %951 = vmatprep.subr.bf16.mxu0 0
      %952 = vmatpush1.bf16.msra.mxu0 0
      %953 = vmatprep.subr.bf16.mxu0 0
      %954 = vmatpush1.bf16.msra.mxu0 0
      %955 = vmatprep.subr.bf16.mxu0 0
      %956 = vmatpush1.bf16.msra.mxu0 0
      %957 = vmatprep.subr.bf16.mxu0 0
      %958 = vmatpush1.bf16.msra.mxu0 0
      %959 = vmatprep.subr.bf16.mxu0 0
      %960 = vmatpush1.bf16.msra.mxu0 0
      %961 = vmatprep.subr.bf16.mxu0 0
      %962 = vmatpush1.bf16.msra.mxu0 0
      %963 = vmatprep.subr.bf16.mxu0 0
      %964 = vmatpush1.bf16.msra.mxu0 0
      %965 = vmatprep.subr.bf16.mxu0 0
      %966 = vmatpush1.bf16.msra.mxu0 0
      %967 = vmatprep.subr.bf16.mxu0 0
      %968 = vmatpush1.bf16.msra.mxu0 0
      %969 = vmatprep.subr.bf16.mxu0 0
      %970 = vmatpush1.bf16.msra.mxu0 0
      %971 = vmatprep.mubr.bf16.mxu0 0
      %972 = vmatmul.mubr.bf16.gmra.mrb[0].mxu0 %v934
      %v973 = vpop.f32.mrb[0].mxu0
      %v974 = vadd.f32 0.0, %v973
      %v975 = vpop.f32.mrb[0].mxu0
      %v976 = vpop.f32.mrb[0].mxu0
      %v977 = vpop.f32.mrb[0].mxu0
      %978 = vdwg.mxu0
      %v979 = vpack.c.bf16 %v974, %v974
      %s980 = scalar_lea.vmem %s4, 12
      %v981 = vld [vmem:[%s980] sm:$0xf]
      %v983 = vsel %vm386, %v979, 0
      %v986 = vsel %vm450, %v981, 0
      %988 = vmatprep.subr.bf16.mxu0 0
      %989 = vmatpush1.bf16.msra.mxu0 %v986
      %990 = vmatprep.subr.bf16.mxu0 0
      %991 = vmatpush1.bf16.msra.mxu0 0
      %992 = vmatprep.subr.bf16.mxu0 0
      %993 = vmatpush1.bf16.msra.mxu0 0
      %994 = vmatprep.subr.bf16.mxu0 0
      %995 = vmatpush1.bf16.msra.mxu0 0
      %996 = vmatprep.subr.bf16.mxu0 0
      %997 = vmatpush1.bf16.msra.mxu0 0
      %998 = vmatprep.subr.bf16.mxu0 0
      %999 = vmatpush1.bf16.msra.mxu0 0
      %1000 = vmatprep.subr.bf16.mxu0 0
      %1001 = vmatpush1.bf16.msra.mxu0 0
      %1002 = vmatprep.subr.bf16.mxu0 0
      %1003 = vmatpush1.bf16.msra.mxu0 0
      %1004 = vmatprep.subr.bf16.mxu0 0
      %1005 = vmatpush1.bf16.msra.mxu0 0
      %1006 = vmatprep.subr.bf16.mxu0 0
      %1007 = vmatpush1.bf16.msra.mxu0 0
      %1008 = vmatprep.subr.bf16.mxu0 0
      %1009 = vmatpush1.bf16.msra.mxu0 0
      %1010 = vmatprep.subr.bf16.mxu0 0
      %1011 = vmatpush1.bf16.msra.mxu0 0
      %1012 = vmatprep.subr.bf16.mxu0 0
      %1013 = vmatpush1.bf16.msra.mxu0 0
      %1014 = vmatprep.subr.bf16.mxu0 0
      %1015 = vmatpush1.bf16.msra.mxu0 0
      %1016 = vmatprep.subr.bf16.mxu0 0
      %1017 = vmatpush1.bf16.msra.mxu0 0
      %1018 = vmatprep.subr.bf16.mxu0 0
      %1019 = vmatpush1.bf16.msra.mxu0 0
      %1020 = vmatprep.mubr.bf16.mxu0 0
      %1021 = vmatmul.mubr.bf16.gmra.mrb[0].mxu0 %v983
      %v1022 = vpop.f32.mrb[0].mxu0
      %v1023 = vadd.f32 0.0, %v1022
      %v1024 = vpop.f32.mrb[0].mxu0
      %v1025 = vpop.f32.mrb[0].mxu0
      %v1026 = vpop.f32.mrb[0].mxu0
      %1027 = vdwg.mxu0
      %v1028 = vadd.f32 %v866, %v1023
      %vm1029 = vcmask 261120
      %v1030 = vsel %vm1029, %v1028, 0.0
      %1031 = vadd.xlane.f32.xlu0 %v1030
      %v1032 = vpop.xlane.xlu0 %1031
      %v1033 = vrcp.pop 32.0
      %v1034 = vmul.f32 %v1032, %v1033
      %v1035 = vsub.f32 %v1028, %v1034
      %v1036 = vmul.f32 %v1035, %v1035
      %v1037 = vsel %vm1029, %v1036, 0.0
      %1038 = vadd.xlane.f32.xlu0 %v1037
      %v1039 = vpop.xlane.xlu0 %1038
      %v1040 = vmul.f32 %v1039, %v1033
      %v1041 = vadd.f32 %v1040, 1e-05
      %v1042 = vrsqrt.pop %v1041
      %v1043 = vmul.f32 %v1035, %v1042
      %v1044 = vld [vmem:[%s6] sm:$0x1]
      %v1046 = vlaneseq
      %v1047 = vshrl.u32 %v1046, 7
      %v1048 = vsub.s32 0, %v1047
      %v1049 = vrot.slane %v1044, %v1048
      %v1051 = vmul.f32 %v1043, %v1049
      %v1052 = vld [vmem:[%s7] sm:$0x1]
      %v1054 = vlaneseq
      %v1055 = vshrl.u32 %v1054, 7
      %v1056 = vsub.s32 0, %v1055
      %v1057 = vrot.slane %v1052, %v1056
      %v1059 = vadd.f32 %v1051, %v1057
      %v1060 = vpack.c.bf16 %v1059, %v1059
      %vm1061 = vcmask 257024
      %1062 = vst.msk [vmem:[%s366] sm:$0xf] %vm1061, %v1060
      %p1063 = scmp.lt.s32.totalorder %s19, 7
      %s1064 = scalar_select %p1063, %s19, 7
      %s1065 = smul.addr %s1064, 4
      %s1066 = scalar_lea.vmem %s8, %s1065
      // Predicated region
      $region53: #{gcn_shift_transformer.28} parent=51 // pred_check
        %p1067 = pneg %p225
      $region54: #{gcn_shift_transformer.28} parent=51 // pred_check_branch
        %1069 = sbr.rel (%p1067) target = $region56
      $region55: #{gcn_shift_transformer.28} parent=51 // pred_region
        _
      $region56: #{gcn_shift_transformer.28} parent=51 // pred_fallthru
        _
    $region52: #{gcn_shift_transformer.28} parent=5 // pred_fallthru
      _
    %p1070 = scmp.le.s32.totalorder 2, %s14
    // Predicated region
    $region57: #{gcn_shift_transformer.28} parent=5 // pred_check
      %p1071 = pneg %p1070
    $region58: #{gcn_shift_transformer.28} parent=5 // pred_check_branch
      %1073 = sbr.rel (%p1071) target = $region60
    $region59: #{gcn_shift_transformer.28} parent=5 // pred_region
      %s1074 = ssub.s32 %s14, 2
      // Predicated region
      $region61: #{gcn_shift_transformer.28} parent=59 // pred_check
        %p1075 = pneg %p231
      $region62: #{gcn_shift_transformer.28} parent=59 // pred_check_branch
        %1077 = sbr.rel (%p1075) target = $region64
      $region63: #{gcn_shift_transformer.28} parent=59 // pred_region
        %p1078 = scmp.lt.s32.totalorder %s20, 7
        %s1079 = scalar_select %p1078, %s20, 7
        %s1080 = smul.addr %s1079, 4
        %s1081 = scalar_lea.vmem %s8, %s1080
      $region64: #{gcn_shift_transformer.28} parent=59 // pred_fallthru
        _
    $region60: #{gcn_shift_transformer.28} parent=5 // pred_fallthru
      _
  $region6: #{gcn_shift_transformer.28} parent=0 // loop_footer
    %s18 = sadd.s32 1, %s14
  $region7: #{gcn_shift_transformer.28} parent=0 // loop_footer_branch
    %13 = sbr.rel target = $region3
  $region8: #{gcn_shift_transformer.28} parent=0 // loop_exit
    _

// kernel: gcn_shift_transformer.30
$region0: #{gcn_shift_transformer.30}
  #allocation0 [shape = 'u32[]', space=smem, size = 0x4, offset = 0x4, fixed_abs, tag = 'smem constant byte address 0x4 - core index']
  #allocation1 [shape = 'u32[144,128]{1,0:T(1,128)}', space=vmem, size = 0x12000, scoped, tag = 'internal scratch']
  %s0 = inlined_call_operand.vmem [shape: bf16[64,32], index: 0, kind: input, shape index: {}]
  %s1 = inlined_call_operand.vmem [shape: bf16[32,64], index: 1, kind: input, shape index: {}]
  %s2 = inlined_call_operand.vmem [shape: f32[1,64], index: 2, kind: input, shape index: {}]
  %s3 = inlined_call_operand.vmem [shape: bf16[64,64], index: 3, kind: output, shape index: {}]
  %s4 = sld [smem:[#allocation0]]
  $region22: #{gcn_shift_transformer.30} parent=0
    _
  %s6 = ssub.s32 1, %s4
  %s7 = scalar_select 0, %s6, %s4
  // Predicated region
  $region2: #{gcn_shift_transformer.30} parent=0 // pred_check
    _
  $region3: #{gcn_shift_transformer.30} parent=0 // pred_check_branch
    %9 = sbr.rel (0) target = $region5
  $region4: #{gcn_shift_transformer.30} parent=0 // pred_region
    _
  $region5: #{gcn_shift_transformer.30} parent=0 // pred_fallthru
    _
  // Predicated region
  $region6: #{gcn_shift_transformer.30} parent=0 // pred_check
    _
  $region7: #{gcn_shift_transformer.30} parent=0 // pred_check_branch
    %11 = sbr.rel (0) target = $region9
  $region8: #{gcn_shift_transformer.30} parent=0 // pred_region
    _
  $region9: #{gcn_shift_transformer.30} parent=0 // pred_fallthru
    _
  // Predicated region
  $region10: #{gcn_shift_transformer.30} parent=0 // pred_check
    _
  $region11: #{gcn_shift_transformer.30} parent=0 // pred_check_branch
    %13 = sbr.rel (0) target = $region13
  $region12: #{gcn_shift_transformer.30} parent=0 // pred_region
    _
  $region13: #{gcn_shift_transformer.30} parent=0 // pred_fallthru
    _
  %v15 = vld [vmem:[%s0] sm:$0xf]
  %v16 = vld [vmem:[%s0 + $0x4] sm:$0xf]
  %v17 = vld [vmem:[%s0 + $0x8] sm:$0xf]
  %v18 = vld [vmem:[%s0 + $0xc] sm:$0xf]
  %v19 = vld [vmem:[%s0 + $0x10] sm:$0xf]
  %v20 = vld [vmem:[%s0 + $0x14] sm:$0xf]
  %v21 = vld [vmem:[%s0 + $0x18] sm:$0xf]
  %v22 = vld [vmem:[%s0 + $0x1c] sm:$0xf]
  %v23 = vld [vmem:[%s1] sm:$0xf]
  %v24 = vld [vmem:[%s1 + $0x4] sm:$0xf]
  %v25 = vld [vmem:[%s1 + $0x8] sm:$0xf]
  %v26 = vld [vmem:[%s1 + $0xc] sm:$0xf]
  %v27 = vld [vmem:[%s2] sm:$0x1]
  %v29 = vlaneseq
  %v30 = vshrl.u32 %v29, 7
  %v31 = vsub.s32 0, %v30
  %v32 = vrot.slane %v27, %v31
  %v42 = vunpack.c.l.b16 %v15
  %v43 = vunpack.c.l.b16 %v16
  %v44 = vunpack.c.l.b16 %v17
  %v45 = vunpack.c.l.b16 %v18
  %v46 = vunpack.c.l.b16 %v19
  %v47 = vunpack.c.l.b16 %v20
  %v48 = vunpack.c.l.b16 %v21
  %v49 = vunpack.c.l.b16 %v22
  %v50 = vpack.c.b16 %v43, %v42
  %v51 = vpack.c.b16 %v45, %v44
  %v52 = vpack.c.b16 %v47, %v46
  %v53 = vpack.c.b16 %v49, %v48
  %v58 = vunpack.c.l.b16 %v23
  %v59 = vunpack.c.l.b16 %v24
  %v60 = vunpack.c.l.b16 %v25
  %v61 = vunpack.c.l.b16 %v26
  %v62 = vpack.c.b16 %v59, %v58
  %v63 = vpack.c.b16 %v61, %v60
  %vm66 = vcmask 261120
  %v68 = vsel %vm66, %v50, 0
  %v71 = vsel %vm66, %v51, 0
  %v74 = vsel %vm66, %v52, 0
  %v77 = vsel %vm66, %v53, 0
  %79 = vmatprep.subr.bf16.mxu0 0
  %80 = vmatpush1.bf16.msra.mxu0 %v62
  %81 = vmatprep.subr.bf16.mxu0 0
  %82 = vmatpush1.bf16.msra.mxu0 %v63
  %83 = vmatprep.subr.bf16.mxu0 0
  %84 = vmatpush1.bf16.msra.mxu0 0
  %85 = vmatprep.subr.bf16.mxu0 0
  %86 = vmatpush1.bf16.msra.mxu0 0
  %87 = vmatprep.subr.bf16.mxu0 0
  %88 = vmatpush1.bf16.msra.mxu0 0
  %89 = vmatprep.subr.bf16.mxu0 0
  %90 = vmatpush1.bf16.msra.mxu0 0
  %91 = vmatprep.subr.bf16.mxu0 0
  %92 = vmatpush1.bf16.msra.mxu0 0
  %93 = vmatprep.subr.bf16.mxu0 0
  %94 = vmatpush1.bf16.msra.mxu0 0
  %95 = vmatprep.subr.bf16.mxu0 0
  %96 = vmatpush1.bf16.msra.mxu0 0
  %97 = vmatprep.subr.bf16.mxu0 0
  %98 = vmatpush1.bf16.msra.mxu0 0
  %99 = vmatprep.subr.bf16.mxu0 0
  %100 = vmatpush1.bf16.msra.mxu0 0
  %101 = vmatprep.subr.bf16.mxu0 0
  %102 = vmatpush1.bf16.msra.mxu0 0
  %103 = vmatprep.subr.bf16.mxu0 0
  %104 = vmatpush1.bf16.msra.mxu0 0
  %105 = vmatprep.subr.bf16.mxu0 0
  %106 = vmatpush1.bf16.msra.mxu0 0
  %107 = vmatprep.subr.bf16.mxu0 0
  %108 = vmatpush1.bf16.msra.mxu0 0
  %109 = vmatprep.subr.bf16.mxu0 0
  %110 = vmatpush1.bf16.msra.mxu0 0
  %111 = vmatprep.mubr.bf16.mxu0 0
  %112 = vmatmul.mubr.bf16.gmra.mrb[0].mxu0 %v68
  %v113 = vpop.f32.mrb[0].mxu0
  %v114 = vadd.f32 %v32, %v113
  %v115 = vpop.f32.mrb[0].mxu0
  %v116 = vpop.f32.mrb[0].mxu0
  %v117 = vadd.f32 %v32, %v116
  %v118 = vpop.f32.mrb[0].mxu0
  %119 = vmatprep.mubr.bf16.mxu0 0
  %120 = vmatmul.mubr.bf16.gmra.mrb[0].mxu0 %v71
  %v121 = vpop.f32.mrb[0].mxu0
  %v122 = vadd.f32 %v32, %v121
  %v123 = vpop.f32.mrb[0].mxu0
  %v124 = vpop.f32.mrb[0].mxu0
  %v125 = vadd.f32 %v32, %v124
  %v126 = vpop.f32.mrb[0].mxu0
  %127 = vmatprep.mubr.bf16.mxu0 0
  %128 = vmatmul.mubr.bf16.gmra.mrb[0].mxu0 %v74
  %v129 = vpop.f32.mrb[0].mxu0
  %v130 = vadd.f32 %v32, %v129
  %v131 = vpop.f32.mrb[0].mxu0
  %v132 = vpop.f32.mrb[0].mxu0
  %v133 = vadd.f32 %v32, %v132
  %v134 = vpop.f32.mrb[0].mxu0
  %135 = vmatprep.mubr.bf16.mxu0 0
  %136 = vmatmul.mubr.bf16.gmra.mrb[0].mxu0 %v77
  %v137 = vpop.f32.mrb[0].mxu0
  %v138 = vadd.f32 %v32, %v137
  %v139 = vpop.f32.mrb[0].mxu0
  %v140 = vpop.f32.mrb[0].mxu0
  %v141 = vadd.f32 %v32, %v140
  %v142 = vpop.f32.mrb[0].mxu0
  %143 = vdwg.mxu0
  %v144 = vpack.c.bf16 %v117, %v114
  %v145 = vpack.c.bf16 %v125, %v122
  %v146 = vpack.c.bf16 %v133, %v130
  %v147 = vpack.c.bf16 %v141, %v138
  %v152 = vunpack.c.l.b16 %v144
  %v153 = vunpack.c.h.b16 %v144
  %v154 = vunpack.c.l.b16 %v145
  %v155 = vunpack.c.h.b16 %v145
  %v156 = vunpack.c.l.b16 %v146
  %v157 = vunpack.c.h.b16 %v146
  %v158 = vunpack.c.l.b16 %v147
  %v159 = vunpack.c.h.b16 %v147
  %v160 = vpack.c.b16 %v152, %v152
  %v161 = vpack.c.b16 %v153, %v153
  %v162 = vpack.c.b16 %v154, %v154
  %v163 = vpack.c.b16 %v155, %v155
  %v164 = vpack.c.b16 %v156, %v156
  %v165 = vpack.c.b16 %v157, %v157
  %v166 = vpack.c.b16 %v158, %v158
  %v167 = vpack.c.b16 %v159, %v159
  %vm176 = vcmask 519168
  %177 = vst.msk [vmem:[%s3] sm:$0xf] %vm176, %v160
  %178 = vst.msk [vmem:[%s3 + $0x4] sm:$0xf] %vm176, %v161
  %179 = vst.msk [vmem:[%s3 + $0x8] sm:$0xf] %vm176, %v162
  %180 = vst.msk [vmem:[%s3 + $0xc] sm:$0xf] %vm176, %v163
  %181 = vst.msk [vmem:[%s3 + $0x10] sm:$0xf] %vm176, %v164
  %182 = vst.msk [vmem:[%s3 + $0x14] sm:$0xf] %vm176, %v165
  %183 = vst.msk [vmem:[%s3 + $0x18] sm:$0xf] %vm176, %v166
  %184 = vst.msk [vmem:[%s3 + $0x1c] sm:$0xf] %vm176, %v167
  // Predicated region
  $region14: #{gcn_shift_transformer.30} parent=0 // pred_check
    _
  $region15: #{gcn_shift_transformer.30} parent=0 // pred_check_branch
    %186 = sbr.rel (0) target = $region17
  $region16: #{gcn_shift_transformer.30} parent=0 // pred_region
    _
  $region17: #{gcn_shift_transformer.30} parent=0 // pred_fallthru
    _
  // Predicated region
  $region18: #{gcn_shift_transformer.30} parent=0 // pred_check
    _
  $region19: #{gcn_shift_transformer.30} parent=0 // pred_check_branch
    %188 = sbr.rel (0) target = $region21
  $region20: #{gcn_shift_transformer.30} parent=0 // pred_region
    _
  $region21: #{gcn_shift_transformer.30} parent=0 // pred_fallthru
    _

// kernel: gcn_shift_transformer.22
$region0: #{gcn_shift_transformer.22}
  #allocation0 [shape = 'u32[]', space=smem, size = 0x4, offset = 0x4, fixed_abs, tag = 'smem constant byte address 0x4 - core index']
  #allocation1 [shape = 'u32[144,128]{1,0:T(1,128)}', space=vmem, size = 0x12000, scoped, tag = 'internal scratch']
  %s0 = inlined_call_operand.vmem [shape: bf16[32,8,8], index: 0, kind: input, shape index: {}]
  %s1 = inlined_call_operand.vmem [shape: bf16[32,8,8], index: 1, kind: input, shape index: {}]
  %s2 = inlined_call_operand.vmem [shape: bf16[32,8,8], index: 2, kind: input, shape index: {}]
  %s3 = inlined_call_operand.vmem [shape: bf16[8,8,32], index: 3, kind: input, shape index: {}]
  %s4 = inlined_call_operand.vmem [shape: bf16[4,8,32], index: 4, kind: input, shape index: {}]
  %s5 = inlined_call_operand.vmem [shape: f32[1,32], index: 5, kind: input, shape index: {}]
  %s6 = inlined_call_operand.vmem [shape: f32[1,32], index: 6, kind: input, shape index: {}]
  %s7 = inlined_call_operand.vmem [shape: f32[1,32], index: 7, kind: input, shape index: {}]
  %s8 = inlined_call_operand.vmem [shape: bf16[8,8,32], index: 8, kind: output, shape index: {}]
  %s9 = sld [smem:[#allocation0]]
  $region65: #{gcn_shift_transformer.22} parent=0
    _
  %s11 = ssub.s32 1, %s9
  %s12 = scalar_select 0, %s11, %s9
  loop: start=0, step=1, limit=10
  $region2: #{gcn_shift_transformer.22} parent=0 // loop_pre_header
    _
  $region3: #{gcn_shift_transformer.22} parent=0 // loop_header
    %s14 = sphi 0, %s18
    %p15 = scmp.ge.s32.totalorder %s14, 10
    %s24 = sphi 0, %s26
    %s27 = sphi 0, %s24
    %s28 = sphi 0, %s27
    %s44 = sphi 0, %s28
    %s50 = sphi 0, %s52
    %s53 = sphi 0, %s50
    %s54 = sphi 0, %s53
    %s70 = sphi 0, %s54
    %s76 = sphi 0, %s78
    %s79 = sphi 0, %s76
    %s80 = sphi 0, %s79
    %s96 = sphi 0, %s80
    %s102 = sphi 0, %s104
    %s105 = sphi 0, %s102
    %s106 = sphi 0, %s105
    %s122 = sphi 0, %s106
    %s126 = sphi 0, %s126
    %s128 = sphi 0, %s126
    %s129 = sphi 0, %s128
    %s143 = sphi 0, %s129
    %s147 = sphi 0, %s147
    %s149 = sphi 0, %s147
    %s150 = sphi 0, %s149
    %s164 = sphi 0, %s150
    %s168 = sphi 0, %s168
    %s170 = sphi 0, %s168
    %s171 = sphi 0, %s170
    %s185 = sphi 0, %s171
    %s189 = sphi 0, %s189
    %s191 = sphi 0, %s189
    %s192 = sphi 0, %s191
    %s206 = sphi 0, %s192
    %s212 = sphi 0, %s214
    %s215 = sphi 0, %s212
    %s216 = sphi 0, %s215
    %s232 = sphi 0, %s216
  $region4: #{gcn_shift_transformer.22} parent=0 // loop_header_branch
    %17 = sbr.rel (%p15) target = $region8
  $region5: #{gcn_shift_transformer.22} parent=0 // loop_body
    %s19 = ssub.s32 %s14, 1
    %s20 = ssub.s32 %s14, 2
    %s21 = sadd.s32 %s14, 1
    %s22 = ssub.s32 %s14, %s21
    %p23 = scmp.eq.s32.totalorder %s22, 0
    %s25 = sadd.s32 %s24, 1
    %s26 = scalar_select %p23, %s24, %s25
    %p29 = pneg %p23
    %p30 = scmp.eq.s32.totalorder %s14, 7
    %p31 = por %p29, %p30
    %p32 = scmp.ne.s32.totalorder %s24, %s27
    %p33 = scmp.eq.s32.totalorder %s14, 0
    %p34 = por %p32, %p33
    %p35 = scmp.ne.s32.totalorder %s24, %s27
    %p36 = scmp.eq.s32.totalorder %s19, 7
    %p37 = por %p35, %p36
    %p38 = scmp.ne.s32.totalorder %s27, %s28
    %p39 = scmp.eq.s32.totalorder %s19, 0
    %p40 = por %p38, %p39
    %p41 = scmp.ne.s32.totalorder %s27, %s28
    %p42 = scmp.eq.s32.totalorder %s20, 7
    %p43 = por %p41, %p42
    %p45 = scmp.ne.s32.totalorder %s28, %s44
    %p46 = scmp.eq.s32.totalorder %s20, 0
    %p47 = por %p45, %p46
    %s48 = ssub.s32 %s14, %s21
    %p49 = scmp.eq.s32.totalorder %s48, 0
    %s51 = sadd.s32 %s50, 1
    %s52 = scalar_select %p49, %s50, %s51
    %p55 = pneg %p49
    %p56 = scmp.eq.s32.totalorder %s14, 7
    %p57 = por %p55, %p56
    %p58 = scmp.ne.s32.totalorder %s50, %s53
    %p59 = scmp.eq.s32.totalorder %s14, 0
    %p60 = por %p58, %p59
    %p61 = scmp.ne.s32.totalorder %s50, %s53
    %p62 = scmp.eq.s32.totalorder %s19, 7
    %p63 = por %p61, %p62
    %p64 = scmp.ne.s32.totalorder %s53, %s54
    %p65 = scmp.eq.s32.totalorder %s19, 0
    %p66 = por %p64, %p65
    %p67 = scmp.ne.s32.totalorder %s53, %s54
    %p68 = scmp.eq.s32.totalorder %s20, 7
    %p69 = por %p67, %p68
    %p71 = scmp.ne.s32.totalorder %s54, %s70
    %p72 = scmp.eq.s32.totalorder %s20, 0
    %p73 = por %p71, %p72
    %s74 = ssub.s32 %s14, %s21
    %p75 = scmp.eq.s32.totalorder %s74, 0
    %s77 = sadd.s32 %s76, 1
    %s78 = scalar_select %p75, %s76, %s77
    %p81 = pneg %p75
    %p82 = scmp.eq.s32.totalorder %s14, 7
    %p83 = por %p81, %p82
    %p84 = scmp.ne.s32.totalorder %s76, %s79
    %p85 = scmp.eq.s32.totalorder %s14, 0
    %p86 = por %p84, %p85
    %p87 = scmp.ne.s32.totalorder %s76, %s79
    %p88 = scmp.eq.s32.totalorder %s19, 7
    %p89 = por %p87, %p88
    %p90 = scmp.ne.s32.totalorder %s79, %s80
    %p91 = scmp.eq.s32.totalorder %s19, 0
    %p92 = por %p90, %p91
    %p93 = scmp.ne.s32.totalorder %s79, %s80
    %p94 = scmp.eq.s32.totalorder %s20, 7
    %p95 = por %p93, %p94
    %p97 = scmp.ne.s32.totalorder %s80, %s96
    %p98 = scmp.eq.s32.totalorder %s20, 0
    %p99 = por %p97, %p98
    %s100 = ssub.s32 %s14, %s21
    %p101 = scmp.eq.s32.totalorder %s100, 0
    %s103 = sadd.s32 %s102, 1
    %s104 = scalar_select %p101, %s102, %s103
    %p107 = pneg %p101
    %p108 = scmp.eq.s32.totalorder %s14, 7
    %p109 = por %p107, %p108
    %p110 = scmp.ne.s32.totalorder %s102, %s105
    %p111 = scmp.eq.s32.totalorder %s14, 0
    %p112 = por %p110, %p111
    %p113 = scmp.ne.s32.totalorder %s102, %s105
    %p114 = scmp.eq.s32.totalorder %s19, 7
    %p115 = por %p113, %p114
    %p116 = scmp.ne.s32.totalorder %s105, %s106
    %p117 = scmp.eq.s32.totalorder %s19, 0
    %p118 = por %p116, %p117
    %p119 = scmp.ne.s32.totalorder %s105, %s106
    %p120 = scmp.eq.s32.totalorder %s20, 7
    %p121 = por %p119, %p120
    %p123 = scmp.ne.s32.totalorder %s106, %s122
    %p124 = scmp.eq.s32.totalorder %s20, 0
    %p125 = por %p123, %p124
    %s127 = sadd.s32 %s126, 1
    %p130 = scmp.eq.s32.totalorder %s14, 7
    %p131 = scmp.ne.s32.totalorder %s126, %s128
    %p132 = scmp.eq.s32.totalorder %s14, 0
    %p133 = por %p131, %p132
    %p134 = scmp.ne.s32.totalorder %s126, %s128
    %p135 = scmp.eq.s32.totalorder %s19, 7
    %p136 = por %p134, %p135
    %p137 = scmp.ne.s32.totalorder %s128, %s129
    %p138 = scmp.eq.s32.totalorder %s19, 0
    %p139 = por %p137, %p138
    %p140 = scmp.ne.s32.totalorder %s128, %s129
    %p141 = scmp.eq.s32.totalorder %s20, 7
    %p142 = por %p140, %p141
    %p144 = scmp.ne.s32.totalorder %s129, %s143
    %p145 = scmp.eq.s32.totalorder %s20, 0
    %p146 = por %p144, %p145
    %s148 = sadd.s32 %s147, 1
    %p151 = scmp.eq.s32.totalorder %s14, 7
    %p152 = scmp.ne.s32.totalorder %s147, %s149
    %p153 = scmp.eq.s32.totalorder %s14, 0
    %p154 = por %p152, %p153
    %p155 = scmp.ne.s32.totalorder %s147, %s149
    %p156 = scmp.eq.s32.totalorder %s19, 7
    %p157 = por %p155, %p156
    %p158 = scmp.ne.s32.totalorder %s149, %s150
    %p159 = scmp.eq.s32.totalorder %s19, 0
    %p160 = por %p158, %p159
    %p161 = scmp.ne.s32.totalorder %s149, %s150
    %p162 = scmp.eq.s32.totalorder %s20, 7
    %p163 = por %p161, %p162
    %p165 = scmp.ne.s32.totalorder %s150, %s164
    %p166 = scmp.eq.s32.totalorder %s20, 0
    %p167 = por %p165, %p166
    %s169 = sadd.s32 %s168, 1
    %p172 = scmp.eq.s32.totalorder %s14, 7
    %p173 = scmp.ne.s32.totalorder %s168, %s170
    %p174 = scmp.eq.s32.totalorder %s14, 0
    %p175 = por %p173, %p174
    %p176 = scmp.ne.s32.totalorder %s168, %s170
    %p177 = scmp.eq.s32.totalorder %s19, 7
    %p178 = por %p176, %p177
    %p179 = scmp.ne.s32.totalorder %s170, %s171
    %p180 = scmp.eq.s32.totalorder %s19, 0
    %p181 = por %p179, %p180
    %p182 = scmp.ne.s32.totalorder %s170, %s171
    %p183 = scmp.eq.s32.totalorder %s20, 7
    %p184 = por %p182, %p183
    %p186 = scmp.ne.s32.totalorder %s171, %s185
    %p187 = scmp.eq.s32.totalorder %s20, 0
    %p188 = por %p186, %p187
    %s190 = sadd.s32 %s189, 1
    %p193 = scmp.eq.s32.totalorder %s14, 7
    %p194 = scmp.ne.s32.totalorder %s189, %s191
    %p195 = scmp.eq.s32.totalorder %s14, 0
    %p196 = por %p194, %p195
    %p197 = scmp.ne.s32.totalorder %s189, %s191
    %p198 = scmp.eq.s32.totalorder %s19, 7
    %p199 = por %p197, %p198
    %p200 = scmp.ne.s32.totalorder %s191, %s192
    %p201 = scmp.eq.s32.totalorder %s19, 0
    %p202 = por %p200, %p201
    %p203 = scmp.ne.s32.totalorder %s191, %s192
    %p204 = scmp.eq.s32.totalorder %s20, 7
    %p205 = por %p203, %p204
    %p207 = scmp.ne.s32.totalorder %s192, %s206
    %p208 = scmp.eq.s32.totalorder %s20, 0
    %p209 = por %p207, %p208
    %s210 = ssub.s32 %s14, %s21
    %p211 = scmp.eq.s32.totalorder %s210, 0
    %s213 = sadd.s32 %s212, 1
    %s214 = scalar_select %p211, %s212, %s213
    %p217 = pneg %p211
    %p218 = scmp.eq.s32.totalorder %s14, 7
    %p219 = por %p217, %p218
    %p220 = scmp.ne.s32.totalorder %s212, %s215
    %p221 = scmp.eq.s32.totalorder %s14, 0
    %p222 = por %p220, %p221
    %p223 = scmp.ne.s32.totalorder %s212, %s215
    %p224 = scmp.eq.s32.totalorder %s19, 7
    %p225 = por %p223, %p224
    %p226 = scmp.ne.s32.totalorder %s215, %s216
    %p227 = scmp.eq.s32.totalorder %s19, 0
    %p228 = por %p226, %p227
    %p229 = scmp.ne.s32.totalorder %s215, %s216
    %p230 = scmp.eq.s32.totalorder %s20, 7
    %p231 = por %p229, %p230
    %p233 = scmp.ne.s32.totalorder %s216, %s232
    %p234 = scmp.eq.s32.totalorder %s20, 0
    %p235 = por %p233, %p234
    %p236 = scmp.le.s32.totalorder 1, %s14
    %p237 = scmp.lt.s32.totalorder %s14, 9
    %p238 = pnand %p236, %p237
    %p239 = pneg %p238
    // Predicated region
    $region9: #{gcn_shift_transformer.22} parent=5 // pred_check
      _
    $region10: #{gcn_shift_transformer.22} parent=5 // pred_check_branch
      %241 = sbr.rel (%p238) target = $region12
    $region11: #{gcn_shift_transformer.22} parent=5 // pred_region
      %s242 = ssub.s32 %s14, 1
      // Predicated region
      $region13: #{gcn_shift_transformer.22} parent=11 // pred_check
        %p243 = pneg %p139
      $region14: #{gcn_shift_transformer.22} parent=11 // pred_check_branch
        %245 = sbr.rel (%p243) target = $region16
      $region15: #{gcn_shift_transformer.22} parent=11 // pred_region
        _
      $region16: #{gcn_shift_transformer.22} parent=11 // pred_fallthru
        _
      // Predicated region
      $region17: #{gcn_shift_transformer.22} parent=11 // pred_check
        %p246 = pneg %p160
      $region18: #{gcn_shift_transformer.22} parent=11 // pred_check_branch
        %248 = sbr.rel (%p246) target = $region20
      $region19: #{gcn_shift_transformer.22} parent=11 // pred_region
        _
      $region20: #{gcn_shift_transformer.22} parent=11 // pred_fallthru
        _
      // Predicated region
      $region21: #{gcn_shift_transformer.22} parent=11 // pred_check
        %p249 = pneg %p181
      $region22: #{gcn_shift_transformer.22} parent=11 // pred_check_branch
        %251 = sbr.rel (%p249) target = $region24
      $region23: #{gcn_shift_transformer.22} parent=11 // pred_region
        _
      $region24: #{gcn_shift_transformer.22} parent=11 // pred_fallthru
        _
      // Predicated region
      $region25: #{gcn_shift_transformer.22} parent=11 // pred_check
        %p252 = pneg %p202
      $region26: #{gcn_shift_transformer.22} parent=11 // pred_check_branch
        %254 = sbr.rel (%p252) target = $region28
      $region27: #{gcn_shift_transformer.22} parent=11 // pred_region
        _
      $region28: #{gcn_shift_transformer.22} parent=11 // pred_fallthru
        _
    $region12: #{gcn_shift_transformer.22} parent=5 // pred_fallthru
      _
    %p255 = scmp.lt.s32.totalorder %s14, 8
    // Predicated region
    $region29: #{gcn_shift_transformer.22} parent=5 // pred_check
      %p256 = pneg %p255
    $region30: #{gcn_shift_transformer.22} parent=5 // pred_check_branch
      %258 = sbr.rel (%p256) target = $region32
    $region31: #{gcn_shift_transformer.22} parent=5 // pred_region
      // Predicated region
      $region33: #{gcn_shift_transformer.22} parent=31 // pred_check
        %p259 = pneg %p34
      $region34: #{gcn_shift_transformer.22} parent=31 // pred_check_branch
        %261 = sbr.rel (%p259) target = $region36
      $region35: #{gcn_shift_transformer.22} parent=31 // pred_region
        %s262 = smul.u32 4, %s14
        %p263 = scmp.lt.s32.totalorder %s262, 31
        %s264 = scalar_select %p263, %s262, 31
        %s265 = smul.addr %s264, 4
        %s266 = scalar_lea.vmem %s0, %s265
        %s267 = smul.u32 4, %s14
      $region36: #{gcn_shift_transformer.22} parent=31 // pred_fallthru
        _
      // Predicated region
      $region37: #{gcn_shift_transformer.22} parent=31 // pred_check
        %p268 = pneg %p60
      $region38: #{gcn_shift_transformer.22} parent=31 // pred_check_branch
        %270 = sbr.rel (%p268) target = $region40
      $region39: #{gcn_shift_transformer.22} parent=31 // pred_region
        %s271 = smul.u32 4, %s14
        %p272 = scmp.lt.s32.totalorder %s271, 31
        %s273 = scalar_select %p272, %s271, 31
        %s274 = smul.addr %s273, 4
        %s275 = scalar_lea.vmem %s1, %s274
        %s276 = smul.u32 4, %s14
      $region40: #{gcn_shift_transformer.22} parent=31 // pred_fallthru
        _
      // Predicated region
      $region41: #{gcn_shift_transformer.22} parent=31 // pred_check
        %p277 = pneg %p86
      $region42: #{gcn_shift_transformer.22} parent=31 // pred_check_branch
        %279 = sbr.rel (%p277) target = $region44
      $region43: #{gcn_shift_transformer.22} parent=31 // pred_region
        %s280 = smul.u32 4, %s14
        %p281 = scmp.lt.s32.totalorder %s280, 31
        %s282 = scalar_select %p281, %s280, 31
        %s283 = smul.addr %s282, 4
        %s284 = scalar_lea.vmem %s2, %s283
        %s285 = smul.u32 4, %s14
      $region44: #{gcn_shift_transformer.22} parent=31 // pred_fallthru
        _
      // Predicated region
      $region45: #{gcn_shift_transformer.22} parent=31 // pred_check
        %p286 = pneg %p112
      $region46: #{gcn_shift_transformer.22} parent=31 // pred_check_branch
        %288 = sbr.rel (%p286) target = $region48
      $region47: #{gcn_shift_transformer.22} parent=31 // pred_region
        %p289 = scmp.lt.s32.totalorder %s14, 7
        %s290 = scalar_select %p289, %s14, 7
        %s291 = smul.addr %s290, 4
        %s292 = scalar_lea.vmem %s3, %s291
      $region48: #{gcn_shift_transformer.22} parent=31 // pred_fallthru
        _
    $region32: #{gcn_shift_transformer.22} parent=5 // pred_fallthru
      _
    %p293 = scmp.le.s32.totalorder 1, %s14
    %p294 = scmp.lt.s32.totalorder %s14, 9
    %p295 = pnand %p293, %p294
    %p296 = pneg %p295
    // Predicated region
    $region49: #{gcn_shift_transformer.22} parent=5 // pred_check
      _
    $region50: #{gcn_shift_transformer.22} parent=5 // pred_check_branch
      %298 = sbr.rel (%p295) target = $region52
    $region51: #{gcn_shift_transformer.22} parent=5 // pred_region
      %s299 = ssub.s32 %s14, 1
      %s300 = smul.u32 4, %s19
      %p301 = scmp.lt.s32.totalorder %s300, 31
      %s302 = scalar_select %p301, %s300, 31
      %s303 = smul.addr %s302, 4
      %s304 = scalar_lea.vmem %s0, %s303
      %p305 = pneg %p40
      %p306 = pneg %p37
      %s307 = smul.u32 4, %s19
      %p308 = scmp.lt.s32.totalorder %s307, 31
      %s309 = scalar_select %p308, %s307, 31
      %s310 = smul.addr %s309, 4
      %s311 = scalar_lea.vmem %s1, %s310
      %p312 = pneg %p66
      %p313 = pneg %p63
      %s314 = smul.u32 4, %s19
      %p315 = scmp.lt.s32.totalorder %s314, 31
      %s316 = scalar_select %p315, %s314, 31
      %s317 = smul.addr %s316, 4
      %s318 = scalar_lea.vmem %s2, %s317
      %p319 = pneg %p92
      %p320 = pneg %p89
      %p321 = scmp.lt.s32.totalorder %s19, 7
      %s322 = scalar_select %p321, %s19, 7
      %s323 = smul.addr %s322, 4
      %s324 = scalar_lea.vmem %s3, %s323
      %p325 = pneg %p118
      %p326 = pneg %p115
      %p327 = pneg %p139
      %p328 = pneg %p136
      %p329 = pneg %p160
      %p330 = pneg %p157
      %p331 = pneg %p181
      %p332 = pneg %p178
      %p333 = pneg %p202
      %p334 = pneg %p199
      %p335 = pneg %p228
      %p336 = pneg %p225
      %p337 = scmp.lt.s32.totalorder %s19, 7
      %s338 = scalar_select %p337, %s19, 7
      %s339 = smul.addr %s338, 4
      %s340 = scalar_lea.vmem %s8, %s339
      %s341 = smul.u32 4, %s19
      %p342 = scmp.lt.s32.totalorder %s341, 31
      %s343 = scalar_select %p342, %s341, 31
      %s344 = smul.addr %s343, 4
      %s345 = scalar_lea.vmem %s0, %s344
      %s346 = smul.u32 4, %s19
      %s347 = smul.u32 4, %s19
      %p348 = scmp.lt.s32.totalorder %s347, 31
      %s349 = scalar_select %p348, %s347, 31
      %s350 = smul.addr %s349, 4
      %s351 = scalar_lea.vmem %s1, %s350
      %s352 = smul.u32 4, %s19
      %s353 = smul.u32 4, %s19
      %p354 = scmp.lt.s32.totalorder %s353, 31
      %s355 = scalar_select %p354, %s353, 31
      %s356 = smul.addr %s355, 4
      %s357 = scalar_lea.vmem %s2, %s356
      %s358 = smul.u32 4, %s19
      %p359 = scmp.lt.s32.totalorder %s19, 7
      %s360 = scalar_select %p359, %s19, 7
      %s361 = smul.addr %s360, 4
      %s362 = scalar_lea.vmem %s3, %s361
      %p363 = scmp.lt.s32.totalorder %s19, 7
      %s364 = scalar_select %p363, %s19, 7
      %s365 = smul.addr %s364, 4
      %s366 = scalar_lea.vmem %s8, %s365
      %v368 = vld [vmem:[%s362] sm:$0xf]
      %v369 = vunpack.c.l.bf16 %v368
      %v370 = vld [vmem:[%s5] sm:$0x1]
      %v372 = vlaneseq
      %v373 = vshrl.u32 %v372, 7
      %v374 = vsub.s32 0, %v373
      %v375 = vrot.slane %v370, %v374
      %v377 = vadd.f32 %v369, %v375
      %v378 = vld [vmem:[%s345] sm:$0xf]
      %v379 = vld [vmem:[%s351] sm:$0xf]
      %v380 = vld [vmem:[%s357] sm:$0xf]
      %vm381 = vcmask 64512
      %v383 = vsel %vm381, %v378, 0
      %v386 = vsel %vm381, %v379, 0
      %388 = vmatprep.subr.bf16.mxu0 0
      %389 = vmatpush1.bf16.xpose.msra.mxu0 %v386
      %390 = vmatprep.subr.bf16.mxu0 0
      %391 = vmatpush1.bf16.xpose.msra.mxu0 0
      %392 = vmatprep.subr.bf16.mxu0 0
      %393 = vmatpush1.bf16.xpose.msra.mxu0 0
      %394 = vmatprep.subr.bf16.mxu0 0
      %395 = vmatpush1.bf16.xpose.msra.mxu0 0
      %396 = vmatprep.subr.bf16.mxu0 0
      %397 = vmatpush1.bf16.xpose.msra.mxu0 0
      %398 = vmatprep.subr.bf16.mxu0 0
      %399 = vmatpush1.bf16.xpose.msra.mxu0 0
      %400 = vmatprep.subr.bf16.mxu0 0
      %401 = vmatpush1.bf16.xpose.msra.mxu0 0
      %402 = vmatprep.subr.bf16.mxu0 0
      %403 = vmatpush1.bf16.xpose.msra.mxu0 0
      %404 = vmatprep.subr.bf16.mxu0 0
      %405 = vmatpush1.bf16.xpose.msra.mxu0 0
      %406 = vmatprep.subr.bf16.mxu0 0
      %407 = vmatpush1.bf16.xpose.msra.mxu0 0
      %408 = vmatprep.subr.bf16.mxu0 0
      %409 = vmatpush1.bf16.xpose.msra.mxu0 0
      %410 = vmatprep.subr.bf16.mxu0 0
      %411 = vmatpush1.bf16.xpose.msra.mxu0 0
      %412 = vmatprep.subr.bf16.mxu0 0
      %413 = vmatpush1.bf16.xpose.msra.mxu0 0
      %414 = vmatprep.subr.bf16.mxu0 0
      %415 = vmatpush1.bf16.xpose.msra.mxu0 0
      %416 = vmatprep.subr.bf16.mxu0 0
      %417 = vmatpush1.bf16.xpose.msra.mxu0 0
      %418 = vmatprep.subr.bf16.mxu0 0
      %419 = vmatpush1.bf16.xpose.msra.mxu0 0
      %420 = vmatprep.mubr.bf16.mxu0 0
      %421 = vmatmul.mubr.bf16.gmra.mrb[0].mxu0 %v383
      %v422 = vpop.f32.mrb[0].mxu0
      %v423 = vadd.f32 0.0, %v422
      %v424 = vpop.f32.mrb[0].mxu0
      %v425 = vpop.f32.mrb[0].mxu0
      %v426 = vpop.f32.mrb[0].mxu0
      %427 = vdwg.mxu0
      %v428 = vmul.f32 %v423, 0.35355338
      %v429 = vsel %vm381, %v428, -inf
      %430 = vmax.xlane.f32.xlu0 %v429
      %v431 = vpop.xlane.xlu0 %430
      %v432 = vsub.f32 %v428, %v431
      %v433 = vmul.f32 %v432, 1.442695
      %v434 = vpow.pop %v433
      %v435 = vsel %vm381, %v434, 0.0
      %436 = vadd.xlane.f32.xlu0 %v435
      %v437 = vpop.xlane.xlu0 %436
      %v438 = vrcp.pop %v437
      %v439 = vmul.f32 %v434, %v438
      %v440 = vpack.c.bf16 %v439, %v439
      %v442 = vsel %vm381, %v440, 0
      %vm444 = vcmask 1043456
      %v446 = vsel %vm444, %v380, 0
      %448 = vmatprep.subr.bf16.mxu0 0
      %449 = vmatpush1.bf16.msra.mxu0 %v446
      %450 = vmatprep.subr.bf16.mxu0 0
      %451 = vmatpush1.bf16.msra.mxu0 0
      %452 = vmatprep.subr.bf16.mxu0 0
      %453 = vmatpush1.bf16.msra.mxu0 0
      %454 = vmatprep.subr.bf16.mxu0 0
      %455 = vmatpush1.bf16.msra.mxu0 0
      %456 = vmatprep.subr.bf16.mxu0 0
      %457 = vmatpush1.bf16.msra.mxu0 0
      %458 = vmatprep.subr.bf16.mxu0 0
      %459 = vmatpush1.bf16.msra.mxu0 0
      %460 = vmatprep.subr.bf16.mxu0 0
      %461 = vmatpush1.bf16.msra.mxu0 0
      %462 = vmatprep.subr.bf16.mxu0 0
      %463 = vmatpush1.bf16.msra.mxu0 0
      %464 = vmatprep.subr.bf16.mxu0 0
      %465 = vmatpush1.bf16.msra.mxu0 0
      %466 = vmatprep.subr.bf16.mxu0 0
      %467 = vmatpush1.bf16.msra.mxu0 0
      %468 = vmatprep.subr.bf16.mxu0 0
      %469 = vmatpush1.bf16.msra.mxu0 0
      %470 = vmatprep.subr.bf16.mxu0 0
      %471 = vmatpush1.bf16.msra.mxu0 0
      %472 = vmatprep.subr.bf16.mxu0 0
      %473 = vmatpush1.bf16.msra.mxu0 0
      %474 = vmatprep.subr.bf16.mxu0 0
      %475 = vmatpush1.bf16.msra.mxu0 0
      %476 = vmatprep.subr.bf16.mxu0 0
      %477 = vmatpush1.bf16.msra.mxu0 0
      %478 = vmatprep.subr.bf16.mxu0 0
      %479 = vmatpush1.bf16.msra.mxu0 0
      %480 = vmatprep.mubr.bf16.mxu0 0
      %481 = vmatmul.mubr.bf16.gmra.mrb[0].mxu0 %v442
      %v482 = vpop.f32.mrb[0].mxu0
      %v483 = vadd.f32 0.0, %v482
      %v484 = vpop.f32.mrb[0].mxu0
      %v485 = vpop.f32.mrb[0].mxu0
      %v486 = vpop.f32.mrb[0].mxu0
      %487 = vdwg.mxu0
      %v488 = vpack.c.bf16 %v483, %v483
      %v489 = vld [vmem:[%s4] sm:$0xf]
      %v491 = vsel %vm381, %v488, 0
      %v494 = vsel %vm444, %v489, 0
      %496 = vmatprep.subr.bf16.mxu0 0
      %497 = vmatpush1.bf16.msra.mxu0 %v494
      %498 = vmatprep.subr.bf16.mxu0 0
      %499 = vmatpush1.bf16.msra.mxu0 0
      %500 = vmatprep.subr.bf16.mxu0 0
      %501 = vmatpush1.bf16.msra.mxu0 0
      %502 = vmatprep.subr.bf16.mxu0 0
      %503 = vmatpush1.bf16.msra.mxu0 0
      %504 = vmatprep.subr.bf16.mxu0 0
      %505 = vmatpush1.bf16.msra.mxu0 0
      %506 = vmatprep.subr.bf16.mxu0 0
      %507 = vmatpush1.bf16.msra.mxu0 0
      %508 = vmatprep.subr.bf16.mxu0 0
      %509 = vmatpush1.bf16.msra.mxu0 0
      %510 = vmatprep.subr.bf16.mxu0 0
      %511 = vmatpush1.bf16.msra.mxu0 0
      %512 = vmatprep.subr.bf16.mxu0 0
      %513 = vmatpush1.bf16.msra.mxu0 0
      %514 = vmatprep.subr.bf16.mxu0 0
      %515 = vmatpush1.bf16.msra.mxu0 0
      %516 = vmatprep.subr.bf16.mxu0 0
      %517 = vmatpush1.bf16.msra.mxu0 0
      %518 = vmatprep.subr.bf16.mxu0 0
      %519 = vmatpush1.bf16.msra.mxu0 0
      %520 = vmatprep.subr.bf16.mxu0 0
      %521 = vmatpush1.bf16.msra.mxu0 0
      %522 = vmatprep.subr.bf16.mxu0 0
      %523 = vmatpush1.bf16.msra.mxu0 0
      %524 = vmatprep.subr.bf16.mxu0 0
      %525 = vmatpush1.bf16.msra.mxu0 0
      %526 = vmatprep.subr.bf16.mxu0 0
      %527 = vmatpush1.bf16.msra.mxu0 0
      %528 = vmatprep.mubr.bf16.mxu0 0
      %529 = vmatmul.mubr.bf16.gmra.mrb[0].mxu0 %v491
      %v530 = vpop.f32.mrb[0].mxu0
      %v531 = vadd.f32 0.0, %v530
      %v532 = vpop.f32.mrb[0].mxu0
      %v533 = vpop.f32.mrb[0].mxu0
      %v534 = vpop.f32.mrb[0].mxu0
      %535 = vdwg.mxu0
      %v536 = vadd.f32 %v377, %v531
      %s537 = scalar_lea.vmem %s345, 4
      %v538 = vld [vmem:[%s537] sm:$0xf]
      %s539 = scalar_lea.vmem %s351, 4
      %v540 = vld [vmem:[%s539] sm:$0xf]
      %s541 = scalar_lea.vmem %s357, 4
      %v542 = vld [vmem:[%s541] sm:$0xf]
      %v544 = vsel %vm381, %v538, 0
      %v547 = vsel %vm381, %v540, 0
      %549 = vmatprep.subr.bf16.mxu0 0
      %550 = vmatpush1.bf16.xpose.msra.mxu0 %v547
      %551 = vmatprep.subr.bf16.mxu0 0
      %552 = vmatpush1.bf16.xpose.msra.mxu0 0
      %553 = vmatprep.subr.bf16.mxu0 0
      %554 = vmatpush1.bf16.xpose.msra.mxu0 0
      %555 = vmatprep.subr.bf16.mxu0 0
      %556 = vmatpush1.bf16.xpose.msra.mxu0 0
      %557 = vmatprep.subr.bf16.mxu0 0
      %558 = vmatpush1.bf16.xpose.msra.mxu0 0
      %559 = vmatprep.subr.bf16.mxu0 0
      %560 = vmatpush1.bf16.xpose.msra.mxu0 0
      %561 = vmatprep.subr.bf16.mxu0 0
      %562 = vmatpush1.bf16.xpose.msra.mxu0 0
      %563 = vmatprep.subr.bf16.mxu0 0
      %564 = vmatpush1.bf16.xpose.msra.mxu0 0
      %565 = vmatprep.subr.bf16.mxu0 0
      %566 = vmatpush1.bf16.xpose.msra.mxu0 0
      %567 = vmatprep.subr.bf16.mxu0 0
      %568 = vmatpush1.bf16.xpose.msra.mxu0 0
      %569 = vmatprep.subr.bf16.mxu0 0
      %570 = vmatpush1.bf16.xpose.msra.mxu0 0
      %571 = vmatprep.subr.bf16.mxu0 0
      %572 = vmatpush1.bf16.xpose.msra.mxu0 0
      %573 = vmatprep.subr.bf16.mxu0 0
      %574 = vmatpush1.bf16.xpose.msra.mxu0 0
      %575 = vmatprep.subr.bf16.mxu0 0
      %576 = vmatpush1.bf16.xpose.msra.mxu0 0
      %577 = vmatprep.subr.bf16.mxu0 0
      %578 = vmatpush1.bf16.xpose.msra.mxu0 0
      %579 = vmatprep.subr.bf16.mxu0 0
      %580 = vmatpush1.bf16.xpose.msra.mxu0 0
      %581 = vmatprep.mubr.bf16.mxu0 0
      %582 = vmatmul.mubr.bf16.gmra.mrb[0].mxu0 %v544
      %v583 = vpop.f32.mrb[0].mxu0
      %v584 = vadd.f32 0.0, %v583
      %v585 = vpop.f32.mrb[0].mxu0
      %v586 = vpop.f32.mrb[0].mxu0
      %v587 = vpop.f32.mrb[0].mxu0
      %588 = vdwg.mxu0
      %v589 = vmul.f32 %v584, 0.35355338
      %v590 = vsel %vm381, %v589, -inf
      %591 = vmax.xlane.f32.xlu0 %v590
      %v592 = vpop.xlane.xlu0 %591
      %v593 = vsub.f32 %v589, %v592
      %v594 = vmul.f32 %v593, 1.442695
      %v595 = vpow.pop %v594
      %v596 = vsel %vm381, %v595, 0.0
      %597 = vadd.xlane.f32.xlu0 %v596
      %v598 = vpop.xlane.xlu0 %597
      %v599 = vrcp.pop %v598
      %v600 = vmul.f32 %v595, %v599
      %v601 = vpack.c.bf16 %v600, %v600
      %v603 = vsel %vm381, %v601, 0
      %v606 = vsel %vm444, %v542, 0
      %608 = vmatprep.subr.bf16.mxu0 0
      %609 = vmatpush1.bf16.msra.mxu0 %v606
      %610 = vmatprep.subr.bf16.mxu0 0
      %611 = vmatpush1.bf16.msra.mxu0 0
      %612 = vmatprep.subr.bf16.mxu0 0
      %613 = vmatpush1.bf16.msra.mxu0 0
      %614 = vmatprep.subr.bf16.mxu0 0
      %615 = vmatpush1.bf16.msra.mxu0 0
      %616 = vmatprep.subr.bf16.mxu0 0
      %617 = vmatpush1.bf16.msra.mxu0 0
      %618 = vmatprep.subr.bf16.mxu0 0
      %619 = vmatpush1.bf16.msra.mxu0 0
      %620 = vmatprep.subr.bf16.mxu0 0
      %621 = vmatpush1.bf16.msra.mxu0 0
      %622 = vmatprep.subr.bf16.mxu0 0
      %623 = vmatpush1.bf16.msra.mxu0 0
      %624 = vmatprep.subr.bf16.mxu0 0
      %625 = vmatpush1.bf16.msra.mxu0 0
      %626 = vmatprep.subr.bf16.mxu0 0
      %627 = vmatpush1.bf16.msra.mxu0 0
      %628 = vmatprep.subr.bf16.mxu0 0
      %629 = vmatpush1.bf16.msra.mxu0 0
      %630 = vmatprep.subr.bf16.mxu0 0
      %631 = vmatpush1.bf16.msra.mxu0 0
      %632 = vmatprep.subr.bf16.mxu0 0
      %633 = vmatpush1.bf16.msra.mxu0 0
      %634 = vmatprep.subr.bf16.mxu0 0
      %635 = vmatpush1.bf16.msra.mxu0 0
      %636 = vmatprep.subr.bf16.mxu0 0
      %637 = vmatpush1.bf16.msra.mxu0 0
      %638 = vmatprep.subr.bf16.mxu0 0
      %639 = vmatpush1.bf16.msra.mxu0 0
      %640 = vmatprep.mubr.bf16.mxu0 0
      %641 = vmatmul.mubr.bf16.gmra.mrb[0].mxu0 %v603
      %v642 = vpop.f32.mrb[0].mxu0
      %v643 = vadd.f32 0.0, %v642
      %v644 = vpop.f32.mrb[0].mxu0
      %v645 = vpop.f32.mrb[0].mxu0
      %v646 = vpop.f32.mrb[0].mxu0
      %647 = vdwg.mxu0
      %v648 = vpack.c.bf16 %v643, %v643
      %s649 = scalar_lea.vmem %s4, 4
      %v650 = vld [vmem:[%s649] sm:$0xf]
      %v652 = vsel %vm381, %v648, 0
      %v655 = vsel %vm444, %v650, 0
      %657 = vmatprep.subr.bf16.mxu0 0
      %658 = vmatpush1.bf16.msra.mxu0 %v655
      %659 = vmatprep.subr.bf16.mxu0 0
      %660 = vmatpush1.bf16.msra.mxu0 0
      %661 = vmatprep.subr.bf16.mxu0 0
      %662 = vmatpush1.bf16.msra.mxu0 0
      %663 = vmatprep.subr.bf16.mxu0 0
      %664 = vmatpush1.bf16.msra.mxu0 0
      %665 = vmatprep.subr.bf16.mxu0 0
      %666 = vmatpush1.bf16.msra.mxu0 0
      %667 = vmatprep.subr.bf16.mxu0 0
      %668 = vmatpush1.bf16.msra.mxu0 0
      %669 = vmatprep.subr.bf16.mxu0 0
      %670 = vmatpush1.bf16.msra.mxu0 0
      %671 = vmatprep.subr.bf16.mxu0 0
      %672 = vmatpush1.bf16.msra.mxu0 0
      %673 = vmatprep.subr.bf16.mxu0 0
      %674 = vmatpush1.bf16.msra.mxu0 0
      %675 = vmatprep.subr.bf16.mxu0 0
      %676 = vmatpush1.bf16.msra.mxu0 0
      %677 = vmatprep.subr.bf16.mxu0 0
      %678 = vmatpush1.bf16.msra.mxu0 0
      %679 = vmatprep.subr.bf16.mxu0 0
      %680 = vmatpush1.bf16.msra.mxu0 0
      %681 = vmatprep.subr.bf16.mxu0 0
      %682 = vmatpush1.bf16.msra.mxu0 0
      %683 = vmatprep.subr.bf16.mxu0 0
      %684 = vmatpush1.bf16.msra.mxu0 0
      %685 = vmatprep.subr.bf16.mxu0 0
      %686 = vmatpush1.bf16.msra.mxu0 0
      %687 = vmatprep.subr.bf16.mxu0 0
      %688 = vmatpush1.bf16.msra.mxu0 0
      %689 = vmatprep.mubr.bf16.mxu0 0
      %690 = vmatmul.mubr.bf16.gmra.mrb[0].mxu0 %v652
      %v691 = vpop.f32.mrb[0].mxu0
      %v692 = vadd.f32 0.0, %v691
      %v693 = vpop.f32.mrb[0].mxu0
      %v694 = vpop.f32.mrb[0].mxu0
      %v695 = vpop.f32.mrb[0].mxu0
      %696 = vdwg.mxu0
      %v697 = vadd.f32 %v536, %v692
      %s698 = scalar_lea.vmem %s345, 8
      %v699 = vld [vmem:[%s698] sm:$0xf]
      %s700 = scalar_lea.vmem %s351, 8
      %v701 = vld [vmem:[%s700] sm:$0xf]
      %s702 = scalar_lea.vmem %s357, 8
      %v703 = vld [vmem:[%s702] sm:$0xf]
      %v705 = vsel %vm381, %v699, 0
      %v708 = vsel %vm381, %v701, 0
      %710 = vmatprep.subr.bf16.mxu0 0
      %711 = vmatpush1.bf16.xpose.msra.mxu0 %v708
      %712 = vmatprep.subr.bf16.mxu0 0
      %713 = vmatpush1.bf16.xpose.msra.mxu0 0
      %714 = vmatprep.subr.bf16.mxu0 0
      %715 = vmatpush1.bf16.xpose.msra.mxu0 0
      %716 = vmatprep.subr.bf16.mxu0 0
      %717 = vmatpush1.bf16.xpose.msra.mxu0 0
      %718 = vmatprep.subr.bf16.mxu0 0
      %719 = vmatpush1.bf16.xpose.msra.mxu0 0
      %720 = vmatprep.subr.bf16.mxu0 0
      %721 = vmatpush1.bf16.xpose.msra.mxu0 0
      %722 = vmatprep.subr.bf16.mxu0 0
      %723 = vmatpush1.bf16.xpose.msra.mxu0 0
      %724 = vmatprep.subr.bf16.mxu0 0
      %725 = vmatpush1.bf16.xpose.msra.mxu0 0
      %726 = vmatprep.subr.bf16.mxu0 0
      %727 = vmatpush1.bf16.xpose.msra.mxu0 0
      %728 = vmatprep.subr.bf16.mxu0 0
      %729 = vmatpush1.bf16.xpose.msra.mxu0 0
      %730 = vmatprep.subr.bf16.mxu0 0
      %731 = vmatpush1.bf16.xpose.msra.mxu0 0
      %732 = vmatprep.subr.bf16.mxu0 0
      %733 = vmatpush1.bf16.xpose.msra.mxu0 0
      %734 = vmatprep.subr.bf16.mxu0 0
      %735 = vmatpush1.bf16.xpose.msra.mxu0 0
      %736 = vmatprep.subr.bf16.mxu0 0
      %737 = vmatpush1.bf16.xpose.msra.mxu0 0
      %738 = vmatprep.subr.bf16.mxu0 0
      %739 = vmatpush1.bf16.xpose.msra.mxu0 0
      %740 = vmatprep.subr.bf16.mxu0 0
      %741 = vmatpush1.bf16.xpose.msra.mxu0 0
      %742 = vmatprep.mubr.bf16.mxu0 0
      %743 = vmatmul.mubr.bf16.gmra.mrb[0].mxu0 %v705
      %v744 = vpop.f32.mrb[0].mxu0
      %v745 = vadd.f32 0.0, %v744
      %v746 = vpop.f32.mrb[0].mxu0
      %v747 = vpop.f32.mrb[0].mxu0
      %v748 = vpop.f32.mrb[0].mxu0
      %749 = vdwg.mxu0
      %v750 = vmul.f32 %v745, 0.35355338
      %v751 = vsel %vm381, %v750, -inf
      %752 = vmax.xlane.f32.xlu0 %v751
      %v753 = vpop.xlane.xlu0 %752
      %v754 = vsub.f32 %v750, %v753
      %v755 = vmul.f32 %v754, 1.442695
      %v756 = vpow.pop %v755
      %v757 = vsel %vm381, %v756, 0.0
      %758 = vadd.xlane.f32.xlu0 %v757
      %v759 = vpop.xlane.xlu0 %758
      %v760 = vrcp.pop %v759
      %v761 = vmul.f32 %v756, %v760
      %v762 = vpack.c.bf16 %v761, %v761
      %v764 = vsel %vm381, %v762, 0
      %v767 = vsel %vm444, %v703, 0
      %769 = vmatprep.subr.bf16.mxu0 0
      %770 = vmatpush1.bf16.msra.mxu0 %v767
      %771 = vmatprep.subr.bf16.mxu0 0
      %772 = vmatpush1.bf16.msra.mxu0 0
      %773 = vmatprep.subr.bf16.mxu0 0
      %774 = vmatpush1.bf16.msra.mxu0 0
      %775 = vmatprep.subr.bf16.mxu0 0
      %776 = vmatpush1.bf16.msra.mxu0 0
      %777 = vmatprep.subr.bf16.mxu0 0
      %778 = vmatpush1.bf16.msra.mxu0 0
      %779 = vmatprep.subr.bf16.mxu0 0
      %780 = vmatpush1.bf16.msra.mxu0 0
      %781 = vmatprep.subr.bf16.mxu0 0
      %782 = vmatpush1.bf16.msra.mxu0 0
      %783 = vmatprep.subr.bf16.mxu0 0
      %784 = vmatpush1.bf16.msra.mxu0 0
      %785 = vmatprep.subr.bf16.mxu0 0
      %786 = vmatpush1.bf16.msra.mxu0 0
      %787 = vmatprep.subr.bf16.mxu0 0
      %788 = vmatpush1.bf16.msra.mxu0 0
      %789 = vmatprep.subr.bf16.mxu0 0
      %790 = vmatpush1.bf16.msra.mxu0 0
      %791 = vmatprep.subr.bf16.mxu0 0
      %792 = vmatpush1.bf16.msra.mxu0 0
      %793 = vmatprep.subr.bf16.mxu0 0
      %794 = vmatpush1.bf16.msra.mxu0 0
      %795 = vmatprep.subr.bf16.mxu0 0
      %796 = vmatpush1.bf16.msra.mxu0 0
      %797 = vmatprep.subr.bf16.mxu0 0
      %798 = vmatpush1.bf16.msra.mxu0 0
      %799 = vmatprep.subr.bf16.mxu0 0
      %800 = vmatpush1.bf16.msra.mxu0 0
      %801 = vmatprep.mubr.bf16.mxu0 0
      %802 = vmatmul.mubr.bf16.gmra.mrb[0].mxu0 %v764
      %v803 = vpop.f32.mrb[0].mxu0
      %v804 = vadd.f32 0.0, %v803
      %v805 = vpop.f32.mrb[0].mxu0
      %v806 = vpop.f32.mrb[0].mxu0
      %v807 = vpop.f32.mrb[0].mxu0
      %808 = vdwg.mxu0
      %v809 = vpack.c.bf16 %v804, %v804
      %s810 = scalar_lea.vmem %s4, 8
      %v811 = vld [vmem:[%s810] sm:$0xf]
      %v813 = vsel %vm381, %v809, 0
      %v816 = vsel %vm444, %v811, 0
      %818 = vmatprep.subr.bf16.mxu0 0
      %819 = vmatpush1.bf16.msra.mxu0 %v816
      %820 = vmatprep.subr.bf16.mxu0 0
      %821 = vmatpush1.bf16.msra.mxu0 0
      %822 = vmatprep.subr.bf16.mxu0 0
      %823 = vmatpush1.bf16.msra.mxu0 0
      %824 = vmatprep.subr.bf16.mxu0 0
      %825 = vmatpush1.bf16.msra.mxu0 0
      %826 = vmatprep.subr.bf16.mxu0 0
      %827 = vmatpush1.bf16.msra.mxu0 0
      %828 = vmatprep.subr.bf16.mxu0 0
      %829 = vmatpush1.bf16.msra.mxu0 0
      %830 = vmatprep.subr.bf16.mxu0 0
      %831 = vmatpush1.bf16.msra.mxu0 0
      %832 = vmatprep.subr.bf16.mxu0 0
      %833 = vmatpush1.bf16.msra.mxu0 0
      %834 = vmatprep.subr.bf16.mxu0 0
      %835 = vmatpush1.bf16.msra.mxu0 0
      %836 = vmatprep.subr.bf16.mxu0 0
      %837 = vmatpush1.bf16.msra.mxu0 0
      %838 = vmatprep.subr.bf16.mxu0 0
      %839 = vmatpush1.bf16.msra.mxu0 0
      %840 = vmatprep.subr.bf16.mxu0 0
      %841 = vmatpush1.bf16.msra.mxu0 0
      %842 = vmatprep.subr.bf16.mxu0 0
      %843 = vmatpush1.bf16.msra.mxu0 0
      %844 = vmatprep.subr.bf16.mxu0 0
      %845 = vmatpush1.bf16.msra.mxu0 0
      %846 = vmatprep.subr.bf16.mxu0 0
      %847 = vmatpush1.bf16.msra.mxu0 0
      %848 = vmatprep.subr.bf16.mxu0 0
      %849 = vmatpush1.bf16.msra.mxu0 0
      %850 = vmatprep.mubr.bf16.mxu0 0
      %851 = vmatmul.mubr.bf16.gmra.mrb[0].mxu0 %v813
      %v852 = vpop.f32.mrb[0].mxu0
      %v853 = vadd.f32 0.0, %v852
      %v854 = vpop.f32.mrb[0].mxu0
      %v855 = vpop.f32.mrb[0].mxu0
      %v856 = vpop.f32.mrb[0].mxu0
      %857 = vdwg.mxu0
      %v858 = vadd.f32 %v697, %v853
      %s859 = scalar_lea.vmem %s345, 12
      %v860 = vld [vmem:[%s859] sm:$0xf]
      %s861 = scalar_lea.vmem %s351, 12
      %v862 = vld [vmem:[%s861] sm:$0xf]
      %s863 = scalar_lea.vmem %s357, 12
      %v864 = vld [vmem:[%s863] sm:$0xf]
      %v866 = vsel %vm381, %v860, 0
      %v869 = vsel %vm381, %v862, 0
      %871 = vmatprep.subr.bf16.mxu0 0
      %872 = vmatpush1.bf16.xpose.msra.mxu0 %v869
      %873 = vmatprep.subr.bf16.mxu0 0
      %874 = vmatpush1.bf16.xpose.msra.mxu0 0
      %875 = vmatprep.subr.bf16.mxu0 0
      %876 = vmatpush1.bf16.xpose.msra.mxu0 0
      %877 = vmatprep.subr.bf16.mxu0 0
      %878 = vmatpush1.bf16.xpose.msra.mxu0 0
      %879 = vmatprep.subr.bf16.mxu0 0
      %880 = vmatpush1.bf16.xpose.msra.mxu0 0
      %881 = vmatprep.subr.bf16.mxu0 0
      %882 = vmatpush1.bf16.xpose.msra.mxu0 0
      %883 = vmatprep.subr.bf16.mxu0 0
      %884 = vmatpush1.bf16.xpose.msra.mxu0 0
      %885 = vmatprep.subr.bf16.mxu0 0
      %886 = vmatpush1.bf16.xpose.msra.mxu0 0
      %887 = vmatprep.subr.bf16.mxu0 0
      %888 = vmatpush1.bf16.xpose.msra.mxu0 0
      %889 = vmatprep.subr.bf16.mxu0 0
      %890 = vmatpush1.bf16.xpose.msra.mxu0 0
      %891 = vmatprep.subr.bf16.mxu0 0
      %892 = vmatpush1.bf16.xpose.msra.mxu0 0
      %893 = vmatprep.subr.bf16.mxu0 0
      %894 = vmatpush1.bf16.xpose.msra.mxu0 0
      %895 = vmatprep.subr.bf16.mxu0 0
      %896 = vmatpush1.bf16.xpose.msra.mxu0 0
      %897 = vmatprep.subr.bf16.mxu0 0
      %898 = vmatpush1.bf16.xpose.msra.mxu0 0
      %899 = vmatprep.subr.bf16.mxu0 0
      %900 = vmatpush1.bf16.xpose.msra.mxu0 0
      %901 = vmatprep.subr.bf16.mxu0 0
      %902 = vmatpush1.bf16.xpose.msra.mxu0 0
      %903 = vmatprep.mubr.bf16.mxu0 0
      %904 = vmatmul.mubr.bf16.gmra.mrb[0].mxu0 %v866
      %v905 = vpop.f32.mrb[0].mxu0
      %v906 = vadd.f32 0.0, %v905
      %v907 = vpop.f32.mrb[0].mxu0
      %v908 = vpop.f32.mrb[0].mxu0
      %v909 = vpop.f32.mrb[0].mxu0
      %910 = vdwg.mxu0
      %v911 = vmul.f32 %v906, 0.35355338
      %v912 = vsel %vm381, %v911, -inf
      %913 = vmax.xlane.f32.xlu0 %v912
      %v914 = vpop.xlane.xlu0 %913
      %v915 = vsub.f32 %v911, %v914
      %v916 = vmul.f32 %v915, 1.442695
      %v917 = vpow.pop %v916
      %v918 = vsel %vm381, %v917, 0.0
      %919 = vadd.xlane.f32.xlu0 %v918
      %v920 = vpop.xlane.xlu0 %919
      %v921 = vrcp.pop %v920
      %v922 = vmul.f32 %v917, %v921
      %v923 = vpack.c.bf16 %v922, %v922
      %v925 = vsel %vm381, %v923, 0
      %v928 = vsel %vm444, %v864, 0
      %930 = vmatprep.subr.bf16.mxu0 0
      %931 = vmatpush1.bf16.msra.mxu0 %v928
      %932 = vmatprep.subr.bf16.mxu0 0
      %933 = vmatpush1.bf16.msra.mxu0 0
      %934 = vmatprep.subr.bf16.mxu0 0
      %935 = vmatpush1.bf16.msra.mxu0 0
      %936 = vmatprep.subr.bf16.mxu0 0
      %937 = vmatpush1.bf16.msra.mxu0 0
      %938 = vmatprep.subr.bf16.mxu0 0
      %939 = vmatpush1.bf16.msra.mxu0 0
      %940 = vmatprep.subr.bf16.mxu0 0
      %941 = vmatpush1.bf16.msra.mxu0 0
      %942 = vmatprep.subr.bf16.mxu0 0
      %943 = vmatpush1.bf16.msra.mxu0 0
      %944 = vmatprep.subr.bf16.mxu0 0
      %945 = vmatpush1.bf16.msra.mxu0 0
      %946 = vmatprep.subr.bf16.mxu0 0
      %947 = vmatpush1.bf16.msra.mxu0 0
      %948 = vmatprep.subr.bf16.mxu0 0
      %949 = vmatpush1.bf16.msra.mxu0 0
      %950 = vmatprep.subr.bf16.mxu0 0
      %951 = vmatpush1.bf16.msra.mxu0 0
      %952 = vmatprep.subr.bf16.mxu0 0
      %953 = vmatpush1.bf16.msra.mxu0 0
      %954 = vmatprep.subr.bf16.mxu0 0
      %955 = vmatpush1.bf16.msra.mxu0 0
      %956 = vmatprep.subr.bf16.mxu0 0
      %957 = vmatpush1.bf16.msra.mxu0 0
      %958 = vmatprep.subr.bf16.mxu0 0
      %959 = vmatpush1.bf16.msra.mxu0 0
      %960 = vmatprep.subr.bf16.mxu0 0
      %961 = vmatpush1.bf16.msra.mxu0 0
      %962 = vmatprep.mubr.bf16.mxu0 0
      %963 = vmatmul.mubr.bf16.gmra.mrb[0].mxu0 %v925
      %v964 = vpop.f32.mrb[0].mxu0
      %v965 = vadd.f32 0.0, %v964
      %v966 = vpop.f32.mrb[0].mxu0
      %v967 = vpop.f32.mrb[0].mxu0
      %v968 = vpop.f32.mrb[0].mxu0
      %969 = vdwg.mxu0
      %v970 = vpack.c.bf16 %v965, %v965
      %s971 = scalar_lea.vmem %s4, 12
      %v972 = vld [vmem:[%s971] sm:$0xf]
      %v974 = vsel %vm381, %v970, 0
      %v977 = vsel %vm444, %v972, 0
      %979 = vmatprep.subr.bf16.mxu0 0
      %980 = vmatpush1.bf16.msra.mxu0 %v977
      %981 = vmatprep.subr.bf16.mxu0 0
      %982 = vmatpush1.bf16.msra.mxu0 0
      %983 = vmatprep.subr.bf16.mxu0 0
      %984 = vmatpush1.bf16.msra.mxu0 0
      %985 = vmatprep.subr.bf16.mxu0 0
      %986 = vmatpush1.bf16.msra.mxu0 0
      %987 = vmatprep.subr.bf16.mxu0 0
      %988 = vmatpush1.bf16.msra.mxu0 0
      %989 = vmatprep.subr.bf16.mxu0 0
      %990 = vmatpush1.bf16.msra.mxu0 0
      %991 = vmatprep.subr.bf16.mxu0 0
      %992 = vmatpush1.bf16.msra.mxu0 0
      %993 = vmatprep.subr.bf16.mxu0 0
      %994 = vmatpush1.bf16.msra.mxu0 0
      %995 = vmatprep.subr.bf16.mxu0 0
      %996 = vmatpush1.bf16.msra.mxu0 0
      %997 = vmatprep.subr.bf16.mxu0 0
      %998 = vmatpush1.bf16.msra.mxu0 0
      %999 = vmatprep.subr.bf16.mxu0 0
      %1000 = vmatpush1.bf16.msra.mxu0 0
      %1001 = vmatprep.subr.bf16.mxu0 0
      %1002 = vmatpush1.bf16.msra.mxu0 0
      %1003 = vmatprep.subr.bf16.mxu0 0
      %1004 = vmatpush1.bf16.msra.mxu0 0
      %1005 = vmatprep.subr.bf16.mxu0 0
      %1006 = vmatpush1.bf16.msra.mxu0 0
      %1007 = vmatprep.subr.bf16.mxu0 0
      %1008 = vmatpush1.bf16.msra.mxu0 0
      %1009 = vmatprep.subr.bf16.mxu0 0
      %1010 = vmatpush1.bf16.msra.mxu0 0
      %1011 = vmatprep.mubr.bf16.mxu0 0
      %1012 = vmatmul.mubr.bf16.gmra.mrb[0].mxu0 %v974
      %v1013 = vpop.f32.mrb[0].mxu0
      %v1014 = vadd.f32 0.0, %v1013
      %v1015 = vpop.f32.mrb[0].mxu0
      %v1016 = vpop.f32.mrb[0].mxu0
      %v1017 = vpop.f32.mrb[0].mxu0
      %1018 = vdwg.mxu0
      %v1019 = vadd.f32 %v858, %v1014
      %vm1020 = vcmask 261120
      %v1021 = vsel %vm1020, %v1019, 0.0
      %1022 = vadd.xlane.f32.xlu0 %v1021
      %v1023 = vpop.xlane.xlu0 %1022
      %v1024 = vrcp.pop 32.0
      %v1025 = vmul.f32 %v1023, %v1024
      %v1026 = vsub.f32 %v1019, %v1025
      %v1027 = vmul.f32 %v1026, %v1026
      %v1028 = vsel %vm1020, %v1027, 0.0
      %1029 = vadd.xlane.f32.xlu0 %v1028
      %v1030 = vpop.xlane.xlu0 %1029
      %v1031 = vmul.f32 %v1030, %v1024
      %v1032 = vadd.f32 %v1031, 1e-05
      %v1033 = vrsqrt.pop %v1032
      %v1034 = vmul.f32 %v1026, %v1033
      %v1035 = vld [vmem:[%s6] sm:$0x1]
      %v1037 = vlaneseq
      %v1038 = vshrl.u32 %v1037, 7
      %v1039 = vsub.s32 0, %v1038
      %v1040 = vrot.slane %v1035, %v1039
      %v1042 = vmul.f32 %v1034, %v1040
      %v1043 = vld [vmem:[%s7] sm:$0x1]
      %v1045 = vlaneseq
      %v1046 = vshrl.u32 %v1045, 7
      %v1047 = vsub.s32 0, %v1046
      %v1048 = vrot.slane %v1043, %v1047
      %v1050 = vadd.f32 %v1042, %v1048
      %v1051 = vpack.c.bf16 %v1050, %v1050
      %vm1052 = vcmask 257024
      %1053 = vst.msk [vmem:[%s366] sm:$0xf] %vm1052, %v1051
      %p1054 = scmp.lt.s32.totalorder %s19, 7
      %s1055 = scalar_select %p1054, %s19, 7
      %s1056 = smul.addr %s1055, 4
      %s1057 = scalar_lea.vmem %s8, %s1056
      // Predicated region
      $region53: #{gcn_shift_transformer.22} parent=51 // pred_check
        %p1058 = pneg %p225
      $region54: #{gcn_shift_transformer.22} parent=51 // pred_check_branch
        %1060 = sbr.rel (%p1058) target = $region56
      $region55: #{gcn_shift_transformer.22} parent=51 // pred_region
        _
      $region56: #{gcn_shift_transformer.22} parent=51 // pred_fallthru
        _
    $region52: #{gcn_shift_transformer.22} parent=5 // pred_fallthru
      _
    %p1061 = scmp.le.s32.totalorder 2, %s14
    // Predicated region
    $region57: #{gcn_shift_transformer.22} parent=5 // pred_check
      %p1062 = pneg %p1061
    $region58: #{gcn_shift_transformer.22} parent=5 // pred_check_branch
      %1064 = sbr.rel (%p1062) target = $region60
    $region59: #{gcn_shift_transformer.22} parent=5 // pred_region
      %s1065 = ssub.s32 %s14, 2
      // Predicated region
      $region61: #{gcn_shift_transformer.22} parent=59 // pred_check
        %p1066 = pneg %p231
      $region62: #{gcn_shift_transformer.22} parent=59 // pred_check_branch
        %1068 = sbr.rel (%p1066) target = $region64
      $region63: #{gcn_shift_transformer.22} parent=59 // pred_region
        %p1069 = scmp.lt.s32.totalorder %s20, 7
        %s1070 = scalar_select %p1069, %s20, 7
        %s1071 = smul.addr %s1070, 4
        %s1072 = scalar_lea.vmem %s8, %s1071
      $region64: #{gcn_shift_transformer.22} parent=59 // pred_fallthru
        _
    $region60: #{gcn_shift_transformer.22} parent=5 // pred_fallthru
      _
  $region6: #{gcn_shift_transformer.22} parent=0 // loop_footer
    %s18 = sadd.s32 1, %s14
  $region7: #{gcn_shift_transformer.22} parent=0 // loop_footer_branch
    %13 = sbr.rel target = $region3
  $region8: #{gcn_shift_transformer.22} parent=0 // loop_exit
    _

// kernel: gcn_shift_transformer.23
$region0: #{gcn_shift_transformer.23}
  #allocation0 [shape = 'u32[]', space=smem, size = 0x4, offset = 0x4, fixed_abs, tag = 'smem constant byte address 0x4 - core index']
  #allocation1 [shape = 'u32[144,128]{1,0:T(1,128)}', space=vmem, size = 0x12000, scoped, tag = 'internal scratch']
  %s0 = inlined_call_operand.vmem [shape: bf16[64,32], index: 0, kind: input, shape index: {}]
  %s1 = inlined_call_operand.vmem [shape: bf16[32,64], index: 1, kind: input, shape index: {}]
  %s2 = inlined_call_operand.vmem [shape: f32[1,64], index: 2, kind: input, shape index: {}]
  %s3 = inlined_call_operand.vmem [shape: bf16[64,32], index: 3, kind: input, shape index: {}]
  %s4 = inlined_call_operand.vmem [shape: f32[1,32], index: 4, kind: input, shape index: {}]
  %s5 = inlined_call_operand.vmem [shape: f32[1,32], index: 5, kind: input, shape index: {}]
  %s6 = inlined_call_operand.vmem [shape: f32[1,32], index: 6, kind: input, shape index: {}]
  %s7 = inlined_call_operand.vmem [shape: bf16[64,32], index: 7, kind: output, shape index: {}]
  %s8 = sld [smem:[#allocation0]]
  $region38: #{gcn_shift_transformer.23} parent=0
    _
  %s10 = ssub.s32 1, %s8
  %s11 = scalar_select 0, %s10, %s8
  // Predicated region
  $region2: #{gcn_shift_transformer.23} parent=0 // pred_check
    _
  $region3: #{gcn_shift_transformer.23} parent=0 // pred_check_branch
    %13 = sbr.rel (0) target = $region5
  $region4: #{gcn_shift_transformer.23} parent=0 // pred_region
    _
  $region5: #{gcn_shift_transformer.23} parent=0 // pred_fallthru
    _
  // Predicated region
  $region6: #{gcn_shift_transformer.23} parent=0 // pred_check
    _
  $region7: #{gcn_shift_transformer.23} parent=0 // pred_check_branch
    %15 = sbr.rel (0) target = $region9
  $region8: #{gcn_shift_transformer.23} parent=0 // pred_region
    _
  $region9: #{gcn_shift_transformer.23} parent=0 // pred_fallthru
    _
  // Predicated region
  $region10: #{gcn_shift_transformer.23} parent=0 // pred_check
    _
  $region11: #{gcn_shift_transformer.23} parent=0 // pred_check_branch
    %17 = sbr.rel (0) target = $region13
  $region12: #{gcn_shift_transformer.23} parent=0 // pred_region
    _
  $region13: #{gcn_shift_transformer.23} parent=0 // pred_fallthru
    _
  // Predicated region
  $region14: #{gcn_shift_transformer.23} parent=0 // pred_check
    _
  $region15: #{gcn_shift_transformer.23} parent=0 // pred_check_branch
    %19 = sbr.rel (0) target = $region17
  $region16: #{gcn_shift_transformer.23} parent=0 // pred_region
    _
  $region17: #{gcn_shift_transformer.23} parent=0 // pred_fallthru
    _
  // Predicated region
  $region18: #{gcn_shift_transformer.23} parent=0 // pred_check
    _
  $region19: #{gcn_shift_transformer.23} parent=0 // pred_check_branch
    %21 = sbr.rel (0) target = $region21
  $region20: #{gcn_shift_transformer.23} parent=0 // pred_region
    _
  $region21: #{gcn_shift_transformer.23} parent=0 // pred_fallthru
    _
  // Predicated region
  $region22: #{gcn_shift_transformer.23} parent=0 // pred_check
    _
  $region23: #{gcn_shift_transformer.23} parent=0 // pred_check_branch
    %23 = sbr.rel (0) target = $region25
  $region24: #{gcn_shift_transformer.23} parent=0 // pred_region
    _
  $region25: #{gcn_shift_transformer.23} parent=0 // pred_fallthru
    _
  // Predicated region
  $region26: #{gcn_shift_transformer.23} parent=0 // pred_check
    _
  $region27: #{gcn_shift_transformer.23} parent=0 // pred_check_branch
    %25 = sbr.rel (0) target = $region29
  $region28: #{gcn_shift_transformer.23} parent=0 // pred_region
    _
  $region29: #{gcn_shift_transformer.23} parent=0 // pred_fallthru
    _
  %v27 = vld [vmem:[%s0] sm:$0xf]
  %v28 = vld [vmem:[%s0 + $0x4] sm:$0xf]
  %v29 = vld [vmem:[%s0 + $0x8] sm:$0xf]
  %v30 = vld [vmem:[%s0 + $0xc] sm:$0xf]
  %v31 = vld [vmem:[%s0 + $0x10] sm:$0xf]
  %v32 = vld [vmem:[%s0 + $0x14] sm:$0xf]
  %v33 = vld [vmem:[%s0 + $0x18] sm:$0xf]
  %v34 = vld [vmem:[%s0 + $0x1c] sm:$0xf]
  %v35 = vld [vmem:[%s1] sm:$0xf]
  %v36 = vld [vmem:[%s1 + $0x4] sm:$0xf]
  %v37 = vld [vmem:[%s1 + $0x8] sm:$0xf]
  %v38 = vld [vmem:[%s1 + $0xc] sm:$0xf]
  %v39 = vld [vmem:[%s2] sm:$0x1]
  %v41 = vlaneseq
  %v42 = vshrl.u32 %v41, 7
  %v43 = vsub.s32 0, %v42
  %v44 = vrot.slane %v39, %v43
  %v54 = vunpack.c.l.b16 %v27
  %v55 = vunpack.c.l.b16 %v28
  %v56 = vunpack.c.l.b16 %v29
  %v57 = vunpack.c.l.b16 %v30
  %v58 = vunpack.c.l.b16 %v31
  %v59 = vunpack.c.l.b16 %v32
  %v60 = vunpack.c.l.b16 %v33
  %v61 = vunpack.c.l.b16 %v34
  %v62 = vpack.c.b16 %v55, %v54
  %v63 = vpack.c.b16 %v57, %v56
  %v64 = vpack.c.b16 %v59, %v58
  %v65 = vpack.c.b16 %v61, %v60
  %v70 = vunpack.c.l.b16 %v35
  %v71 = vunpack.c.l.b16 %v36
  %v72 = vunpack.c.l.b16 %v37
  %v73 = vunpack.c.l.b16 %v38
  %v74 = vpack.c.b16 %v71, %v70
  %v75 = vpack.c.b16 %v73, %v72
  %vm78 = vcmask 261120
  %v80 = vsel %vm78, %v62, 0
  %v83 = vsel %vm78, %v63, 0
  %v86 = vsel %vm78, %v64, 0
  %v89 = vsel %vm78, %v65, 0
  %91 = vmatprep.subr.bf16.mxu0 0
  %92 = vmatpush1.bf16.msra.mxu0 %v74
  %93 = vmatprep.subr.bf16.mxu0 0
  %94 = vmatpush1.bf16.msra.mxu0 %v75
  %95 = vmatprep.subr.bf16.mxu0 0
  %96 = vmatpush1.bf16.msra.mxu0 0
  %97 = vmatprep.subr.bf16.mxu0 0
  %98 = vmatpush1.bf16.msra.mxu0 0
  %99 = vmatprep.subr.bf16.mxu0 0
  %100 = vmatpush1.bf16.msra.mxu0 0
  %101 = vmatprep.subr.bf16.mxu0 0
  %102 = vmatpush1.bf16.msra.mxu0 0
  %103 = vmatprep.subr.bf16.mxu0 0
  %104 = vmatpush1.bf16.msra.mxu0 0
  %105 = vmatprep.subr.bf16.mxu0 0
  %106 = vmatpush1.bf16.msra.mxu0 0
  %107 = vmatprep.subr.bf16.mxu0 0
  %108 = vmatpush1.bf16.msra.mxu0 0
  %109 = vmatprep.subr.bf16.mxu0 0
  %110 = vmatpush1.bf16.msra.mxu0 0
  %111 = vmatprep.subr.bf16.mxu0 0
  %112 = vmatpush1.bf16.msra.mxu0 0
  %113 = vmatprep.subr.bf16.mxu0 0
  %114 = vmatpush1.bf16.msra.mxu0 0
  %115 = vmatprep.subr.bf16.mxu0 0
  %116 = vmatpush1.bf16.msra.mxu0 0
  %117 = vmatprep.subr.bf16.mxu0 0
  %118 = vmatpush1.bf16.msra.mxu0 0
  %119 = vmatprep.subr.bf16.mxu0 0
  %120 = vmatpush1.bf16.msra.mxu0 0
  %121 = vmatprep.subr.bf16.mxu0 0
  %122 = vmatpush1.bf16.msra.mxu0 0
  %123 = vmatprep.mubr.bf16.mxu0 0
  %124 = vmatmul.mubr.bf16.gmra.mrb[0].mxu0 %v80
  %v125 = vpop.f32.mrb[0].mxu0
  %v126 = vadd.f32 %v44, %v125
  %v127 = vpop.f32.mrb[0].mxu0
  %v128 = vpop.f32.mrb[0].mxu0
  %v129 = vadd.f32 %v44, %v128
  %v130 = vpop.f32.mrb[0].mxu0
  %131 = vmatprep.mubr.bf16.mxu0 0
  %132 = vmatmul.mubr.bf16.gmra.mrb[0].mxu0 %v83
  %v133 = vpop.f32.mrb[0].mxu0
  %v134 = vadd.f32 %v44, %v133
  %v135 = vpop.f32.mrb[0].mxu0
  %v136 = vpop.f32.mrb[0].mxu0
  %v137 = vadd.f32 %v44, %v136
  %v138 = vpop.f32.mrb[0].mxu0
  %139 = vmatprep.mubr.bf16.mxu0 0
  %140 = vmatmul.mubr.bf16.gmra.mrb[0].mxu0 %v86
  %v141 = vpop.f32.mrb[0].mxu0
  %v142 = vadd.f32 %v44, %v141
  %v143 = vpop.f32.mrb[0].mxu0
  %v144 = vpop.f32.mrb[0].mxu0
  %v145 = vadd.f32 %v44, %v144
  %v146 = vpop.f32.mrb[0].mxu0
  %147 = vmatprep.mubr.bf16.mxu0 0
  %148 = vmatmul.mubr.bf16.gmra.mrb[0].mxu0 %v89
  %v149 = vpop.f32.mrb[0].mxu0
  %v150 = vadd.f32 %v44, %v149
  %v151 = vpop.f32.mrb[0].mxu0
  %v152 = vpop.f32.mrb[0].mxu0
  %v153 = vadd.f32 %v44, %v152
  %v154 = vpop.f32.mrb[0].mxu0
  %155 = vdwg.mxu0
  %v156 = vmax.f32 %v126, 0.0
  %v157 = vmax.f32 %v129, 0.0
  %v158 = vmax.f32 %v134, 0.0
  %v159 = vmax.f32 %v137, 0.0
  %v160 = vmax.f32 %v142, 0.0
  %v161 = vmax.f32 %v145, 0.0
  %v162 = vmax.f32 %v150, 0.0
  %v163 = vmax.f32 %v153, 0.0
  %v164 = vpack.c.bf16 %v157, %v156
  %v165 = vpack.c.bf16 %v159, %v158
  %v166 = vpack.c.bf16 %v161, %v160
  %v167 = vpack.c.bf16 %v163, %v162
  %v168 = vld [vmem:[%s3] sm:$0xf]
  %v169 = vld [vmem:[%s3 + $0x4] sm:$0xf]
  %v170 = vld [vmem:[%s3 + $0x8] sm:$0xf]
  %v171 = vld [vmem:[%s3 + $0xc] sm:$0xf]
  %v172 = vld [vmem:[%s3 + $0x10] sm:$0xf]
  %v173 = vld [vmem:[%s3 + $0x14] sm:$0xf]
  %v174 = vld [vmem:[%s3 + $0x18] sm:$0xf]
  %v175 = vld [vmem:[%s3 + $0x1c] sm:$0xf]
  %v176 = vld [vmem:[%s4] sm:$0x1]
  %v178 = vlaneseq
  %v179 = vshrl.u32 %v178, 7
  %v180 = vsub.s32 0, %v179
  %v181 = vrot.slane %v176, %v180
  %v191 = vunpack.c.l.b16 %v168
  %v192 = vunpack.c.l.b16 %v169
  %v193 = vunpack.c.l.b16 %v170
  %v194 = vunpack.c.l.b16 %v171
  %v195 = vunpack.c.l.b16 %v172
  %v196 = vunpack.c.l.b16 %v173
  %v197 = vunpack.c.l.b16 %v174
  %v198 = vunpack.c.l.b16 %v175
  %v199 = vpack.c.b16 %v192, %v191
  %v200 = vpack.c.b16 %v194, %v193
  %v201 = vpack.c.b16 %v196, %v195
  %v202 = vpack.c.b16 %v198, %v197
  %vm207 = vcmask 523264
  %v209 = vsel %vm207, %v164, 0
  %v212 = vsel %vm207, %v165, 0
  %v215 = vsel %vm207, %v166, 0
  %v218 = vsel %vm207, %v167, 0
  %220 = vmatprep.subr.bf16.mxu0 0
  %221 = vmatpush1.bf16.msra.mxu0 %v199
  %222 = vmatprep.subr.bf16.mxu0 0
  %223 = vmatpush1.bf16.msra.mxu0 %v200
  %224 = vmatprep.subr.bf16.mxu0 0
  %225 = vmatpush1.bf16.msra.mxu0 %v201
  %226 = vmatprep.subr.bf16.mxu0 0
  %227 = vmatpush1.bf16.msra.mxu0 %v202
  %228 = vmatprep.subr.bf16.mxu0 0
  %229 = vmatpush1.bf16.msra.mxu0 0
  %230 = vmatprep.subr.bf16.mxu0 0
  %231 = vmatpush1.bf16.msra.mxu0 0
  %232 = vmatprep.subr.bf16.mxu0 0
  %233 = vmatpush1.bf16.msra.mxu0 0
  %234 = vmatprep.subr.bf16.mxu0 0
  %235 = vmatpush1.bf16.msra.mxu0 0
  %236 = vmatprep.subr.bf16.mxu0 0
  %237 = vmatpush1.bf16.msra.mxu0 0
  %238 = vmatprep.subr.bf16.mxu0 0
  %239 = vmatpush1.bf16.msra.mxu0 0
  %240 = vmatprep.subr.bf16.mxu0 0
  %241 = vmatpush1.bf16.msra.mxu0 0
  %242 = vmatprep.subr.bf16.mxu0 0
  %243 = vmatpush1.bf16.msra.mxu0 0
  %244 = vmatprep.subr.bf16.mxu0 0
  %245 = vmatpush1.bf16.msra.mxu0 0
  %246 = vmatprep.subr.bf16.mxu0 0
  %247 = vmatpush1.bf16.msra.mxu0 0
  %248 = vmatprep.subr.bf16.mxu0 0
  %249 = vmatpush1.bf16.msra.mxu0 0
  %250 = vmatprep.subr.bf16.mxu0 0
  %251 = vmatpush1.bf16.msra.mxu0 0
  %252 = vmatprep.mubr.bf16.mxu0 0
  %253 = vmatmul.mubr.bf16.gmra.mrb[0].mxu0 %v209
  %v254 = vpop.f32.mrb[0].mxu0
  %v255 = vadd.f32 %v181, %v254
  %v256 = vpop.f32.mrb[0].mxu0
  %v257 = vpop.f32.mrb[0].mxu0
  %v258 = vadd.f32 %v181, %v257
  %v259 = vpop.f32.mrb[0].mxu0
  %260 = vmatprep.mubr.bf16.mxu0 0
  %261 = vmatmul.mubr.bf16.gmra.mrb[0].mxu0 %v212
  %v262 = vpop.f32.mrb[0].mxu0
  %v263 = vadd.f32 %v181, %v262
  %v264 = vpop.f32.mrb[0].mxu0
  %v265 = vpop.f32.mrb[0].mxu0
  %v266 = vadd.f32 %v181, %v265
  %v267 = vpop.f32.mrb[0].mxu0
  %268 = vmatprep.mubr.bf16.mxu0 0
  %269 = vmatmul.mubr.bf16.gmra.mrb[0].mxu0 %v215
  %v270 = vpop.f32.mrb[0].mxu0
  %v271 = vadd.f32 %v181, %v270
  %v272 = vpop.f32.mrb[0].mxu0
  %v273 = vpop.f32.mrb[0].mxu0
  %v274 = vadd.f32 %v181, %v273
  %v275 = vpop.f32.mrb[0].mxu0
  %276 = vmatprep.mubr.bf16.mxu0 0
  %277 = vmatmul.mubr.bf16.gmra.mrb[0].mxu0 %v218
  %v278 = vpop.f32.mrb[0].mxu0
  %v279 = vadd.f32 %v181, %v278
  %v280 = vpop.f32.mrb[0].mxu0
  %v281 = vpop.f32.mrb[0].mxu0
  %v282 = vadd.f32 %v181, %v281
  %v283 = vpop.f32.mrb[0].mxu0
  %284 = vdwg.mxu0
  %v285 = vunpack.c.l.bf16 %v27
  %v286 = vunpack.c.l.bf16 %v28
  %v287 = vunpack.c.l.bf16 %v29
  %v288 = vunpack.c.l.bf16 %v30
  %v289 = vunpack.c.l.bf16 %v31
  %v290 = vunpack.c.l.bf16 %v32
  %v291 = vunpack.c.l.bf16 %v33
  %v292 = vunpack.c.l.bf16 %v34
  %v293 = vadd.f32 %v255, %v285
  %v294 = vadd.f32 %v258, %v286
  %v295 = vadd.f32 %v263, %v287
  %v296 = vadd.f32 %v266, %v288
  %v297 = vadd.f32 %v271, %v289
  %v298 = vadd.f32 %v274, %v290
  %v299 = vadd.f32 %v279, %v291
  %v300 = vadd.f32 %v282, %v292
  %v301 = vsel %vm78, %v293, 0.0
  %302 = vadd.xlane.f32.xlu0 %v301
  %v303 = vpop.xlane.xlu0 %302
  %v304 = vsel %vm78, %v294, 0.0
  %305 = vadd.xlane.f32.xlu0 %v304
  %v306 = vpop.xlane.xlu0 %305
  %v307 = vsel %vm78, %v295, 0.0
  %308 = vadd.xlane.f32.xlu0 %v307
  %v309 = vpop.xlane.xlu0 %308
  %v310 = vsel %vm78, %v296, 0.0
  %311 = vadd.xlane.f32.xlu0 %v310
  %v312 = vpop.xlane.xlu0 %311
  %v313 = vsel %vm78, %v297, 0.0
  %314 = vadd.xlane.f32.xlu0 %v313
  %v315 = vpop.xlane.xlu0 %314
  %v316 = vsel %vm78, %v298, 0.0
  %317 = vadd.xlane.f32.xlu0 %v316
  %v318 = vpop.xlane.xlu0 %317
  %v319 = vsel %vm78, %v299, 0.0
  %320 = vadd.xlane.f32.xlu0 %v319
  %v321 = vpop.xlane.xlu0 %320
  %v322 = vsel %vm78, %v300, 0.0
  %323 = vadd.xlane.f32.xlu0 %v322
  %v324 = vpop.xlane.xlu0 %323
  %v325 = vrcp.pop 32.0
  %v326 = vmul.f32 %v303, %v325
  %v327 = vmul.f32 %v306, %v325
  %v328 = vmul.f32 %v309, %v325
  %v329 = vmul.f32 %v312, %v325
  %v330 = vmul.f32 %v315, %v325
  %v331 = vmul.f32 %v318, %v325
  %v332 = vmul.f32 %v321, %v325
  %v333 = vmul.f32 %v324, %v325
  %v334 = vsub.f32 %v293, %v326
  %v335 = vsub.f32 %v294, %v327
  %v336 = vsub.f32 %v295, %v328
  %v337 = vsub.f32 %v296, %v329
  %v338 = vsub.f32 %v297, %v330
  %v339 = vsub.f32 %v298, %v331
  %v340 = vsub.f32 %v299, %v332
  %v341 = vsub.f32 %v300, %v333
  %v342 = vmul.f32 %v334, %v334
  %v343 = vmul.f32 %v335, %v335
  %v344 = vmul.f32 %v336, %v336
  %v345 = vmul.f32 %v337, %v337
  %v346 = vmul.f32 %v338, %v338
  %v347 = vmul.f32 %v339, %v339
  %v348 = vmul.f32 %v340, %v340
  %v349 = vmul.f32 %v341, %v341
  %v350 = vsel %vm78, %v342, 0.0
  %351 = vadd.xlane.f32.xlu0 %v350
  %v352 = vpop.xlane.xlu0 %351
  %v353 = vsel %vm78, %v343, 0.0
  %354 = vadd.xlane.f32.xlu0 %v353
  %v355 = vpop.xlane.xlu0 %354
  %v356 = vsel %vm78, %v344, 0.0
  %357 = vadd.xlane.f32.xlu0 %v356
  %v358 = vpop.xlane.xlu0 %357
  %v359 = vsel %vm78, %v345, 0.0
  %360 = vadd.xlane.f32.xlu0 %v359
  %v361 = vpop.xlane.xlu0 %360
  %v362 = vsel %vm78, %v346, 0.0
  %363 = vadd.xlane.f32.xlu0 %v362
  %v364 = vpop.xlane.xlu0 %363
  %v365 = vsel %vm78, %v347, 0.0
  %366 = vadd.xlane.f32.xlu0 %v365
  %v367 = vpop.xlane.xlu0 %366
  %v368 = vsel %vm78, %v348, 0.0
  %369 = vadd.xlane.f32.xlu0 %v368
  %v370 = vpop.xlane.xlu0 %369
  %v371 = vsel %vm78, %v349, 0.0
  %372 = vadd.xlane.f32.xlu0 %v371
  %v373 = vpop.xlane.xlu0 %372
  %v374 = vmul.f32 %v352, %v325
  %v375 = vmul.f32 %v355, %v325
  %v376 = vmul.f32 %v358, %v325
  %v377 = vmul.f32 %v361, %v325
  %v378 = vmul.f32 %v364, %v325
  %v379 = vmul.f32 %v367, %v325
  %v380 = vmul.f32 %v370, %v325
  %v381 = vmul.f32 %v373, %v325
  %v382 = vadd.f32 %v374, 1e-05
  %v383 = vadd.f32 %v375, 1e-05
  %v384 = vadd.f32 %v376, 1e-05
  %v385 = vadd.f32 %v377, 1e-05
  %v386 = vadd.f32 %v378, 1e-05
  %v387 = vadd.f32 %v379, 1e-05
  %v388 = vadd.f32 %v380, 1e-05
  %v389 = vadd.f32 %v381, 1e-05
  %v390 = vrsqrt.pop %v382
  %v391 = vrsqrt.pop %v383
  %v392 = vrsqrt.pop %v384
  %v393 = vrsqrt.pop %v385
  %v394 = vrsqrt.pop %v386
  %v395 = vrsqrt.pop %v387
  %v396 = vrsqrt.pop %v388
  %v397 = vrsqrt.pop %v389
  %v398 = vmul.f32 %v334, %v390
  %v399 = vmul.f32 %v335, %v391
  %v400 = vmul.f32 %v336, %v392
  %v401 = vmul.f32 %v337, %v393
  %v402 = vmul.f32 %v338, %v394
  %v403 = vmul.f32 %v339, %v395
  %v404 = vmul.f32 %v340, %v396
  %v405 = vmul.f32 %v341, %v397
  %v406 = vld [vmem:[%s5] sm:$0x1]
  %v408 = vlaneseq
  %v409 = vshrl.u32 %v408, 7
  %v410 = vsub.s32 0, %v409
  %v411 = vrot.slane %v406, %v410
  %v413 = vmul.f32 %v398, %v411
  %v414 = vmul.f32 %v399, %v411
  %v415 = vmul.f32 %v400, %v411
  %v416 = vmul.f32 %v401, %v411
  %v417 = vmul.f32 %v402, %v411
  %v418 = vmul.f32 %v403, %v411
  %v419 = vmul.f32 %v404, %v411
  %v420 = vmul.f32 %v405, %v411
  %v421 = vld [vmem:[%s6] sm:$0x1]
  %v423 = vlaneseq
  %v424 = vshrl.u32 %v423, 7
  %v425 = vsub.s32 0, %v424
  %v426 = vrot.slane %v421, %v425
  %v428 = vadd.f32 %v413, %v426
  %v429 = vadd.f32 %v414, %v426
  %v430 = vadd.f32 %v415, %v426
  %v431 = vadd.f32 %v416, %v426
  %v432 = vadd.f32 %v417, %v426
  %v433 = vadd.f32 %v418, %v426
  %v434 = vadd.f32 %v419, %v426
  %v435 = vadd.f32 %v420, %v426
  %v436 = vpack.c.bf16 %v429, %v428
  %v437 = vpack.c.bf16 %v431, %v430
  %v438 = vpack.c.bf16 %v433, %v432
  %v439 = vpack.c.bf16 %v435, %v434
  %v444 = vunpack.c.l.b16 %v436
  %v445 = vunpack.c.h.b16 %v436
  %v446 = vunpack.c.l.b16 %v437
  %v447 = vunpack.c.h.b16 %v437
  %v448 = vunpack.c.l.b16 %v438
  %v449 = vunpack.c.h.b16 %v438
  %v450 = vunpack.c.l.b16 %v439
  %v451 = vunpack.c.h.b16 %v439
  %v452 = vpack.c.b16 %v444, %v444
  %v453 = vpack.c.b16 %v445, %v445
  %v454 = vpack.c.b16 %v446, %v446
  %v455 = vpack.c.b16 %v447, %v447
  %v456 = vpack.c.b16 %v448, %v448
  %v457 = vpack.c.b16 %v449, %v449
  %v458 = vpack.c.b16 %v450, %v450
  %v459 = vpack.c.b16 %v451, %v451
  %vm468 = vcmask 257024
  %469 = vst.msk [vmem:[%s7] sm:$0xf] %vm468, %v452
  %470 = vst.msk [vmem:[%s7 + $0x4] sm:$0xf] %vm468, %v453
  %471 = vst.msk [vmem:[%s7 + $0x8] sm:$0xf] %vm468, %v454
  %472 = vst.msk [vmem:[%s7 + $0xc] sm:$0xf] %vm468, %v455
  %473 = vst.msk [vmem:[%s7 + $0x10] sm:$0xf] %vm468, %v456
  %474 = vst.msk [vmem:[%s7 + $0x14] sm:$0xf] %vm468, %v457
  %475 = vst.msk [vmem:[%s7 + $0x18] sm:$0xf] %vm468, %v458
  %476 = vst.msk [vmem:[%s7 + $0x1c] sm:$0xf] %vm468, %v459
  // Predicated region
  $region30: #{gcn_shift_transformer.23} parent=0 // pred_check
    _
  $region31: #{gcn_shift_transformer.23} parent=0 // pred_check_branch
    %478 = sbr.rel (0) target = $region33
  $region32: #{gcn_shift_transformer.23} parent=0 // pred_region
    _
  $region33: #{gcn_shift_transformer.23} parent=0 // pred_fallthru
    _
  // Predicated region
  $region34: #{gcn_shift_transformer.23} parent=0 // pred_check
    _
  $region35: #{gcn_shift_transformer.23} parent=0 // pred_check_branch
    %480 = sbr.rel (0) target = $region37
  $region36: #{gcn_shift_transformer.23} parent=0 // pred_region
    _
  $region37: #{gcn_shift_transformer.23} parent=0 // pred_fallthru
    _

// kernel: squeeze.37
$region0: #{squeeze.37}
  %s0 = inlined_call_operand.vmem [shape: f32[64], index: 0, kind: input, shape index: {}]
  %s1 = inlined_call_operand.hbm [shape: f32[2,4,8], index: 1, kind: output, shape index: {}]
  $region1: #{squeeze.37} parent=0
    #allocation0 [shape = 'u8[4096]{0}', space=vmem, size = 0x1000, scoped, tag = 'operand span for operand 1']
    #allocation1 [shape = 's32[1]{0}', space=sflag, size = 0x4, scoped, tag = 'scoped memory for squeeze.37']
    #allocation2 [shape = 'u8[8192]{0}', space=vmem, size = 0x2000, scoped, tag = 'scoped mem for output reshape']
    #allocation3 [shape = 'u8[4096]{0}', space=vmem, size = 0x1000, scoped, tag = 'scoped mem for input reshape']
    %2 = vsyncpa [#allocation1], 0
    %s4 = sshllo.u32 0, 1
    %v5 = vld [vmem:[%s0] sm:%s4]
    %6 = vst [vmem:[#allocation3] sm:%s4] %v5
    %v7 = vld [vmem:[#allocation3] sm:$0x1]
    %vm8 = vcmask 64512
    %9 = vst.msk [vmem:[#allocation2] sm:$0x1] %vm8, %v7
    %v10 = vld [vmem:[#allocation3] sm:$0x1]
    %11 = vrot.lane.b32.xlu0 %v10, 120
    %v12 = vpop.permute.xlu0 %11
    %vm13 = vcmask 64512
    %s14 = scalar_lea.vmem [#allocation2], 1
    %15 = vst.msk [vmem:[%s14] sm:$0x1] %vm13, %v12
    %v16 = vld [vmem:[#allocation3] sm:$0x1]
    %17 = vrot.lane.b32.xlu0 %v16, 112
    %v18 = vpop.permute.xlu0 %17
    %vm19 = vcmask 64512
    %s20 = scalar_lea.vmem [#allocation2], 2
    %21 = vst.msk [vmem:[%s20] sm:$0x1] %vm19, %v18
    %v22 = vld [vmem:[#allocation3] sm:$0x1]
    %23 = vrot.lane.b32.xlu0 %v22, 104
    %v24 = vpop.permute.xlu0 %23
    %vm25 = vcmask 64512
    %s26 = scalar_lea.vmem [#allocation2], 3
    %27 = vst.msk [vmem:[%s26] sm:$0x1] %vm25, %v24
    %v28 = vld [vmem:[#allocation3] sm:$0x1]
    %29 = vrot.lane.b32.xlu0 %v28, 96
    %v30 = vpop.permute.xlu0 %29
    %vm31 = vcmask 64512
    %s32 = scalar_lea.vmem [#allocation2], 8
    %33 = vst.msk [vmem:[%s32] sm:$0x1] %vm31, %v30
    %v34 = vld [vmem:[#allocation3] sm:$0x1]
    %35 = vrot.lane.b32.xlu0 %v34, 88
    %v36 = vpop.permute.xlu0 %35
    %vm37 = vcmask 64512
    %s38 = scalar_lea.vmem [#allocation2], 9
    %39 = vst.msk [vmem:[%s38] sm:$0x1] %vm37, %v36
    %v40 = vld [vmem:[#allocation3] sm:$0x1]
    %41 = vrot.lane.b32.xlu0 %v40, 80
    %v42 = vpop.permute.xlu0 %41
    %vm43 = vcmask 64512
    %s44 = scalar_lea.vmem [#allocation2], 10
    %45 = vst.msk [vmem:[%s44] sm:$0x1] %vm43, %v42
    %v46 = vld [vmem:[#allocation3] sm:$0x1]
    %47 = vrot.lane.b32.xlu0 %v46, 72
    %v48 = vpop.permute.xlu0 %47
    %vm49 = vcmask 64512
    %s50 = scalar_lea.vmem [#allocation2], 11
    %51 = vst.msk [vmem:[%s50] sm:$0x1] %vm49, %v48
    %s53 = sshllo.u32 0, 4
    %v55 = vld [vmem:[#allocation2] sm:%s53]
    %s56 = sshllo.u32 0, 4
    %57 = vst [vmem:[#allocation0] sm:%s56] %v55
    %s58 = scalar_lea.vmem [#allocation2], 8
    %v59 = vld [vmem:[%s58] sm:%s53]
    %s60 = sshllo.u32 0, 4
    %s61 = scalar_lea.vmem [#allocation0], 4
    %62 = vst [vmem:[%s61] sm:%s60] %v59
    %s64 = ssub.s32 128, 128
    %65 = vsyncadd [#allocation1], %s64
    %s67 = sshll.u32 [#allocation0], 4
    %s68 = int_to_ptr.vmem [resolvable:$true] %s67
    %70 = dma.vmem_to_hbm [thread:$0]  %s68, 128, %s1, [#allocation1]
    %71 = dma.done [#allocation1], 128
    %72 = vsyncpa [#allocation1], 1

// kernel: gcn_shift_transformer.39
$region0: #{gcn_shift_transformer.39}
  #allocation0 [shape = 'u32[]', space=smem, size = 0x4, offset = 0x4, fixed_abs, tag = 'smem constant byte address 0x4 - core index']
  #allocation1 [shape = 'u32[144,128]{1,0:T(1,128)}', space=vmem, size = 0x12000, scoped, tag = 'internal scratch']
  %s0 = inlined_call_operand.vmem [shape: bf16[64,32], index: 0, kind: input, shape index: {}]
  %s1 = inlined_call_operand.vmem [shape: bf16[32,128], index: 1, kind: input, shape index: {}]
  %s2 = inlined_call_operand.vmem [shape: f32[1,128], index: 2, kind: input, shape index: {}]
  %s3 = inlined_call_operand.vmem [shape: f32[64,128], index: 3, kind: output, shape index: {}]
  %s4 = sld [smem:[#allocation0]]
  $region22: #{gcn_shift_transformer.39} parent=0
    _
  %s6 = ssub.s32 1, %s4
  %s7 = scalar_select 0, %s6, %s4
  // Predicated region
  $region2: #{gcn_shift_transformer.39} parent=0 // pred_check
    _
  $region3: #{gcn_shift_transformer.39} parent=0 // pred_check_branch
    %9 = sbr.rel (0) target = $region5
  $region4: #{gcn_shift_transformer.39} parent=0 // pred_region
    _
  $region5: #{gcn_shift_transformer.39} parent=0 // pred_fallthru
    _
  // Predicated region
  $region6: #{gcn_shift_transformer.39} parent=0 // pred_check
    _
  $region7: #{gcn_shift_transformer.39} parent=0 // pred_check_branch
    %11 = sbr.rel (0) target = $region9
  $region8: #{gcn_shift_transformer.39} parent=0 // pred_region
    _
  $region9: #{gcn_shift_transformer.39} parent=0 // pred_fallthru
    _
  // Predicated region
  $region10: #{gcn_shift_transformer.39} parent=0 // pred_check
    _
  $region11: #{gcn_shift_transformer.39} parent=0 // pred_check_branch
    %13 = sbr.rel (0) target = $region13
  $region12: #{gcn_shift_transformer.39} parent=0 // pred_region
    _
  $region13: #{gcn_shift_transformer.39} parent=0 // pred_fallthru
    _
  %v15 = vld [vmem:[%s0] sm:$0xf]
  %v16 = vld [vmem:[%s0 + $0x4] sm:$0xf]
  %v17 = vld [vmem:[%s0 + $0x8] sm:$0xf]
  %v18 = vld [vmem:[%s0 + $0xc] sm:$0xf]
  %v19 = vld [vmem:[%s0 + $0x10] sm:$0xf]
  %v20 = vld [vmem:[%s0 + $0x14] sm:$0xf]
  %v21 = vld [vmem:[%s0 + $0x18] sm:$0xf]
  %v22 = vld [vmem:[%s0 + $0x1c] sm:$0xf]
  %v23 = vld [vmem:[%s1] sm:$0xf]
  %v24 = vld [vmem:[%s1 + $0x4] sm:$0xf]
  %v25 = vld [vmem:[%s1 + $0x8] sm:$0xf]
  %v26 = vld [vmem:[%s1 + $0xc] sm:$0xf]
  %v27 = vld [vmem:[%s2] sm:$0x1]
  %v29 = vlaneseq
  %v30 = vshrl.u32 %v29, 7
  %v31 = vsub.s32 0, %v30
  %v32 = vrot.slane %v27, %v31
  %v42 = vunpack.c.l.b16 %v15
  %v43 = vunpack.c.l.b16 %v16
  %v44 = vunpack.c.l.b16 %v17
  %v45 = vunpack.c.l.b16 %v18
  %v46 = vunpack.c.l.b16 %v19
  %v47 = vunpack.c.l.b16 %v20
  %v48 = vunpack.c.l.b16 %v21
  %v49 = vunpack.c.l.b16 %v22
  %v50 = vpack.c.b16 %v43, %v42
  %v51 = vpack.c.b16 %v45, %v44
  %v52 = vpack.c.b16 %v47, %v46
  %v53 = vpack.c.b16 %v49, %v48
  %v58 = vunpack.c.l.b16 %v23
  %v59 = vunpack.c.l.b16 %v24
  %v60 = vunpack.c.l.b16 %v25
  %v61 = vunpack.c.l.b16 %v26
  %v62 = vpack.c.b16 %v59, %v58
  %v63 = vpack.c.b16 %v61, %v60
  %vm66 = vcmask 261120
  %v68 = vsel %vm66, %v50, 0
  %v71 = vsel %vm66, %v51, 0
  %v74 = vsel %vm66, %v52, 0
  %v77 = vsel %vm66, %v53, 0
  %79 = vmatprep.subr.bf16.mxu0 0
  %80 = vmatpush1.bf16.msra.mxu0 %v62
  %81 = vmatprep.subr.bf16.mxu0 0
  %82 = vmatpush1.bf16.msra.mxu0 %v63
  %83 = vmatprep.subr.bf16.mxu0 0
  %84 = vmatpush1.bf16.msra.mxu0 0
  %85 = vmatprep.subr.bf16.mxu0 0
  %86 = vmatpush1.bf16.msra.mxu0 0
  %87 = vmatprep.subr.bf16.mxu0 0
  %88 = vmatpush1.bf16.msra.mxu0 0
  %89 = vmatprep.subr.bf16.mxu0 0
  %90 = vmatpush1.bf16.msra.mxu0 0
  %91 = vmatprep.subr.bf16.mxu0 0
  %92 = vmatpush1.bf16.msra.mxu0 0
  %93 = vmatprep.subr.bf16.mxu0 0
  %94 = vmatpush1.bf16.msra.mxu0 0
  %95 = vmatprep.subr.bf16.mxu0 0
  %96 = vmatpush1.bf16.msra.mxu0 0
  %97 = vmatprep.subr.bf16.mxu0 0
  %98 = vmatpush1.bf16.msra.mxu0 0
  %99 = vmatprep.subr.bf16.mxu0 0
  %100 = vmatpush1.bf16.msra.mxu0 0
  %101 = vmatprep.subr.bf16.mxu0 0
  %102 = vmatpush1.bf16.msra.mxu0 0
  %103 = vmatprep.subr.bf16.mxu0 0
  %104 = vmatpush1.bf16.msra.mxu0 0
  %105 = vmatprep.subr.bf16.mxu0 0
  %106 = vmatpush1.bf16.msra.mxu0 0
  %107 = vmatprep.subr.bf16.mxu0 0
  %108 = vmatpush1.bf16.msra.mxu0 0
  %109 = vmatprep.subr.bf16.mxu0 0
  %110 = vmatpush1.bf16.msra.mxu0 0
  %111 = vmatprep.mubr.bf16.mxu0 0
  %112 = vmatmul.mubr.bf16.gmra.mrb[0].mxu0 %v68
  %v113 = vpop.f32.mrb[0].mxu0
  %v114 = vadd.f32 %v32, %v113
  %v115 = vpop.f32.mrb[0].mxu0
  %v116 = vpop.f32.mrb[0].mxu0
  %v117 = vadd.f32 %v32, %v116
  %v118 = vpop.f32.mrb[0].mxu0
  %119 = vmatprep.mubr.bf16.mxu0 0
  %120 = vmatmul.mubr.bf16.gmra.mrb[0].mxu0 %v71
  %v121 = vpop.f32.mrb[0].mxu0
  %v122 = vadd.f32 %v32, %v121
  %v123 = vpop.f32.mrb[0].mxu0
  %v124 = vpop.f32.mrb[0].mxu0
  %v125 = vadd.f32 %v32, %v124
  %v126 = vpop.f32.mrb[0].mxu0
  %127 = vmatprep.mubr.bf16.mxu0 0
  %128 = vmatmul.mubr.bf16.gmra.mrb[0].mxu0 %v74
  %v129 = vpop.f32.mrb[0].mxu0
  %v130 = vadd.f32 %v32, %v129
  %v131 = vpop.f32.mrb[0].mxu0
  %v132 = vpop.f32.mrb[0].mxu0
  %v133 = vadd.f32 %v32, %v132
  %v134 = vpop.f32.mrb[0].mxu0
  %135 = vmatprep.mubr.bf16.mxu0 0
  %136 = vmatmul.mubr.bf16.gmra.mrb[0].mxu0 %v77
  %v137 = vpop.f32.mrb[0].mxu0
  %v138 = vadd.f32 %v32, %v137
  %v139 = vpop.f32.mrb[0].mxu0
  %v140 = vpop.f32.mrb[0].mxu0
  %v141 = vadd.f32 %v32, %v140
  %v142 = vpop.f32.mrb[0].mxu0
  %143 = vdwg.mxu0
  %144 = vst [vmem:[%s3] sm:$0xff] %v114
  %145 = vst [vmem:[%s3 + $0x8] sm:$0xff] %v117
  %146 = vst [vmem:[%s3 + $0x10] sm:$0xff] %v122
  %147 = vst [vmem:[%s3 + $0x18] sm:$0xff] %v125
  %148 = vst [vmem:[%s3 + $0x20] sm:$0xff] %v130
  %149 = vst [vmem:[%s3 + $0x28] sm:$0xff] %v133
  %150 = vst [vmem:[%s3 + $0x30] sm:$0xff] %v138
  %151 = vst [vmem:[%s3 + $0x38] sm:$0xff] %v141
  // Predicated region
  $region14: #{gcn_shift_transformer.39} parent=0 // pred_check
    _
  $region15: #{gcn_shift_transformer.39} parent=0 // pred_check_branch
    %153 = sbr.rel (0) target = $region17
  $region16: #{gcn_shift_transformer.39} parent=0 // pred_region
    _
  $region17: #{gcn_shift_transformer.39} parent=0 // pred_fallthru
    _
  // Predicated region
  $region18: #{gcn_shift_transformer.39} parent=0 // pred_check
    _
  $region19: #{gcn_shift_transformer.39} parent=0 // pred_check_branch
    %155 = sbr.rel (0) target = $region21
  $region20: #{gcn_shift_transformer.39} parent=0 // pred_region
    _
  $region21: #{gcn_shift_transformer.39} parent=0 // pred_fallthru
    _

</llo_original>
